<compile_context>
chip_gen: v7x
topology: tpu7x:2x2x1
jax: 0.10.0
libtpu: 0.0.40
codegen_flags: <defaults>
</compile_context>

<pallas_src>
import functools

import jax
import jax.numpy as jnp
from jax import lax
from jax.experimental import pallas as pl
from jax.experimental.pallas import tpu as pltpu


# ----------------------------------------------------------------------------
# Kernel 1: fused all-head GATv2 attention + residual, tiled over dst-node rows.
# ----------------------------------------------------------------------------
def _gat_fused_kernel(a_ref, x_ref, xr_ref, adj_ref, ws_ref, bs_ref, wd_ref,
                      bd_ref, wres_ref, bres_ref, *out_refs,
                      num_heads, head_dim, cdt, with_attn):
    H, D = num_heads, head_dim
    y_ref = out_refs[0]
    attn_ref = out_refs[1] if with_attn else None

    x = x_ref[...]            # (N, F)   all source nodes (resident across tiles)
    x_dst = xr_ref[...]       # (T, F)   this destination-row tile
    adj = adj_ref[...]        # (T, N)

    # Fused per-head projections: one MXU matmul each for ALL heads (H*D lanes).
    fsrc = jnp.dot(x.astype(cdt), ws_ref[...].astype(cdt),
                   preferred_element_type=jnp.float32) + bs_ref[...]   # (N, HD)
    fdst = jnp.dot(x_dst.astype(cdt), wd_ref[...].astype(cdt),
                   preferred_element_type=jnp.float32) + bd_ref[...]   # (T, HD)
    # Residual projection fused in (x_dst is already resident in VMEM here).
    res = jnp.dot(x_dst.astype(cdt), wres_ref[...].astype(cdt),
                  preferred_element_type=jnp.float32) + bres_ref[...]  # (T, HD)

    # Transposed fsrc so the src-node axis sits on the lane axis for score slabs.
    fsrcT = jnp.transpose(fsrc)                                        # (HD, N)

    adj_pos = adj > 0.0
    neg = jnp.float32(-1e30)
    bias = jnp.where(adj_pos, 0.0, neg)                                # (T, N)

    T = x_dst.shape[0]
    N = x.shape[0]

    for h in range(H):
        # scores[i, j] = sum_d a[h,d] * leaky_relu(fdst[i, h*D+d] + fsrc[j, h*D+d])
        # leaky_relu_0.2(z) == 0.6*z + 0.4*|z|.  The 0.6*z part is separable in
        # (i, j), so only the |z| part is built as per-dim rank-1 (T, N) slabs.
        abs_acc = jnp.zeros(adj.shape, jnp.float32)
        lin_d = jnp.zeros((T, 1), jnp.float32)
        lin_s = jnp.zeros((1, N), jnp.float32)
        for d in range(D):
            hd = h * D + d
            c = a_ref[h, d]                      # scalar coefficient from SMEM
            fd_col = fdst[:, hd:hd + 1]          # (T, 1)
            fs_row = fsrcT[hd:hd + 1, :]         # (1, N)
            z = fd_col + fs_row                  # (T, N)
            abs_acc = abs_acc + (0.4 * c) * jnp.abs(z)
            lin_d = lin_d + c * fd_col
            lin_s = lin_s + c * fs_row
        scores = 0.6 * (lin_d + lin_s) + abs_acc                       # (T, N)

        # Masked softmax over incoming edges (f32; zero-in-degree rows -> zeros).
        masked = scores + bias
        m = jnp.max(masked, axis=1, keepdims=True)
        p = jnp.where(adj_pos, jnp.exp(masked - m), 0.0)
        denom = jnp.sum(p, axis=1, keepdims=True)
        denom = jnp.where(denom == 0.0, 1.0, denom)
        inv = pl.reciprocal(denom, approx=True)          # EUP slot (nearly free)
        inv = inv * (2.0 - denom * inv)                  # 1 Newton step -> ~exact
        alpha = p * inv                                  # (T, N)

        # Aggregate on the MXU; write head columns in place so the output is
        # already in (N, H*D) layout, with the residual added (no extra kernel).
        agg_h = jnp.dot(alpha.astype(cdt),
                        fsrc[:, h * D:(h + 1) * D].astype(cdt),
                        preferred_element_type=jnp.float32)            # (T, D)
        y_ref[:, h * D:(h + 1) * D] = agg_h + res[:, h * D:(h + 1) * D]
        if with_attn:
            attn_ref[h] = alpha


# ----------------------------------------------------------------------------
# Kernel 2: BatchNorm1d (batch stats, biased variance, eps=1e-5) + ReLU,
# column-tiled (BN stats are per-column, so columns are independent).
# ----------------------------------------------------------------------------
def _bn_relu_kernel(y_ref, gamma_ref, beta_ref, out_ref):
    y = y_ref[...]                                       # (N, C_tile) f32
    n = jnp.float32(y.shape[0])
    mean = jnp.sum(y, axis=0, keepdims=True) / n
    var = jnp.sum((y - mean) ** 2, axis=0, keepdims=True) / n   # biased variance
    yhat = (y - mean) * lax.rsqrt(var + 1e-5)
    out_ref[...] = jnp.maximum(gamma_ref[...] * yhat + beta_ref[...], 0.0)
    # TODO(synk): for very large N add a row-tiled two-pass (sum / sum-of-squares)
    # variant; this column-tiled kernel assumes the N rows of one column tile fit VMEM.


# ----------------------------------------------------------------------------
# Wrapper
# ----------------------------------------------------------------------------
def _pick_row_tile(n):
    if n <= 256:
        return n
    for t in range(256, 7, -8):
        if n % t == 0:
            return t
    return n


def _pick_col_tile(hd):
    if hd % 128 != 0:
        return hd
    for t in (512, 256, 128):
        if hd % t == 0:
            return t
    return hd


@functools.partial(jax.jit, static_argnames=("num_heads", "compute_dtype",
                                              "return_attention", "row_tile"))
def deep_graph_conv_layer(x, adj, params, *, num_heads,
                          compute_dtype=jnp.bfloat16, return_attention=True,
                          row_tile=None):
    N, F = x.shape
    H = num_heads
    HD = params["wsrc"].shape[-1]
    D = HD // H

    T = _pick_row_tile(N) if row_tile is None else row_tile
    grid_rows = N // T

    in_specs = [
        pl.BlockSpec(memory_space=pltpu.MemorySpace.SMEM),   # attn vector (H, D)
        pl.BlockSpec((N, F), lambda i: (0, 0)),              # x (all src, resident)
        pl.BlockSpec((T, F), lambda i: (i, 0)),              # x (dst-row tile)
        pl.BlockSpec((T, N), lambda i: (i, 0)),              # adj row tile
        pl.BlockSpec((F, HD), lambda i: (0, 0)),             # W_src (heads fused)
        pl.BlockSpec((1, HD), lambda i: (0, 0)),             # b_src
        pl.BlockSpec((F, HD), lambda i: (0, 0)),             # W_dst
        pl.BlockSpec((1, HD), lambda i: (0, 0)),             # b_dst
        pl.BlockSpec((F, HD), lambda i: (0, 0)),             # W_res
        pl.BlockSpec((1, HD), lambda i: (0, 0)),             # b_res
    ]
    out_shapes = [jax.ShapeDtypeStruct((N, HD), jnp.float32)]
    out_specs = [pl.BlockSpec((T, HD), lambda i: (i, 0))]
    if return_attention:
        out_shapes.append(jax.ShapeDtypeStruct((H, N, N), jnp.float32))
        out_specs.append(pl.BlockSpec((H, T, N), lambda i: (0, i, 0)))

    gat_out = pl.pallas_call(
        functools.partial(_gat_fused_kernel, num_heads=H, head_dim=D,
                          cdt=compute_dtype, with_attn=return_attention),
        out_shape=tuple(out_shapes),
        grid=(grid_rows,),
        in_specs=in_specs,
        out_specs=tuple(out_specs),
        compiler_params=pltpu.CompilerParams(
            dimension_semantics=("parallel",),
            vmem_limit_bytes=48 * 1024 * 1024),
    )(params["attn"], x, x, adj, params["wsrc"], params["bsrc"],
      params["wdst"], params["bdst"], params["wres"], params["bres"])

    y = gat_out[0]                         # (N, H*D), residual already added
    attn = gat_out[1] if return_attention else None

    # TODO(synk): last output dim H*D=32 is below 128 lanes at these shapes; pad to
    # a multiple of 128 in production configs for unmasked stores.
    col_tile = _pick_col_tile(HD)
    grid_cols = HD // col_tile
    feat = pl.pallas_call(
        _bn_relu_kernel,
        out_shape=jax.ShapeDtypeStruct((N, HD), jnp.float32),
        grid=(grid_cols,),
        in_specs=[
            pl.BlockSpec((N, col_tile), lambda c: (0, c)),   # y (agg + residual)
            pl.BlockSpec((1, col_tile), lambda c: (0, c)),   # gamma
            pl.BlockSpec((1, col_tile), lambda c: (0, c)),   # beta
        ],
        out_specs=pl.BlockSpec((N, col_tile), lambda c: (0, c)),
        compiler_params=pltpu.CompilerParams(
            dimension_semantics=("parallel",),
            vmem_limit_bytes=48 * 1024 * 1024),
    )(y, params["gamma"], params["beta"])

    return feat, attn


# ----------------------------------------------------------------------------
# Pure-JAX reference (f32) for verification.
# ----------------------------------------------------------------------------
def _reference(x, adj, p, num_heads):
    H = num_heads
    N, F = x.shape
    HD = p["wsrc"].shape[-1]
    D = HD // H
    wsrc = jnp.transpose(p["wsrc"].reshape(F, H, D), (1, 0, 2))   # (H, F, D)
    wdst = jnp.transpose(p["wdst"].reshape(F, H, D), (1, 0, 2))
    bsrc = jnp.transpose(p["bsrc"].reshape(1, H, D), (1, 0, 2))   # (H, 1, D)
    bdst = jnp.transpose(p["bdst"].reshape(1, H, D), (1, 0, 2))
    a = p["attn"][:, None, :]                                     # (H, 1, D)
    fsrc = jnp.einsum("nf,hfd->hnd", x, wsrc) + bsrc
    fdst = jnp.einsum("nf,hfd->hnd", x, wdst) + bdst
    s = fdst[:, :, None, :] + fsrc[:, None, :, :]
    s = jnp.where(s >= 0.0, s, 0.2 * s)
    scores = jnp.sum(s * a[:, None, :, :], axis=-1)               # (H, N, N)
    masked = jnp.where(adj[None] > 0.0, scores, -1e30)
    m = jnp.max(masked, axis=-1, keepdims=True)
    pe = jnp.where(adj[None] > 0.0, jnp.exp(masked - m), 0.0)
    den = jnp.sum(pe, axis=-1, keepdims=True)
    alpha = pe / jnp.where(den == 0.0, 1.0, den)
    agg = jnp.einsum("hij,hjd->hid", alpha, fsrc)
    y = jnp.transpose(agg, (1, 0, 2)).reshape(N, HD) + x @ p["wres"] + p["bres"]
    mean = jnp.mean(y, axis=0, keepdims=True)
    var = jnp.mean((y - mean) ** 2, axis=0, keepdims=True)
    yhat = (y - mean) / jnp.sqrt(var + 1e-5)
    return jnp.maximum(p["gamma"] * yhat + p["beta"], 0.0), alpha


if __name__ == "__main__":
    # Module-consistent small shapes: inputs F=8, nodes=32, num_heads=4 -> D=8, N=16.
    N, F, NODES, H = 16, 8, 32, 4
    D = NODES // H

    key = jax.random.PRNGKey(0)
    ks = jax.random.split(key, 10)

    x = jax.random.normal(ks[0], (N, F), jnp.float32)
    adj = jax.random.bernoulli(ks[1], 0.3, (N, N)).astype(jnp.float32)
    adj = adj.at[0].set(0.0)      # node 0: zero in-degree (allow_zero_in_degree=True)

    scale = 0.2
    params = {
        # heads fused along the last dim: column h*D + d == (head h, dim d)
        "wsrc": scale * jax.random.normal(ks[2], (F, NODES), jnp.float32),
        "bsrc": scale * jax.random.normal(ks[3], (1, NODES), jnp.float32),
        "wdst": scale * jax.random.normal(ks[4], (F, NODES), jnp.float32),
        "bdst": scale * jax.random.normal(ks[5], (1, NODES), jnp.float32),
        "attn": scale * jax.random.normal(ks[6], (H, D), jnp.float32),
        "wres": scale * jax.random.normal(ks[7], (F, NODES), jnp.float32),
        "bres": scale * jax.random.normal(ks[8], (1, NODES), jnp.float32),
        "gamma": jnp.ones((1, NODES), jnp.float32),
        "beta": jnp.zeros((1, NODES), jnp.float32),
    }
    # TODO(synk): BatchNorm running-stat updates and DGL's per-edge (E, H, 1)
    # attention layout are not modeled; dense (H, N_dst, N_src) attention is returned.

    feat_ref, attn_ref = _reference(x, adj, params, H)

    # --- f32 compute path (tight tolerance) -------------------------------------
    feat32, attn32 = deep_graph_conv_layer(x, adj, params, num_heads=H,
                                           compute_dtype=jnp.float32)
    jax.block_until_ready((feat32, attn32))
    assert feat32.shape == (N, NODES) and attn32.shape == (H, N, N)
    assert jnp.allclose(feat32, feat_ref, atol=2e-4, rtol=2e-4)
    assert jnp.allclose(attn32, attn_ref, atol=2e-4, rtol=2e-4)

    # --- f32 path with explicit dst-row tiling (grid of 2) ----------------------
    feat_t, attn_t = deep_graph_conv_layer(x, adj, params, num_heads=H,
                                           compute_dtype=jnp.float32, row_tile=8)
    jax.block_until_ready((feat_t, attn_t))
    assert jnp.allclose(feat_t, feat_ref, atol=2e-4, rtol=2e-4)
    assert jnp.allclose(attn_t, attn_ref, atol=2e-4, rtol=2e-4)

    # --- bf16 MXU-operand path (default), looser tolerance ----------------------
    feat_bf, attn_bf = deep_graph_conv_layer(x, adj, params, num_heads=H)
    jax.block_until_ready((feat_bf, attn_bf))
    assert jnp.allclose(feat_bf, feat_ref, atol=5e-2, rtol=5e-2)
    assert jnp.allclose(attn_bf, attn_ref, atol=5e-2, rtol=5e-2)

    # --- attention output disabled (halves HBM writeback at scale) --------------
    feat_na, attn_na = deep_graph_conv_layer(x, adj, params, num_heads=H,
                                             return_attention=False)
    jax.block_until_ready(feat_na)
    assert attn_na is None
    assert jnp.allclose(feat_na, feat_ref, atol=5e-2, rtol=5e-2)

    print("KERNEL_OK")
</pallas_src>

<mosaic_0001>
module attributes {stable_mosaic.version = 11 : i64} {
  func.func @_bn_relu_kernel(%arg0: i32, %arg1: memref<16x32xf32, #tpu.memory_space<vmem>>, %arg2: memref<1x32xf32, #tpu.memory_space<vmem>>, %arg3: memref<1x32xf32, #tpu.memory_space<vmem>>, %arg4: memref<16x32xf32, #tpu.memory_space<vmem>>) attributes {dimension_semantics = [#tpu.dimension_semantics<parallel>], iteration_bounds = array<i64: 1>, scalar_prefetch = 0 : i64, scratch_operands = 0 : i64, tpu.core_type = #tpu.core_type<tc>, window_params = [{transform_indices = @transform_0, window_bounds = array<i64: 16, 32>}, {transform_indices = @transform_1, window_bounds = array<i64: 1, 32>}, {transform_indices = @transform_2, window_bounds = array<i64: 1, 32>}, {transform_indices = @transform_3, window_bounds = array<i64: 16, 32>}]} {
    %c0 = arith.constant 0 : index
    %c0_0 = arith.constant 0 : index
    %0 = vector.load %arg1[%c0, %c0_0] : memref<16x32xf32, #tpu.memory_space<vmem>>, vector<16x32xf32>
    %cst = arith.constant dense<0.000000e+00> : vector<32xf32>
    %1 = vector.multi_reduction <add>, %0, %cst [0] : vector<16x32xf32> to vector<32xf32>
    %2 = vector.shape_cast %1 : vector<32xf32> to vector<1x32xf32>
    %cst_1 = arith.constant 1.600000e+01 : f32
    %3 = vector.broadcast %cst_1 : f32 to vector<1x32xf32>
    %4 = arith.divf %2, %3 : vector<1x32xf32>
    %5 = vector.broadcast %4 : vector<1x32xf32> to vector<16x32xf32>
    %6 = arith.subf %0, %5 : vector<16x32xf32>
    %7 = arith.mulf %6, %6 : vector<16x32xf32>
    %cst_2 = arith.constant dense<0.000000e+00> : vector<32xf32>
    %8 = vector.multi_reduction <add>, %7, %cst_2 [0] : vector<16x32xf32> to vector<32xf32>
    %9 = vector.shape_cast %8 : vector<32xf32> to vector<1x32xf32>
    %cst_3 = arith.constant 1.600000e+01 : f32
    %10 = vector.broadcast %cst_3 : f32 to vector<1x32xf32>
    %11 = arith.divf %9, %10 : vector<1x32xf32>
    %12 = vector.broadcast %4 : vector<1x32xf32> to vector<16x32xf32>
    %13 = arith.subf %0, %12 : vector<16x32xf32>
    %cst_4 = arith.constant 9.99999974E-6 : f32
    %14 = vector.broadcast %cst_4 : f32 to vector<1x32xf32>
    %15 = arith.addf %11, %14 : vector<1x32xf32>
    %16 = math.rsqrt %15 : vector<1x32xf32>
    %17 = vector.broadcast %16 : vector<1x32xf32> to vector<16x32xf32>
    %18 = arith.mulf %13, %17 : vector<16x32xf32>
    %c0_5 = arith.constant 0 : index
    %c0_6 = arith.constant 0 : index
    %19 = vector.load %arg2[%c0_5, %c0_6] : memref<1x32xf32, #tpu.memory_space<vmem>>, vector<1x32xf32>
    %20 = vector.broadcast %19 : vector<1x32xf32> to vector<16x32xf32>
    %21 = arith.mulf %20, %18 : vector<16x32xf32>
    %c0_7 = arith.constant 0 : index
    %c0_8 = arith.constant 0 : index
    %22 = vector.load %arg3[%c0_7, %c0_8] : memref<1x32xf32, #tpu.memory_space<vmem>>, vector<1x32xf32>
    %23 = vector.broadcast %22 : vector<1x32xf32> to vector<16x32xf32>
    %24 = arith.addf %21, %23 : vector<16x32xf32>
    %cst_9 = arith.constant 0.000000e+00 : f32
    %25 = vector.broadcast %cst_9 : f32 to vector<16x32xf32>
    %26 = arith.maximumf %24, %25 : vector<16x32xf32>
    %c0_10 = arith.constant 0 : index
    %c0_11 = arith.constant 0 : index
    %27 = vector.load %arg4[%c0_10, %c0_11] : memref<16x32xf32, #tpu.memory_space<vmem>>, vector<16x32xf32>
    tpu.vector_store %arg4[%c0_10, %c0_11], %26 {strides = array<i32>} : memref<16x32xf32, #tpu.memory_space<vmem>>, vector<16x32xf32>,
    return
  }
  func.func @transform_0(%arg0: i32) -> (i32, i32) {
    %c0_i32 = arith.constant 0 : i32
    %c0_i32_0 = arith.constant 0 : i32
    return %c0_i32, %arg0 : i32, i32
  }
  func.func @transform_1(%arg0: i32) -> (i32, i32) {
    %c0_i32 = arith.constant 0 : i32
    %c0_i32_0 = arith.constant 0 : i32
    return %c0_i32, %arg0 : i32, i32
  }
  func.func @transform_2(%arg0: i32) -> (i32, i32) {
    %c0_i32 = arith.constant 0 : i32
    %c0_i32_0 = arith.constant 0 : i32
    return %c0_i32, %arg0 : i32, i32
  }
  func.func @transform_3(%arg0: i32) -> (i32, i32) {
    %c0_i32 = arith.constant 0 : i32
    %c0_i32_0 = arith.constant 0 : i32
    return %c0_i32, %arg0 : i32, i32
  }
}

module attributes {stable_mosaic.version = 11 : i64} {
  func.func @_gat_fused_kernel(%arg0: i32, %arg1: memref<4x8xf32, #tpu.memory_space<smem>>, %arg2: memref<16x8xf32, #tpu.memory_space<vmem>>, %arg3: memref<16x8xf32, #tpu.memory_space<vmem>>, %arg4: memref<16x16xf32, #tpu.memory_space<vmem>>, %arg5: memref<8x32xf32, #tpu.memory_space<vmem>>, %arg6: memref<1x32xf32, #tpu.memory_space<vmem>>, %arg7: memref<8x32xf32, #tpu.memory_space<vmem>>, %arg8: memref<1x32xf32, #tpu.memory_space<vmem>>, %arg9: memref<8x32xf32, #tpu.memory_space<vmem>>, %arg10: memref<1x32xf32, #tpu.memory_space<vmem>>, %arg11: memref<16x32xf32, #tpu.memory_space<vmem>>, %arg12: memref<4x16x16xf32, #tpu.memory_space<vmem>>) attributes {dimension_semantics = [#tpu.dimension_semantics<parallel>], iteration_bounds = array<i64: 1>, scalar_prefetch = 0 : i64, scratch_operands = 0 : i64, tpu.core_type = #tpu.core_type<tc>, window_params = [{transform_indices = @transform_0, window_bounds = array<i64: 4, 8>}, {pipeline_mode = #tpu.pipeline_mode<synchronous>, transform_indices = @transform_1, window_bounds = array<i64: 16, 8>}, {transform_indices = @transform_2, window_bounds = array<i64: 16, 8>}, {transform_indices = @transform_3, window_bounds = array<i64: 16, 16>}, {pipeline_mode = #tpu.pipeline_mode<synchronous>, transform_indices = @transform_4, window_bounds = array<i64: 8, 32>}, {pipeline_mode = #tpu.pipeline_mode<synchronous>, transform_indices = @transform_5, window_bounds = array<i64: 1, 32>}, {pipeline_mode = #tpu.pipeline_mode<synchronous>, transform_indices = @transform_6, window_bounds = array<i64: 8, 32>}, {pipeline_mode = #tpu.pipeline_mode<synchronous>, transform_indices = @transform_7, window_bounds = array<i64: 1, 32>}, {pipeline_mode = #tpu.pipeline_mode<synchronous>, transform_indices = @transform_8, window_bounds = array<i64: 8, 32>}, {pipeline_mode = #tpu.pipeline_mode<synchronous>, transform_indices = @transform_9, window_bounds = array<i64: 1, 32>}, {transform_indices = @transform_10, window_bounds = array<i64: 16, 32>}, {transform_indices = @transform_11, window_bounds = array<i64: 4, 16, 16>}]} {
    %c0 = arith.constant 0 : index
    %c0_0 = arith.constant 0 : index
    %0 = vector.load %arg2[%c0, %c0_0] : memref<16x8xf32, #tpu.memory_space<vmem>>, vector<16x8xf32>
    %c0_1 = arith.constant 0 : index
    %c0_2 = arith.constant 0 : index
    %1 = vector.load %arg3[%c0_1, %c0_2] : memref<16x8xf32, #tpu.memory_space<vmem>>, vector<16x8xf32>
    %c0_3 = arith.constant 0 : index
    %c0_4 = arith.constant 0 : index
    %2 = vector.load %arg4[%c0_3, %c0_4] : memref<16x16xf32, #tpu.memory_space<vmem>>, vector<16x16xf32>
    %c0_5 = arith.constant 0 : index
    %c0_6 = arith.constant 0 : index
    %3 = vector.load %arg5[%c0_5, %c0_6] : memref<8x32xf32, #tpu.memory_space<vmem>>, vector<8x32xf32>
    %cst = arith.constant dense<0.000000e+00> : vector<16x32xf32>
    %4 = tpu.matmul %0, %3, %cst {dimension_numbers = #tpu.dot_dimension_numbers<[1], [0], [0], [1], [0, 0, 1, 1], [], []>} : vector<16x8xf32>, vector<8x32xf32>, vector<16x32xf32> -> vector<16x32xf32>
    %c0_7 = arith.constant 0 : index
    %c0_8 = arith.constant 0 : index
    %5 = vector.load %arg6[%c0_7, %c0_8] : memref<1x32xf32, #tpu.memory_space<vmem>>, vector<1x32xf32>
    %6 = vector.broadcast %5 : vector<1x32xf32> to vector<16x32xf32>
    %7 = arith.addf %4, %6 : vector<16x32xf32>
    %c0_9 = arith.constant 0 : index
    %c0_10 = arith.constant 0 : index
    %8 = vector.load %arg7[%c0_9, %c0_10] : memref<8x32xf32, #tpu.memory_space<vmem>>, vector<8x32xf32>
    %cst_11 = arith.constant dense<0.000000e+00> : vector<16x32xf32>
    %9 = tpu.matmul %1, %8, %cst_11 {dimension_numbers = #tpu.dot_dimension_numbers<[1], [0], [0], [1], [0, 0, 1, 1], [], []>} : vector<16x8xf32>, vector<8x32xf32>, vector<16x32xf32> -> vector<16x32xf32>
    %c0_12 = arith.constant 0 : index
    %c0_13 = arith.constant 0 : index
    %10 = vector.load %arg8[%c0_12, %c0_13] : memref<1x32xf32, #tpu.memory_space<vmem>>, vector<1x32xf32>
    %11 = vector.broadcast %10 : vector<1x32xf32> to vector<16x32xf32>
    %12 = arith.addf %9, %11 : vector<16x32xf32>
    %c0_14 = arith.constant 0 : index
    %c0_15 = arith.constant 0 : index
    %13 = vector.load %arg9[%c0_14, %c0_15] : memref<8x32xf32, #tpu.memory_space<vmem>>, vector<8x32xf32>
    %cst_16 = arith.constant dense<0.000000e+00> : vector<16x32xf32>
    %14 = tpu.matmul %1, %13, %cst_16 {dimension_numbers = #tpu.dot_dimension_numbers<[1], [0], [0], [1], [0, 0, 1, 1], [], []>} : vector<16x8xf32>, vector<8x32xf32>, vector<16x32xf32> -> vector<16x32xf32>
    %c0_17 = arith.constant 0 : index
    %c0_18 = arith.constant 0 : index
    %15 = vector.load %arg10[%c0_17, %c0_18] : memref<1x32xf32, #tpu.memory_space<vmem>>, vector<1x32xf32>
    %16 = vector.broadcast %15 : vector<1x32xf32> to vector<16x32xf32>
    %17 = arith.addf %14, %16 : vector<16x32xf32>
    %18 = tpu.transpose %7, [1, 0] : vector<16x32xf32> -> vector<32x16xf32>
    %cst_19 = arith.constant 0.000000e+00 : f32
    %19 = vector.broadcast %cst_19 : f32 to vector<16x16xf32>
    %20 = arith.cmpf ogt, %2, %19 : vector<16x16xf32>
    %cst_20 = arith.constant 0.000000e+00 : f32
    %cst_21 = arith.constant -1.000000e+30 : f32
    %21 = vector.broadcast %cst_20 : f32 to vector<16x16xf32>
    %22 = vector.broadcast %cst_21 : f32 to vector<16x16xf32>
    %23 = arith.select %20, %21, %22 : vector<16x16xi1>, vector<16x16xf32>
    %cst_22 = arith.constant 0.000000e+00 : f32
    %24 = vector.broadcast %cst_22 : f32 to vector<16x16xf32>
    %cst_23 = arith.constant 0.000000e+00 : f32
    %25 = vector.broadcast %cst_23 : f32 to vector<16x1xf32>
    %cst_24 = arith.constant 0.000000e+00 : f32
    %26 = vector.broadcast %cst_24 : f32 to vector<1x16xf32>
    %c0_25 = arith.constant 0 : index
    %c0_26 = arith.constant 0 : index
    %27 = memref.load %arg1[%c0_25, %c0_26] : memref<4x8xf32, #tpu.memory_space<smem>>
    %28 = vector.extract_strided_slice %12 {offsets = [0, 0], sizes = [16, 1], strides = [1, 1]} : vector<16x32xf32> to vector<16x1xf32>
    %29 = vector.extract_strided_slice %18 {offsets = [0, 0], sizes = [1, 16], strides = [1, 1]} : vector<32x16xf32> to vector<1x16xf32>
    %30 = vector.broadcast %28 : vector<16x1xf32> to vector<16x16xf32>
    %31 = vector.broadcast %29 : vector<1x16xf32> to vector<16x16xf32>
    %32 = arith.addf %30, %31 : vector<16x16xf32>
    %cst_27 = arith.constant 4.000000e-01 : f32
    %33 = arith.mulf %cst_27, %27 : f32
    %34 = math.absf %32 : vector<16x16xf32>
    %35 = vector.broadcast %33 : f32 to vector<16x16xf32>
    %36 = arith.mulf %35, %34 : vector<16x16xf32>
    %37 = arith.addf %24, %36 : vector<16x16xf32>
    %38 = vector.broadcast %27 : f32 to vector<16x1xf32>
    %39 = arith.mulf %38, %28 : vector<16x1xf32>
    %40 = arith.addf %25, %39 : vector<16x1xf32>
    %41 = vector.broadcast %27 : f32 to vector<1x16xf32>
    %42 = arith.mulf %41, %29 : vector<1x16xf32>
    %43 = arith.addf %26, %42 : vector<1x16xf32>
    %c0_28 = arith.constant 0 : index
    %c1 = arith.constant 1 : index
    %44 = memref.load %arg1[%c0_28, %c1] : memref<4x8xf32, #tpu.memory_space<smem>>
    %45 = vector.extract_strided_slice %12 {offsets = [0, 1], sizes = [16, 1], strides = [1, 1]} : vector<16x32xf32> to vector<16x1xf32>
    %46 = vector.extract_strided_slice %18 {offsets = [1, 0], sizes = [1, 16], strides = [1, 1]} : vector<32x16xf32> to vector<1x16xf32>
    %47 = vector.broadcast %45 : vector<16x1xf32> to vector<16x16xf32>
    %48 = vector.broadcast %46 : vector<1x16xf32> to vector<16x16xf32>
    %49 = arith.addf %47, %48 : vector<16x16xf32>
    %cst_29 = arith.constant 4.000000e-01 : f32
    %50 = arith.mulf %cst_29, %44 : f32
    %51 = math.absf %49 : vector<16x16xf32>
    %52 = vector.broadcast %50 : f32 to vector<16x16xf32>
    %53 = arith.mulf %52, %51 : vector<16x16xf32>
    %54 = arith.addf %37, %53 : vector<16x16xf32>
    %55 = vector.broadcast %44 : f32 to vector<16x1xf32>
    %56 = arith.mulf %55, %45 : vector<16x1xf32>
    %57 = arith.addf %40, %56 : vector<16x1xf32>
    %58 = vector.broadcast %44 : f32 to vector<1x16xf32>
    %59 = arith.mulf %58, %46 : vector<1x16xf32>
    %60 = arith.addf %43, %59 : vector<1x16xf32>
    %c0_30 = arith.constant 0 : index
    %c2 = arith.constant 2 : index
    %61 = memref.load %arg1[%c0_30, %c2] : memref<4x8xf32, #tpu.memory_space<smem>>
    %62 = vector.extract_strided_slice %12 {offsets = [0, 2], sizes = [16, 1], strides = [1, 1]} : vector<16x32xf32> to vector<16x1xf32>
    %63 = vector.extract_strided_slice %18 {offsets = [2, 0], sizes = [1, 16], strides = [1, 1]} : vector<32x16xf32> to vector<1x16xf32>
    %64 = vector.broadcast %62 : vector<16x1xf32> to vector<16x16xf32>
    %65 = vector.broadcast %63 : vector<1x16xf32> to vector<16x16xf32>
    %66 = arith.addf %64, %65 : vector<16x16xf32>
    %cst_31 = arith.constant 4.000000e-01 : f32
    %67 = arith.mulf %cst_31, %61 : f32
    %68 = math.absf %66 : vector<16x16xf32>
    %69 = vector.broadcast %67 : f32 to vector<16x16xf32>
    %70 = arith.mulf %69, %68 : vector<16x16xf32>
    %71 = arith.addf %54, %70 : vector<16x16xf32>
    %72 = vector.broadcast %61 : f32 to vector<16x1xf32>
    %73 = arith.mulf %72, %62 : vector<16x1xf32>
    %74 = arith.addf %57, %73 : vector<16x1xf32>
    %75 = vector.broadcast %61 : f32 to vector<1x16xf32>
    %76 = arith.mulf %75, %63 : vector<1x16xf32>
    %77 = arith.addf %60, %76 : vector<1x16xf32>
    %c0_32 = arith.constant 0 : index
    %c3 = arith.constant 3 : index
    %78 = memref.load %arg1[%c0_32, %c3] : memref<4x8xf32, #tpu.memory_space<smem>>
    %79 = vector.extract_strided_slice %12 {offsets = [0, 3], sizes = [16, 1], strides = [1, 1]} : vector<16x32xf32> to vector<16x1xf32>
    %80 = vector.extract_strided_slice %18 {offsets = [3, 0], sizes = [1, 16], strides = [1, 1]} : vector<32x16xf32> to vector<1x16xf32>
    %81 = vector.broadcast %79 : vector<16x1xf32> to vector<16x16xf32>
    %82 = vector.broadcast %80 : vector<1x16xf32> to vector<16x16xf32>
    %83 = arith.addf %81, %82 : vector<16x16xf32>
    %cst_33 = arith.constant 4.000000e-01 : f32
    %84 = arith.mulf %cst_33, %78 : f32
    %85 = math.absf %83 : vector<16x16xf32>
    %86 = vector.broadcast %84 : f32 to vector<16x16xf32>
    %87 = arith.mulf %86, %85 : vector<16x16xf32>
    %88 = arith.addf %71, %87 : vector<16x16xf32>
    %89 = vector.broadcast %78 : f32 to vector<16x1xf32>
    %90 = arith.mulf %89, %79 : vector<16x1xf32>
    %91 = arith.addf %74, %90 : vector<16x1xf32>
    %92 = vector.broadcast %78 : f32 to vector<1x16xf32>
    %93 = arith.mulf %92, %80 : vector<1x16xf32>
    %94 = arith.addf %77, %93 : vector<1x16xf32>
    %c0_34 = arith.constant 0 : index
    %c4 = arith.constant 4 : index
    %95 = memref.load %arg1[%c0_34, %c4] : memref<4x8xf32, #tpu.memory_space<smem>>
    %96 = vector.extract_strided_slice %12 {offsets = [0, 4], sizes = [16, 1], strides = [1, 1]} : vector<16x32xf32> to vector<16x1xf32>
    %97 = vector.extract_strided_slice %18 {offsets = [4, 0], sizes = [1, 16], strides = [1, 1]} : vector<32x16xf32> to vector<1x16xf32>
    %98 = vector.broadcast %96 : vector<16x1xf32> to vector<16x16xf32>
    %99 = vector.broadcast %97 : vector<1x16xf32> to vector<16x16xf32>
    %100 = arith.addf %98, %99 : vector<16x16xf32>
    %cst_35 = arith.constant 4.000000e-01 : f32
    %101 = arith.mulf %cst_35, %95 : f32
    %102 = math.absf %100 : vector<16x16xf32>
    %103 = vector.broadcast %101 : f32 to vector<16x16xf32>
    %104 = arith.mulf %103, %102 : vector<16x16xf32>
    %105 = arith.addf %88, %104 : vector<16x16xf32>
    %106 = vector.broadcast %95 : f32 to vector<16x1xf32>
    %107 = arith.mulf %106, %96 : vector<16x1xf32>
    %108 = arith.addf %91, %107 : vector<16x1xf32>
    %109 = vector.broadcast %95 : f32 to vector<1x16xf32>
    %110 = arith.mulf %109, %97 : vector<1x16xf32>
    %111 = arith.addf %94, %110 : vector<1x16xf32>
    %c0_36 = arith.constant 0 : index
    %c5 = arith.constant 5 : index
    %112 = memref.load %arg1[%c0_36, %c5] : memref<4x8xf32, #tpu.memory_space<smem>>
    %113 = vector.extract_strided_slice %12 {offsets = [0, 5], sizes = [16, 1], strides = [1, 1]} : vector<16x32xf32> to vector<16x1xf32>
    %114 = vector.extract_strided_slice %18 {offsets = [5, 0], sizes = [1, 16], strides = [1, 1]} : vector<32x16xf32> to vector<1x16xf32>
    %115 = vector.broadcast %113 : vector<16x1xf32> to vector<16x16xf32>
    %116 = vector.broadcast %114 : vector<1x16xf32> to vector<16x16xf32>
    %117 = arith.addf %115, %116 : vector<16x16xf32>
    %cst_37 = arith.constant 4.000000e-01 : f32
    %118 = arith.mulf %cst_37, %112 : f32
    %119 = math.absf %117 : vector<16x16xf32>
    %120 = vector.broadcast %118 : f32 to vector<16x16xf32>
    %121 = arith.mulf %120, %119 : vector<16x16xf32>
    %122 = arith.addf %105, %121 : vector<16x16xf32>
    %123 = vector.broadcast %112 : f32 to vector<16x1xf32>
    %124 = arith.mulf %123, %113 : vector<16x1xf32>
    %125 = arith.addf %108, %124 : vector<16x1xf32>
    %126 = vector.broadcast %112 : f32 to vector<1x16xf32>
    %127 = arith.mulf %126, %114 : vector<1x16xf32>
    %128 = arith.addf %111, %127 : vector<1x16xf32>
    %c0_38 = arith.constant 0 : index
    %c6 = arith.constant 6 : index
    %129 = memref.load %arg1[%c0_38, %c6] : memref<4x8xf32, #tpu.memory_space<smem>>
    %130 = vector.extract_strided_slice %12 {offsets = [0, 6], sizes = [16, 1], strides = [1, 1]} : vector<16x32xf32> to vector<16x1xf32>
    %131 = vector.extract_strided_slice %18 {offsets = [6, 0], sizes = [1, 16], strides = [1, 1]} : vector<32x16xf32> to vector<1x16xf32>
    %132 = vector.broadcast %130 : vector<16x1xf32> to vector<16x16xf32>
    %133 = vector.broadcast %131 : vector<1x16xf32> to vector<16x16xf32>
    %134 = arith.addf %132, %133 : vector<16x16xf32>
    %cst_39 = arith.constant 4.000000e-01 : f32
    %135 = arith.mulf %cst_39, %129 : f32
    %136 = math.absf %134 : vector<16x16xf32>
    %137 = vector.broadcast %135 : f32 to vector<16x16xf32>
    %138 = arith.mulf %137, %136 : vector<16x16xf32>
    %139 = arith.addf %122, %138 : vector<16x16xf32>
    %140 = vector.broadcast %129 : f32 to vector<16x1xf32>
    %141 = arith.mulf %140, %130 : vector<16x1xf32>
    %142 = arith.addf %125, %141 : vector<16x1xf32>
    %143 = vector.broadcast %129 : f32 to vector<1x16xf32>
    %144 = arith.mulf %143, %131 : vector<1x16xf32>
    %145 = arith.addf %128, %144 : vector<1x16xf32>
    %c0_40 = arith.constant 0 : index
    %c7 = arith.constant 7 : index
    %146 = memref.load %arg1[%c0_40, %c7] : memref<4x8xf32, #tpu.memory_space<smem>>
    %147 = vector.extract_strided_slice %12 {offsets = [0, 7], sizes = [16, 1], strides = [1, 1]} : vector<16x32xf32> to vector<16x1xf32>
    %148 = vector.extract_strided_slice %18 {offsets = [7, 0], sizes = [1, 16], strides = [1, 1]} : vector<32x16xf32> to vector<1x16xf32>
    %149 = vector.broadcast %147 : vector<16x1xf32> to vector<16x16xf32>
    %150 = vector.broadcast %148 : vector<1x16xf32> to vector<16x16xf32>
    %151 = arith.addf %149, %150 : vector<16x16xf32>
    %cst_41 = arith.constant 4.000000e-01 : f32
    %152 = arith.mulf %cst_41, %146 : f32
    %153 = math.absf %151 : vector<16x16xf32>
    %154 = vector.broadcast %152 : f32 to vector<16x16xf32>
    %155 = arith.mulf %154, %153 : vector<16x16xf32>
    %156 = arith.addf %139, %155 : vector<16x16xf32>
    %157 = vector.broadcast %146 : f32 to vector<16x1xf32>
    %158 = arith.mulf %157, %147 : vector<16x1xf32>
    %159 = arith.addf %142, %158 : vector<16x1xf32>
    %160 = vector.broadcast %146 : f32 to vector<1x16xf32>
    %161 = arith.mulf %160, %148 : vector<1x16xf32>
    %162 = arith.addf %145, %161 : vector<1x16xf32>
    %163 = vector.broadcast %159 : vector<16x1xf32> to vector<16x16xf32>
    %164 = vector.broadcast %162 : vector<1x16xf32> to vector<16x16xf32>
    %165 = arith.addf %163, %164 : vector<16x16xf32>
    %cst_42 = arith.constant 6.000000e-01 : f32
    %166 = vector.broadcast %cst_42 : f32 to vector<16x16xf32>
    %167 = arith.mulf %166, %165 : vector<16x16xf32>
    %168 = arith.addf %167, %156 : vector<16x16xf32>
    %169 = arith.addf %168, %23 : vector<16x16xf32>
    %cst_43 = arith.constant dense<0xFF800000> : vector<16xf32>
    %170 = vector.multi_reduction <maximumf>, %169, %cst_43 [1] : vector<16x16xf32> to vector<16xf32>
    %171 = vector.shape_cast %170 : vector<16xf32> to vector<16x1xf32>
    %172 = vector.broadcast %171 : vector<16x1xf32> to vector<16x16xf32>
    %173 = arith.subf %169, %172 : vector<16x16xf32>
    %174 = math.exp %173 : vector<16x16xf32>
    %cst_44 = arith.constant 0.000000e+00 : f32
    %175 = vector.broadcast %cst_44 : f32 to vector<16x16xf32>
    %176 = arith.select %20, %174, %175 : vector<16x16xi1>, vector<16x16xf32>
    %cst_45 = arith.constant dense<0.000000e+00> : vector<16xf32>
    %177 = vector.multi_reduction <add>, %176, %cst_45 [1] : vector<16x16xf32> to vector<16xf32>
    %178 = vector.shape_cast %177 : vector<16xf32> to vector<16x1xf32>
    %cst_46 = arith.constant 0.000000e+00 : f32
    %179 = vector.broadcast %cst_46 : f32 to vector<16x1xf32>
    %180 = arith.cmpf oeq, %178, %179 : vector<16x1xf32>
    %cst_47 = arith.constant 1.000000e+00 : f32
    %181 = vector.broadcast %cst_47 : f32 to vector<16x1xf32>
    %182 = arith.select %180, %181, %178 : vector<16x1xi1>, vector<16x1xf32>
    %183 = tpu.reciprocal %182 {approx = true} : vector<16x1xf32> -> vector<16x1xf32>
    %184 = arith.mulf %182, %183 : vector<16x1xf32>
    %cst_48 = arith.constant 2.000000e+00 : f32
    %185 = vector.broadcast %cst_48 : f32 to vector<16x1xf32>
    %186 = arith.subf %185, %184 : vector<16x1xf32>
    %187 = arith.mulf %183, %186 : vector<16x1xf32>
    %188 = vector.broadcast %187 : vector<16x1xf32> to vector<16x16xf32>
    %189 = arith.mulf %176, %188 : vector<16x16xf32>
    %190 = vector.extract_strided_slice %7 {offsets = [0, 0], sizes = [16, 8], strides = [1, 1]} : vector<16x32xf32> to vector<16x8xf32>
    %cst_49 = arith.constant dense<0.000000e+00> : vector<16x8xf32>
    %191 = tpu.matmul %189, %190, %cst_49 {dimension_numbers = #tpu.dot_dimension_numbers<[1], [0], [0], [1], [0, 0, 1, 1], [], []>} : vector<16x16xf32>, vector<16x8xf32>, vector<16x8xf32> -> vector<16x8xf32>
    %192 = vector.extract_strided_slice %17 {offsets = [0, 0], sizes = [16, 8], strides = [1, 1]} : vector<16x32xf32> to vector<16x8xf32>
    %193 = arith.addf %191, %192 : vector<16x8xf32>
    %c0_50 = arith.constant 0 : index
    %c0_51 = arith.constant 0 : index
    %194 = vector.load %arg11[%c0_50, %c0_51] : memref<16x32xf32, #tpu.memory_space<vmem>>, vector<16x8xf32>
    tpu.vector_store %arg11[%c0_50, %c0_51], %193 {strides = array<i32>} : memref<16x32xf32, #tpu.memory_space<vmem>>, vector<16x8xf32>,
    %c0_52 = arith.constant 0 : index
    %c0_53 = arith.constant 0 : index
    %c0_54 = arith.constant 0 : index
    %195 = vector.load %arg12[%c0_52, %c0_53, %c0_54] : memref<4x16x16xf32, #tpu.memory_space<vmem>>, vector<1x16x16xf32>
    %196 = vector.shape_cast %195 : vector<1x16x16xf32> to vector<16x16xf32>
    %197 = vector.shape_cast %189 : vector<16x16xf32> to vector<1x16x16xf32>
    tpu.vector_store %arg12[%c0_52, %c0_53, %c0_54], %197 {strides = array<i32>} : memref<4x16x16xf32, #tpu.memory_space<vmem>>, vector<1x16x16xf32>,
    %cst_55 = arith.constant 0.000000e+00 : f32
    %198 = vector.broadcast %cst_55 : f32 to vector<16x16xf32>
    %cst_56 = arith.constant 0.000000e+00 : f32
    %199 = vector.broadcast %cst_56 : f32 to vector<16x1xf32>
    %cst_57 = arith.constant 0.000000e+00 : f32
    %200 = vector.broadcast %cst_57 : f32 to vector<1x16xf32>
    %c1_58 = arith.constant 1 : index
    %c0_59 = arith.constant 0 : index
    %201 = memref.load %arg1[%c1_58, %c0_59] : memref<4x8xf32, #tpu.memory_space<smem>>
    %202 = vector.extract_strided_slice %12 {offsets = [0, 8], sizes = [16, 1], strides = [1, 1]} : vector<16x32xf32> to vector<16x1xf32>
    %203 = vector.extract_strided_slice %18 {offsets = [8, 0], sizes = [1, 16], strides = [1, 1]} : vector<32x16xf32> to vector<1x16xf32>
    %204 = vector.broadcast %202 : vector<16x1xf32> to vector<16x16xf32>
    %205 = vector.broadcast %203 : vector<1x16xf32> to vector<16x16xf32>
    %206 = arith.addf %204, %205 : vector<16x16xf32>
    %cst_60 = arith.constant 4.000000e-01 : f32
    %207 = arith.mulf %cst_60, %201 : f32
    %208 = math.absf %206 : vector<16x16xf32>
    %209 = vector.broadcast %207 : f32 to vector<16x16xf32>
    %210 = arith.mulf %209, %208 : vector<16x16xf32>
    %211 = arith.addf %198, %210 : vector<16x16xf32>
    %212 = vector.broadcast %201 : f32 to vector<16x1xf32>
    %213 = arith.mulf %212, %202 : vector<16x1xf32>
    %214 = arith.addf %199, %213 : vector<16x1xf32>
    %215 = vector.broadcast %201 : f32 to vector<1x16xf32>
    %216 = arith.mulf %215, %203 : vector<1x16xf32>
    %217 = arith.addf %200, %216 : vector<1x16xf32>
    %c1_61 = arith.constant 1 : index
    %c1_62 = arith.constant 1 : index
    %218 = memref.load %arg1[%c1_61, %c1_62] : memref<4x8xf32, #tpu.memory_space<smem>>
    %219 = vector.extract_strided_slice %12 {offsets = [0, 9], sizes = [16, 1], strides = [1, 1]} : vector<16x32xf32> to vector<16x1xf32>
    %220 = vector.extract_strided_slice %18 {offsets = [9, 0], sizes = [1, 16], strides = [1, 1]} : vector<32x16xf32> to vector<1x16xf32>
    %221 = vector.broadcast %219 : vector<16x1xf32> to vector<16x16xf32>
    %222 = vector.broadcast %220 : vector<1x16xf32> to vector<16x16xf32>
    %223 = arith.addf %221, %222 : vector<16x16xf32>
    %cst_63 = arith.constant 4.000000e-01 : f32
    %224 = arith.mulf %cst_63, %218 : f32
    %225 = math.absf %223 : vector<16x16xf32>
    %226 = vector.broadcast %224 : f32 to vector<16x16xf32>
    %227 = arith.mulf %226, %225 : vector<16x16xf32>
    %228 = arith.addf %211, %227 : vector<16x16xf32>
    %229 = vector.broadcast %218 : f32 to vector<16x1xf32>
    %230 = arith.mulf %229, %219 : vector<16x1xf32>
    %231 = arith.addf %214, %230 : vector<16x1xf32>
    %232 = vector.broadcast %218 : f32 to vector<1x16xf32>
    %233 = arith.mulf %232, %220 : vector<1x16xf32>
    %234 = arith.addf %217, %233 : vector<1x16xf32>
    %c1_64 = arith.constant 1 : index
    %c2_65 = arith.constant 2 : index
    %235 = memref.load %arg1[%c1_64, %c2_65] : memref<4x8xf32, #tpu.memory_space<smem>>
    %236 = vector.extract_strided_slice %12 {offsets = [0, 10], sizes = [16, 1], strides = [1, 1]} : vector<16x32xf32> to vector<16x1xf32>
    %237 = vector.extract_strided_slice %18 {offsets = [10, 0], sizes = [1, 16], strides = [1, 1]} : vector<32x16xf32> to vector<1x16xf32>
    %238 = vector.broadcast %236 : vector<16x1xf32> to vector<16x16xf32>
    %239 = vector.broadcast %237 : vector<1x16xf32> to vector<16x16xf32>
    %240 = arith.addf %238, %239 : vector<16x16xf32>
    %cst_66 = arith.constant 4.000000e-01 : f32
    %241 = arith.mulf %cst_66, %235 : f32
    %242 = math.absf %240 : vector<16x16xf32>
    %243 = vector.broadcast %241 : f32 to vector<16x16xf32>
    %244 = arith.mulf %243, %242 : vector<16x16xf32>
    %245 = arith.addf %228, %244 : vector<16x16xf32>
    %246 = vector.broadcast %235 : f32 to vector<16x1xf32>
    %247 = arith.mulf %246, %236 : vector<16x1xf32>
    %248 = arith.addf %231, %247 : vector<16x1xf32>
    %249 = vector.broadcast %235 : f32 to vector<1x16xf32>
    %250 = arith.mulf %249, %237 : vector<1x16xf32>
    %251 = arith.addf %234, %250 : vector<1x16xf32>
    %c1_67 = arith.constant 1 : index
    %c3_68 = arith.constant 3 : index
    %252 = memref.load %arg1[%c1_67, %c3_68] : memref<4x8xf32, #tpu.memory_space<smem>>
    %253 = vector.extract_strided_slice %12 {offsets = [0, 11], sizes = [16, 1], strides = [1, 1]} : vector<16x32xf32> to vector<16x1xf32>
    %254 = vector.extract_strided_slice %18 {offsets = [11, 0], sizes = [1, 16], strides = [1, 1]} : vector<32x16xf32> to vector<1x16xf32>
    %255 = vector.broadcast %253 : vector<16x1xf32> to vector<16x16xf32>
    %256 = vector.broadcast %254 : vector<1x16xf32> to vector<16x16xf32>
    %257 = arith.addf %255, %256 : vector<16x16xf32>
    %cst_69 = arith.constant 4.000000e-01 : f32
    %258 = arith.mulf %cst_69, %252 : f32
    %259 = math.absf %257 : vector<16x16xf32>
    %260 = vector.broadcast %258 : f32 to vector<16x16xf32>
    %261 = arith.mulf %260, %259 : vector<16x16xf32>
    %262 = arith.addf %245, %261 : vector<16x16xf32>
    %263 = vector.broadcast %252 : f32 to vector<16x1xf32>
    %264 = arith.mulf %263, %253 : vector<16x1xf32>
    %265 = arith.addf %248, %264 : vector<16x1xf32>
    %266 = vector.broadcast %252 : f32 to vector<1x16xf32>
    %267 = arith.mulf %266, %254 : vector<1x16xf32>
    %268 = arith.addf %251, %267 : vector<1x16xf32>
    %c1_70 = arith.constant 1 : index
    %c4_71 = arith.constant 4 : index
    %269 = memref.load %arg1[%c1_70, %c4_71] : memref<4x8xf32, #tpu.memory_space<smem>>
    %270 = vector.extract_strided_slice %12 {offsets = [0, 12], sizes = [16, 1], strides = [1, 1]} : vector<16x32xf32> to vector<16x1xf32>
    %271 = vector.extract_strided_slice %18 {offsets = [12, 0], sizes = [1, 16], strides = [1, 1]} : vector<32x16xf32> to vector<1x16xf32>
    %272 = vector.broadcast %270 : vector<16x1xf32> to vector<16x16xf32>
    %273 = vector.broadcast %271 : vector<1x16xf32> to vector<16x16xf32>
    %274 = arith.addf %272, %273 : vector<16x16xf32>
    %cst_72 = arith.constant 4.000000e-01 : f32
    %275 = arith.mulf %cst_72, %269 : f32
    %276 = math.absf %274 : vector<16x16xf32>
    %277 = vector.broadcast %275 : f32 to vector<16x16xf32>
    %278 = arith.mulf %277, %276 : vector<16x16xf32>
    %279 = arith.addf %262, %278 : vector<16x16xf32>
    %280 = vector.broadcast %269 : f32 to vector<16x1xf32>
    %281 = arith.mulf %280, %270 : vector<16x1xf32>
    %282 = arith.addf %265, %281 : vector<16x1xf32>
    %283 = vector.broadcast %269 : f32 to vector<1x16xf32>
    %284 = arith.mulf %283, %271 : vector<1x16xf32>
    %285 = arith.addf %268, %284 : vector<1x16xf32>
    %c1_73 = arith.constant 1 : index
    %c5_74 = arith.constant 5 : index
    %286 = memref.load %arg1[%c1_73, %c5_74] : memref<4x8xf32, #tpu.memory_space<smem>>
    %287 = vector.extract_strided_slice %12 {offsets = [0, 13], sizes = [16, 1], strides = [1, 1]} : vector<16x32xf32> to vector<16x1xf32>
    %288 = vector.extract_strided_slice %18 {offsets = [13, 0], sizes = [1, 16], strides = [1, 1]} : vector<32x16xf32> to vector<1x16xf32>
    %289 = vector.broadcast %287 : vector<16x1xf32> to vector<16x16xf32>
    %290 = vector.broadcast %288 : vector<1x16xf32> to vector<16x16xf32>
    %291 = arith.addf %289, %290 : vector<16x16xf32>
    %cst_75 = arith.constant 4.000000e-01 : f32
    %292 = arith.mulf %cst_75, %286 : f32
    %293 = math.absf %291 : vector<16x16xf32>
    %294 = vector.broadcast %292 : f32 to vector<16x16xf32>
    %295 = arith.mulf %294, %293 : vector<16x16xf32>
    %296 = arith.addf %279, %295 : vector<16x16xf32>
    %297 = vector.broadcast %286 : f32 to vector<16x1xf32>
    %298 = arith.mulf %297, %287 : vector<16x1xf32>
    %299 = arith.addf %282, %298 : vector<16x1xf32>
    %300 = vector.broadcast %286 : f32 to vector<1x16xf32>
    %301 = arith.mulf %300, %288 : vector<1x16xf32>
    %302 = arith.addf %285, %301 : vector<1x16xf32>
    %c1_76 = arith.constant 1 : index
    %c6_77 = arith.constant 6 : index
    %303 = memref.load %arg1[%c1_76, %c6_77] : memref<4x8xf32, #tpu.memory_space<smem>>
    %304 = vector.extract_strided_slice %12 {offsets = [0, 14], sizes = [16, 1], strides = [1, 1]} : vector<16x32xf32> to vector<16x1xf32>
    %305 = vector.extract_strided_slice %18 {offsets = [14, 0], sizes = [1, 16], strides = [1, 1]} : vector<32x16xf32> to vector<1x16xf32>
    %306 = vector.broadcast %304 : vector<16x1xf32> to vector<16x16xf32>
    %307 = vector.broadcast %305 : vector<1x16xf32> to vector<16x16xf32>
    %308 = arith.addf %306, %307 : vector<16x16xf32>
    %cst_78 = arith.constant 4.000000e-01 : f32
    %309 = arith.mulf %cst_78, %303 : f32
    %310 = math.absf %308 : vector<16x16xf32>
    %311 = vector.broadcast %309 : f32 to vector<16x16xf32>
    %312 = arith.mulf %311, %310 : vector<16x16xf32>
    %313 = arith.addf %296, %312 : vector<16x16xf32>
    %314 = vector.broadcast %303 : f32 to vector<16x1xf32>
    %315 = arith.mulf %314, %304 : vector<16x1xf32>
    %316 = arith.addf %299, %315 : vector<16x1xf32>
    %317 = vector.broadcast %303 : f32 to vector<1x16xf32>
    %318 = arith.mulf %317, %305 : vector<1x16xf32>
    %319 = arith.addf %302, %318 : vector<1x16xf32>
    %c1_79 = arith.constant 1 : index
    %c7_80 = arith.constant 7 : index
    %320 = memref.load %arg1[%c1_79, %c7_80] : memref<4x8xf32, #tpu.memory_space<smem>>
    %321 = vector.extract_strided_slice %12 {offsets = [0, 15], sizes = [16, 1], strides = [1, 1]} : vector<16x32xf32> to vector<16x1xf32>
    %322 = vector.extract_strided_slice %18 {offsets = [15, 0], sizes = [1, 16], strides = [1, 1]} : vector<32x16xf32> to vector<1x16xf32>
    %323 = vector.broadcast %321 : vector<16x1xf32> to vector<16x16xf32>
    %324 = vector.broadcast %322 : vector<1x16xf32> to vector<16x16xf32>
    %325 = arith.addf %323, %324 : vector<16x16xf32>
    %cst_81 = arith.constant 4.000000e-01 : f32
    %326 = arith.mulf %cst_81, %320 : f32
    %327 = math.absf %325 : vector<16x16xf32>
    %328 = vector.broadcast %326 : f32 to vector<16x16xf32>
    %329 = arith.mulf %328, %327 : vector<16x16xf32>
    %330 = arith.addf %313, %329 : vector<16x16xf32>
    %331 = vector.broadcast %320 : f32 to vector<16x1xf32>
    %332 = arith.mulf %331, %321 : vector<16x1xf32>
    %333 = arith.addf %316, %332 : vector<16x1xf32>
    %334 = vector.broadcast %320 : f32 to vector<1x16xf32>
    %335 = arith.mulf %334, %322 : vector<1x16xf32>
    %336 = arith.addf %319, %335 : vector<1x16xf32>
    %337 = vector.broadcast %333 : vector<16x1xf32> to vector<16x16xf32>
    %338 = vector.broadcast %336 : vector<1x16xf32> to vector<16x16xf32>
    %339 = arith.addf %337, %338 : vector<16x16xf32>
    %cst_82 = arith.constant 6.000000e-01 : f32
    %340 = vector.broadcast %cst_82 : f32 to vector<16x16xf32>
    %341 = arith.mulf %340, %339 : vector<16x16xf32>
    %342 = arith.addf %341, %330 : vector<16x16xf32>
    %343 = arith.addf %342, %23 : vector<16x16xf32>
    %cst_83 = arith.constant dense<0xFF800000> : vector<16xf32>
    %344 = vector.multi_reduction <maximumf>, %343, %cst_83 [1] : vector<16x16xf32> to vector<16xf32>
    %345 = vector.shape_cast %344 : vector<16xf32> to vector<16x1xf32>
    %346 = vector.broadcast %345 : vector<16x1xf32> to vector<16x16xf32>
    %347 = arith.subf %343, %346 : vector<16x16xf32>
    %348 = math.exp %347 : vector<16x16xf32>
    %cst_84 = arith.constant 0.000000e+00 : f32
    %349 = vector.broadcast %cst_84 : f32 to vector<16x16xf32>
    %350 = arith.select %20, %348, %349 : vector<16x16xi1>, vector<16x16xf32>
    %cst_85 = arith.constant dense<0.000000e+00> : vector<16xf32>
    %351 = vector.multi_reduction <add>, %350, %cst_85 [1] : vector<16x16xf32> to vector<16xf32>
    %352 = vector.shape_cast %351 : vector<16xf32> to vector<16x1xf32>
    %cst_86 = arith.constant 0.000000e+00 : f32
    %353 = vector.broadcast %cst_86 : f32 to vector<16x1xf32>
    %354 = arith.cmpf oeq, %352, %353 : vector<16x1xf32>
    %cst_87 = arith.constant 1.000000e+00 : f32
    %355 = vector.broadcast %cst_87 : f32 to vector<16x1xf32>
    %356 = arith.select %354, %355, %352 : vector<16x1xi1>, vector<16x1xf32>
    %357 = tpu.reciprocal %356 {approx = true} : vector<16x1xf32> -> vector<16x1xf32>
    %358 = arith.mulf %356, %357 : vector<16x1xf32>
    %cst_88 = arith.constant 2.000000e+00 : f32
    %359 = vector.broadcast %cst_88 : f32 to vector<16x1xf32>
    %360 = arith.subf %359, %358 : vector<16x1xf32>
    %361 = arith.mulf %357, %360 : vector<16x1xf32>
    %362 = vector.broadcast %361 : vector<16x1xf32> to vector<16x16xf32>
    %363 = arith.mulf %350, %362 : vector<16x16xf32>
    %364 = vector.extract_strided_slice %7 {offsets = [0, 8], sizes = [16, 8], strides = [1, 1]} : vector<16x32xf32> to vector<16x8xf32>
    %cst_89 = arith.constant dense<0.000000e+00> : vector<16x8xf32>
    %365 = tpu.matmul %363, %364, %cst_89 {dimension_numbers = #tpu.dot_dimension_numbers<[1], [0], [0], [1], [0, 0, 1, 1], [], []>} : vector<16x16xf32>, vector<16x8xf32>, vector<16x8xf32> -> vector<16x8xf32>
    %366 = vector.extract_strided_slice %17 {offsets = [0, 8], sizes = [16, 8], strides = [1, 1]} : vector<16x32xf32> to vector<16x8xf32>
    %367 = arith.addf %365, %366 : vector<16x8xf32>
    %c0_90 = arith.constant 0 : index
    %c8 = arith.constant 8 : index
    %368 = vector.load %arg11[%c0_90, %c8] : memref<16x32xf32, #tpu.memory_space<vmem>>, vector<16x8xf32>
    tpu.vector_store %arg11[%c0_90, %c8], %367 {strides = array<i32>} : memref<16x32xf32, #tpu.memory_space<vmem>>, vector<16x8xf32>,
    %c1_91 = arith.constant 1 : index
    %c0_92 = arith.constant 0 : index
    %c0_93 = arith.constant 0 : index
    %369 = vector.load %arg12[%c1_91, %c0_92, %c0_93] : memref<4x16x16xf32, #tpu.memory_space<vmem>>, vector<1x16x16xf32>
    %370 = vector.shape_cast %369 : vector<1x16x16xf32> to vector<16x16xf32>
    %371 = vector.shape_cast %363 : vector<16x16xf32> to vector<1x16x16xf32>
    tpu.vector_store %arg12[%c1_91, %c0_92, %c0_93], %371 {strides = array<i32>} : memref<4x16x16xf32, #tpu.memory_space<vmem>>, vector<1x16x16xf32>,
    %cst_94 = arith.constant 0.000000e+00 : f32
    %372 = vector.broadcast %cst_94 : f32 to vector<16x16xf32>
    %cst_95 = arith.constant 0.000000e+00 : f32
    %373 = vector.broadcast %cst_95 : f32 to vector<16x1xf32>
    %cst_96 = arith.constant 0.000000e+00 : f32
    %374 = vector.broadcast %cst_96 : f32 to vector<1x16xf32>
    %c2_97 = arith.constant 2 : index
    %c0_98 = arith.constant 0 : index
    %375 = memref.load %arg1[%c2_97, %c0_98] : memref<4x8xf32, #tpu.memory_space<smem>>
    %376 = vector.extract_strided_slice %12 {offsets = [0, 16], sizes = [16, 1], strides = [1, 1]} : vector<16x32xf32> to vector<16x1xf32>
    %377 = vector.extract_strided_slice %18 {offsets = [16, 0], sizes = [1, 16], strides = [1, 1]} : vector<32x16xf32> to vector<1x16xf32>
    %378 = vector.broadcast %376 : vector<16x1xf32> to vector<16x16xf32>
    %379 = vector.broadcast %377 : vector<1x16xf32> to vector<16x16xf32>
    %380 = arith.addf %378, %379 : vector<16x16xf32>
    %cst_99 = arith.constant 4.000000e-01 : f32
    %381 = arith.mulf %cst_99, %375 : f32
    %382 = math.absf %380 : vector<16x16xf32>
    %383 = vector.broadcast %381 : f32 to vector<16x16xf32>
    %384 = arith.mulf %383, %382 : vector<16x16xf32>
    %385 = arith.addf %372, %384 : vector<16x16xf32>
    %386 = vector.broadcast %375 : f32 to vector<16x1xf32>
    %387 = arith.mulf %386, %376 : vector<16x1xf32>
    %388 = arith.addf %373, %387 : vector<16x1xf32>
    %389 = vector.broadcast %375 : f32 to vector<1x16xf32>
    %390 = arith.mulf %389, %377 : vector<1x16xf32>
    %391 = arith.addf %374, %390 : vector<1x16xf32>
    %c2_100 = arith.constant 2 : index
    %c1_101 = arith.constant 1 : index
    %392 = memref.load %arg1[%c2_100, %c1_101] : memref<4x8xf32, #tpu.memory_space<smem>>
    %393 = vector.extract_strided_slice %12 {offsets = [0, 17], sizes = [16, 1], strides = [1, 1]} : vector<16x32xf32> to vector<16x1xf32>
    %394 = vector.extract_strided_slice %18 {offsets = [17, 0], sizes = [1, 16], strides = [1, 1]} : vector<32x16xf32> to vector<1x16xf32>
    %395 = vector.broadcast %393 : vector<16x1xf32> to vector<16x16xf32>
    %396 = vector.broadcast %394 : vector<1x16xf32> to vector<16x16xf32>
    %397 = arith.addf %395, %396 : vector<16x16xf32>
    %cst_102 = arith.constant 4.000000e-01 : f32
    %398 = arith.mulf %cst_102, %392 : f32
    %399 = math.absf %397 : vector<16x16xf32>
    %400 = vector.broadcast %398 : f32 to vector<16x16xf32>
    %401 = arith.mulf %400, %399 : vector<16x16xf32>
    %402 = arith.addf %385, %401 : vector<16x16xf32>
    %403 = vector.broadcast %392 : f32 to vector<16x1xf32>
    %404 = arith.mulf %403, %393 : vector<16x1xf32>
    %405 = arith.addf %388, %404 : vector<16x1xf32>
    %406 = vector.broadcast %392 : f32 to vector<1x16xf32>
    %407 = arith.mulf %406, %394 : vector<1x16xf32>
    %408 = arith.addf %391, %407 : vector<1x16xf32>
    %c2_103 = arith.constant 2 : index
    %c2_104 = arith.constant 2 : index
    %409 = memref.load %arg1[%c2_103, %c2_104] : memref<4x8xf32, #tpu.memory_space<smem>>
    %410 = vector.extract_strided_slice %12 {offsets = [0, 18], sizes = [16, 1], strides = [1, 1]} : vector<16x32xf32> to vector<16x1xf32>
    %411 = vector.extract_strided_slice %18 {offsets = [18, 0], sizes = [1, 16], strides = [1, 1]} : vector<32x16xf32> to vector<1x16xf32>
    %412 = vector.broadcast %410 : vector<16x1xf32> to vector<16x16xf32>
    %413 = vector.broadcast %411 : vector<1x16xf32> to vector<16x16xf32>
    %414 = arith.addf %412, %413 : vector<16x16xf32>
    %cst_105 = arith.constant 4.000000e-01 : f32
    %415 = arith.mulf %cst_105, %409 : f32
    %416 = math.absf %414 : vector<16x16xf32>
    %417 = vector.broadcast %415 : f32 to vector<16x16xf32>
    %418 = arith.mulf %417, %416 : vector<16x16xf32>
    %419 = arith.addf %402, %418 : vector<16x16xf32>
    %420 = vector.broadcast %409 : f32 to vector<16x1xf32>
    %421 = arith.mulf %420, %410 : vector<16x1xf32>
    %422 = arith.addf %405, %421 : vector<16x1xf32>
    %423 = vector.broadcast %409 : f32 to vector<1x16xf32>
    %424 = arith.mulf %423, %411 : vector<1x16xf32>
    %425 = arith.addf %408, %424 : vector<1x16xf32>
    %c2_106 = arith.constant 2 : index
    %c3_107 = arith.constant 3 : index
    %426 = memref.load %arg1[%c2_106, %c3_107] : memref<4x8xf32, #tpu.memory_space<smem>>
    %427 = vector.extract_strided_slice %12 {offsets = [0, 19], sizes = [16, 1], strides = [1, 1]} : vector<16x32xf32> to vector<16x1xf32>
    %428 = vector.extract_strided_slice %18 {offsets = [19, 0], sizes = [1, 16], strides = [1, 1]} : vector<32x16xf32> to vector<1x16xf32>
    %429 = vector.broadcast %427 : vector<16x1xf32> to vector<16x16xf32>
    %430 = vector.broadcast %428 : vector<1x16xf32> to vector<16x16xf32>
    %431 = arith.addf %429, %430 : vector<16x16xf32>
    %cst_108 = arith.constant 4.000000e-01 : f32
    %432 = arith.mulf %cst_108, %426 : f32
    %433 = math.absf %431 : vector<16x16xf32>
    %434 = vector.broadcast %432 : f32 to vector<16x16xf32>
    %435 = arith.mulf %434, %433 : vector<16x16xf32>
    %436 = arith.addf %419, %435 : vector<16x16xf32>
    %437 = vector.broadcast %426 : f32 to vector<16x1xf32>
    %438 = arith.mulf %437, %427 : vector<16x1xf32>
    %439 = arith.addf %422, %438 : vector<16x1xf32>
    %440 = vector.broadcast %426 : f32 to vector<1x16xf32>
    %441 = arith.mulf %440, %428 : vector<1x16xf32>
    %442 = arith.addf %425, %441 : vector<1x16xf32>
    %c2_109 = arith.constant 2 : index
    %c4_110 = arith.constant 4 : index
    %443 = memref.load %arg1[%c2_109, %c4_110] : memref<4x8xf32, #tpu.memory_space<smem>>
    %444 = vector.extract_strided_slice %12 {offsets = [0, 20], sizes = [16, 1], strides = [1, 1]} : vector<16x32xf32> to vector<16x1xf32>
    %445 = vector.extract_strided_slice %18 {offsets = [20, 0], sizes = [1, 16], strides = [1, 1]} : vector<32x16xf32> to vector<1x16xf32>
    %446 = vector.broadcast %444 : vector<16x1xf32> to vector<16x16xf32>
    %447 = vector.broadcast %445 : vector<1x16xf32> to vector<16x16xf32>
    %448 = arith.addf %446, %447 : vector<16x16xf32>
    %cst_111 = arith.constant 4.000000e-01 : f32
    %449 = arith.mulf %cst_111, %443 : f32
    %450 = math.absf %448 : vector<16x16xf32>
    %451 = vector.broadcast %449 : f32 to vector<16x16xf32>
    %452 = arith.mulf %451, %450 : vector<16x16xf32>
    %453 = arith.addf %436, %452 : vector<16x16xf32>
    %454 = vector.broadcast %443 : f32 to vector<16x1xf32>
    %455 = arith.mulf %454, %444 : vector<16x1xf32>
    %456 = arith.addf %439, %455 : vector<16x1xf32>
    %457 = vector.broadcast %443 : f32 to vector<1x16xf32>
    %458 = arith.mulf %457, %445 : vector<1x16xf32>
    %459 = arith.addf %442, %458 : vector<1x16xf32>
    %c2_112 = arith.constant 2 : index
    %c5_113 = arith.constant 5 : index
    %460 = memref.load %arg1[%c2_112, %c5_113] : memref<4x8xf32, #tpu.memory_space<smem>>
    %461 = vector.extract_strided_slice %12 {offsets = [0, 21], sizes = [16, 1], strides = [1, 1]} : vector<16x32xf32> to vector<16x1xf32>
    %462 = vector.extract_strided_slice %18 {offsets = [21, 0], sizes = [1, 16], strides = [1, 1]} : vector<32x16xf32> to vector<1x16xf32>
    %463 = vector.broadcast %461 : vector<16x1xf32> to vector<16x16xf32>
    %464 = vector.broadcast %462 : vector<1x16xf32> to vector<16x16xf32>
    %465 = arith.addf %463, %464 : vector<16x16xf32>
    %cst_114 = arith.constant 4.000000e-01 : f32
    %466 = arith.mulf %cst_114, %460 : f32
    %467 = math.absf %465 : vector<16x16xf32>
    %468 = vector.broadcast %466 : f32 to vector<16x16xf32>
    %469 = arith.mulf %468, %467 : vector<16x16xf32>
    %470 = arith.addf %453, %469 : vector<16x16xf32>
    %471 = vector.broadcast %460 : f32 to vector<16x1xf32>
    %472 = arith.mulf %471, %461 : vector<16x1xf32>
    %473 = arith.addf %456, %472 : vector<16x1xf32>
    %474 = vector.broadcast %460 : f32 to vector<1x16xf32>
    %475 = arith.mulf %474, %462 : vector<1x16xf32>
    %476 = arith.addf %459, %475 : vector<1x16xf32>
    %c2_115 = arith.constant 2 : index
    %c6_116 = arith.constant 6 : index
    %477 = memref.load %arg1[%c2_115, %c6_116] : memref<4x8xf32, #tpu.memory_space<smem>>
    %478 = vector.extract_strided_slice %12 {offsets = [0, 22], sizes = [16, 1], strides = [1, 1]} : vector<16x32xf32> to vector<16x1xf32>
    %479 = vector.extract_strided_slice %18 {offsets = [22, 0], sizes = [1, 16], strides = [1, 1]} : vector<32x16xf32> to vector<1x16xf32>
    %480 = vector.broadcast %478 : vector<16x1xf32> to vector<16x16xf32>
    %481 = vector.broadcast %479 : vector<1x16xf32> to vector<16x16xf32>
    %482 = arith.addf %480, %481 : vector<16x16xf32>
    %cst_117 = arith.constant 4.000000e-01 : f32
    %483 = arith.mulf %cst_117, %477 : f32
    %484 = math.absf %482 : vector<16x16xf32>
    %485 = vector.broadcast %483 : f32 to vector<16x16xf32>
    %486 = arith.mulf %485, %484 : vector<16x16xf32>
    %487 = arith.addf %470, %486 : vector<16x16xf32>
    %488 = vector.broadcast %477 : f32 to vector<16x1xf32>
    %489 = arith.mulf %488, %478 : vector<16x1xf32>
    %490 = arith.addf %473, %489 : vector<16x1xf32>
    %491 = vector.broadcast %477 : f32 to vector<1x16xf32>
    %492 = arith.mulf %491, %479 : vector<1x16xf32>
    %493 = arith.addf %476, %492 : vector<1x16xf32>
    %c2_118 = arith.constant 2 : index
    %c7_119 = arith.constant 7 : index
    %494 = memref.load %arg1[%c2_118, %c7_119] : memref<4x8xf32, #tpu.memory_space<smem>>
    %495 = vector.extract_strided_slice %12 {offsets = [0, 23], sizes = [16, 1], strides = [1, 1]} : vector<16x32xf32> to vector<16x1xf32>
    %496 = vector.extract_strided_slice %18 {offsets = [23, 0], sizes = [1, 16], strides = [1, 1]} : vector<32x16xf32> to vector<1x16xf32>
    %497 = vector.broadcast %495 : vector<16x1xf32> to vector<16x16xf32>
    %498 = vector.broadcast %496 : vector<1x16xf32> to vector<16x16xf32>
    %499 = arith.addf %497, %498 : vector<16x16xf32>
    %cst_120 = arith.constant 4.000000e-01 : f32
    %500 = arith.mulf %cst_120, %494 : f32
    %501 = math.absf %499 : vector<16x16xf32>
    %502 = vector.broadcast %500 : f32 to vector<16x16xf32>
    %503 = arith.mulf %502, %501 : vector<16x16xf32>
    %504 = arith.addf %487, %503 : vector<16x16xf32>
    %505 = vector.broadcast %494 : f32 to vector<16x1xf32>
    %506 = arith.mulf %505, %495 : vector<16x1xf32>
    %507 = arith.addf %490, %506 : vector<16x1xf32>
    %508 = vector.broadcast %494 : f32 to vector<1x16xf32>
    %509 = arith.mulf %508, %496 : vector<1x16xf32>
    %510 = arith.addf %493, %509 : vector<1x16xf32>
    %511 = vector.broadcast %507 : vector<16x1xf32> to vector<16x16xf32>
    %512 = vector.broadcast %510 : vector<1x16xf32> to vector<16x16xf32>
    %513 = arith.addf %511, %512 : vector<16x16xf32>
    %cst_121 = arith.constant 6.000000e-01 : f32
    %514 = vector.broadcast %cst_121 : f32 to vector<16x16xf32>
    %515 = arith.mulf %514, %513 : vector<16x16xf32>
    %516 = arith.addf %515, %504 : vector<16x16xf32>
    %517 = arith.addf %516, %23 : vector<16x16xf32>
    %cst_122 = arith.constant dense<0xFF800000> : vector<16xf32>
    %518 = vector.multi_reduction <maximumf>, %517, %cst_122 [1] : vector<16x16xf32> to vector<16xf32>
    %519 = vector.shape_cast %518 : vector<16xf32> to vector<16x1xf32>
    %520 = vector.broadcast %519 : vector<16x1xf32> to vector<16x16xf32>
    %521 = arith.subf %517, %520 : vector<16x16xf32>
    %522 = math.exp %521 : vector<16x16xf32>
    %cst_123 = arith.constant 0.000000e+00 : f32
    %523 = vector.broadcast %cst_123 : f32 to vector<16x16xf32>
    %524 = arith.select %20, %522, %523 : vector<16x16xi1>, vector<16x16xf32>
    %cst_124 = arith.constant dense<0.000000e+00> : vector<16xf32>
    %525 = vector.multi_reduction <add>, %524, %cst_124 [1] : vector<16x16xf32> to vector<16xf32>
    %526 = vector.shape_cast %525 : vector<16xf32> to vector<16x1xf32>
    %cst_125 = arith.constant 0.000000e+00 : f32
    %527 = vector.broadcast %cst_125 : f32 to vector<16x1xf32>
    %528 = arith.cmpf oeq, %526, %527 : vector<16x1xf32>
    %cst_126 = arith.constant 1.000000e+00 : f32
    %529 = vector.broadcast %cst_126 : f32 to vector<16x1xf32>
    %530 = arith.select %528, %529, %526 : vector<16x1xi1>, vector<16x1xf32>
    %531 = tpu.reciprocal %530 {approx = true} : vector<16x1xf32> -> vector<16x1xf32>
    %532 = arith.mulf %530, %531 : vector<16x1xf32>
    %cst_127 = arith.constant 2.000000e+00 : f32
    %533 = vector.broadcast %cst_127 : f32 to vector<16x1xf32>
    %534 = arith.subf %533, %532 : vector<16x1xf32>
    %535 = arith.mulf %531, %534 : vector<16x1xf32>
    %536 = vector.broadcast %535 : vector<16x1xf32> to vector<16x16xf32>
    %537 = arith.mulf %524, %536 : vector<16x16xf32>
    %538 = vector.extract_strided_slice %7 {offsets = [0, 16], sizes = [16, 8], strides = [1, 1]} : vector<16x32xf32> to vector<16x8xf32>
    %cst_128 = arith.constant dense<0.000000e+00> : vector<16x8xf32>
    %539 = tpu.matmul %537, %538, %cst_128 {dimension_numbers = #tpu.dot_dimension_numbers<[1], [0], [0], [1], [0, 0, 1, 1], [], []>} : vector<16x16xf32>, vector<16x8xf32>, vector<16x8xf32> -> vector<16x8xf32>
    %540 = vector.extract_strided_slice %17 {offsets = [0, 16], sizes = [16, 8], strides = [1, 1]} : vector<16x32xf32> to vector<16x8xf32>
    %541 = arith.addf %539, %540 : vector<16x8xf32>
    %c0_129 = arith.constant 0 : index
    %c16 = arith.constant 16 : index
    %542 = vector.load %arg11[%c0_129, %c16] : memref<16x32xf32, #tpu.memory_space<vmem>>, vector<16x8xf32>
    tpu.vector_store %arg11[%c0_129, %c16], %541 {strides = array<i32>} : memref<16x32xf32, #tpu.memory_space<vmem>>, vector<16x8xf32>,
    %c2_130 = arith.constant 2 : index
    %c0_131 = arith.constant 0 : index
    %c0_132 = arith.constant 0 : index
    %543 = vector.load %arg12[%c2_130, %c0_131, %c0_132] : memref<4x16x16xf32, #tpu.memory_space<vmem>>, vector<1x16x16xf32>
    %544 = vector.shape_cast %543 : vector<1x16x16xf32> to vector<16x16xf32>
    %545 = vector.shape_cast %537 : vector<16x16xf32> to vector<1x16x16xf32>
    tpu.vector_store %arg12[%c2_130, %c0_131, %c0_132], %545 {strides = array<i32>} : memref<4x16x16xf32, #tpu.memory_space<vmem>>, vector<1x16x16xf32>,
    %cst_133 = arith.constant 0.000000e+00 : f32
    %546 = vector.broadcast %cst_133 : f32 to vector<16x16xf32>
    %cst_134 = arith.constant 0.000000e+00 : f32
    %547 = vector.broadcast %cst_134 : f32 to vector<16x1xf32>
    %cst_135 = arith.constant 0.000000e+00 : f32
    %548 = vector.broadcast %cst_135 : f32 to vector<1x16xf32>
    %c3_136 = arith.constant 3 : index
    %c0_137 = arith.constant 0 : index
    %549 = memref.load %arg1[%c3_136, %c0_137] : memref<4x8xf32, #tpu.memory_space<smem>>
    %550 = vector.extract_strided_slice %12 {offsets = [0, 24], sizes = [16, 1], strides = [1, 1]} : vector<16x32xf32> to vector<16x1xf32>
    %551 = vector.extract_strided_slice %18 {offsets = [24, 0], sizes = [1, 16], strides = [1, 1]} : vector<32x16xf32> to vector<1x16xf32>
    %552 = vector.broadcast %550 : vector<16x1xf32> to vector<16x16xf32>
    %553 = vector.broadcast %551 : vector<1x16xf32> to vector<16x16xf32>
    %554 = arith.addf %552, %553 : vector<16x16xf32>
    %cst_138 = arith.constant 4.000000e-01 : f32
    %555 = arith.mulf %cst_138, %549 : f32
    %556 = math.absf %554 : vector<16x16xf32>
    %557 = vector.broadcast %555 : f32 to vector<16x16xf32>
    %558 = arith.mulf %557, %556 : vector<16x16xf32>
    %559 = arith.addf %546, %558 : vector<16x16xf32>
    %560 = vector.broadcast %549 : f32 to vector<16x1xf32>
    %561 = arith.mulf %560, %550 : vector<16x1xf32>
    %562 = arith.addf %547, %561 : vector<16x1xf32>
    %563 = vector.broadcast %549 : f32 to vector<1x16xf32>
    %564 = arith.mulf %563, %551 : vector<1x16xf32>
    %565 = arith.addf %548, %564 : vector<1x16xf32>
    %c3_139 = arith.constant 3 : index
    %c1_140 = arith.constant 1 : index
    %566 = memref.load %arg1[%c3_139, %c1_140] : memref<4x8xf32, #tpu.memory_space<smem>>
    %567 = vector.extract_strided_slice %12 {offsets = [0, 25], sizes = [16, 1], strides = [1, 1]} : vector<16x32xf32> to vector<16x1xf32>
    %568 = vector.extract_strided_slice %18 {offsets = [25, 0], sizes = [1, 16], strides = [1, 1]} : vector<32x16xf32> to vector<1x16xf32>
    %569 = vector.broadcast %567 : vector<16x1xf32> to vector<16x16xf32>
    %570 = vector.broadcast %568 : vector<1x16xf32> to vector<16x16xf32>
    %571 = arith.addf %569, %570 : vector<16x16xf32>
    %cst_141 = arith.constant 4.000000e-01 : f32
    %572 = arith.mulf %cst_141, %566 : f32
    %573 = math.absf %571 : vector<16x16xf32>
    %574 = vector.broadcast %572 : f32 to vector<16x16xf32>
    %575 = arith.mulf %574, %573 : vector<16x16xf32>
    %576 = arith.addf %559, %575 : vector<16x16xf32>
    %577 = vector.broadcast %566 : f32 to vector<16x1xf32>
    %578 = arith.mulf %577, %567 : vector<16x1xf32>
    %579 = arith.addf %562, %578 : vector<16x1xf32>
    %580 = vector.broadcast %566 : f32 to vector<1x16xf32>
    %581 = arith.mulf %580, %568 : vector<1x16xf32>
    %582 = arith.addf %565, %581 : vector<1x16xf32>
    %c3_142 = arith.constant 3 : index
    %c2_143 = arith.constant 2 : index
    %583 = memref.load %arg1[%c3_142, %c2_143] : memref<4x8xf32, #tpu.memory_space<smem>>
    %584 = vector.extract_strided_slice %12 {offsets = [0, 26], sizes = [16, 1], strides = [1, 1]} : vector<16x32xf32> to vector<16x1xf32>
    %585 = vector.extract_strided_slice %18 {offsets = [26, 0], sizes = [1, 16], strides = [1, 1]} : vector<32x16xf32> to vector<1x16xf32>
    %586 = vector.broadcast %584 : vector<16x1xf32> to vector<16x16xf32>
    %587 = vector.broadcast %585 : vector<1x16xf32> to vector<16x16xf32>
    %588 = arith.addf %586, %587 : vector<16x16xf32>
    %cst_144 = arith.constant 4.000000e-01 : f32
    %589 = arith.mulf %cst_144, %583 : f32
    %590 = math.absf %588 : vector<16x16xf32>
    %591 = vector.broadcast %589 : f32 to vector<16x16xf32>
    %592 = arith.mulf %591, %590 : vector<16x16xf32>
    %593 = arith.addf %576, %592 : vector<16x16xf32>
    %594 = vector.broadcast %583 : f32 to vector<16x1xf32>
    %595 = arith.mulf %594, %584 : vector<16x1xf32>
    %596 = arith.addf %579, %595 : vector<16x1xf32>
    %597 = vector.broadcast %583 : f32 to vector<1x16xf32>
    %598 = arith.mulf %597, %585 : vector<1x16xf32>
    %599 = arith.addf %582, %598 : vector<1x16xf32>
    %c3_145 = arith.constant 3 : index
    %c3_146 = arith.constant 3 : index
    %600 = memref.load %arg1[%c3_145, %c3_146] : memref<4x8xf32, #tpu.memory_space<smem>>
    %601 = vector.extract_strided_slice %12 {offsets = [0, 27], sizes = [16, 1], strides = [1, 1]} : vector<16x32xf32> to vector<16x1xf32>
    %602 = vector.extract_strided_slice %18 {offsets = [27, 0], sizes = [1, 16], strides = [1, 1]} : vector<32x16xf32> to vector<1x16xf32>
    %603 = vector.broadcast %601 : vector<16x1xf32> to vector<16x16xf32>
    %604 = vector.broadcast %602 : vector<1x16xf32> to vector<16x16xf32>
    %605 = arith.addf %603, %604 : vector<16x16xf32>
    %cst_147 = arith.constant 4.000000e-01 : f32
    %606 = arith.mulf %cst_147, %600 : f32
    %607 = math.absf %605 : vector<16x16xf32>
    %608 = vector.broadcast %606 : f32 to vector<16x16xf32>
    %609 = arith.mulf %608, %607 : vector<16x16xf32>
    %610 = arith.addf %593, %609 : vector<16x16xf32>
    %611 = vector.broadcast %600 : f32 to vector<16x1xf32>
    %612 = arith.mulf %611, %601 : vector<16x1xf32>
    %613 = arith.addf %596, %612 : vector<16x1xf32>
    %614 = vector.broadcast %600 : f32 to vector<1x16xf32>
    %615 = arith.mulf %614, %602 : vector<1x16xf32>
    %616 = arith.addf %599, %615 : vector<1x16xf32>
    %c3_148 = arith.constant 3 : index
    %c4_149 = arith.constant 4 : index
    %617 = memref.load %arg1[%c3_148, %c4_149] : memref<4x8xf32, #tpu.memory_space<smem>>
    %618 = vector.extract_strided_slice %12 {offsets = [0, 28], sizes = [16, 1], strides = [1, 1]} : vector<16x32xf32> to vector<16x1xf32>
    %619 = vector.extract_strided_slice %18 {offsets = [28, 0], sizes = [1, 16], strides = [1, 1]} : vector<32x16xf32> to vector<1x16xf32>
    %620 = vector.broadcast %618 : vector<16x1xf32> to vector<16x16xf32>
    %621 = vector.broadcast %619 : vector<1x16xf32> to vector<16x16xf32>
    %622 = arith.addf %620, %621 : vector<16x16xf32>
    %cst_150 = arith.constant 4.000000e-01 : f32
    %623 = arith.mulf %cst_150, %617 : f32
    %624 = math.absf %622 : vector<16x16xf32>
    %625 = vector.broadcast %623 : f32 to vector<16x16xf32>
    %626 = arith.mulf %625, %624 : vector<16x16xf32>
    %627 = arith.addf %610, %626 : vector<16x16xf32>
    %628 = vector.broadcast %617 : f32 to vector<16x1xf32>
    %629 = arith.mulf %628, %618 : vector<16x1xf32>
    %630 = arith.addf %613, %629 : vector<16x1xf32>
    %631 = vector.broadcast %617 : f32 to vector<1x16xf32>
    %632 = arith.mulf %631, %619 : vector<1x16xf32>
    %633 = arith.addf %616, %632 : vector<1x16xf32>
    %c3_151 = arith.constant 3 : index
    %c5_152 = arith.constant 5 : index
    %634 = memref.load %arg1[%c3_151, %c5_152] : memref<4x8xf32, #tpu.memory_space<smem>>
    %635 = vector.extract_strided_slice %12 {offsets = [0, 29], sizes = [16, 1], strides = [1, 1]} : vector<16x32xf32> to vector<16x1xf32>
    %636 = vector.extract_strided_slice %18 {offsets = [29, 0], sizes = [1, 16], strides = [1, 1]} : vector<32x16xf32> to vector<1x16xf32>
    %637 = vector.broadcast %635 : vector<16x1xf32> to vector<16x16xf32>
    %638 = vector.broadcast %636 : vector<1x16xf32> to vector<16x16xf32>
    %639 = arith.addf %637, %638 : vector<16x16xf32>
    %cst_153 = arith.constant 4.000000e-01 : f32
    %640 = arith.mulf %cst_153, %634 : f32
    %641 = math.absf %639 : vector<16x16xf32>
    %642 = vector.broadcast %640 : f32 to vector<16x16xf32>
    %643 = arith.mulf %642, %641 : vector<16x16xf32>
    %644 = arith.addf %627, %643 : vector<16x16xf32>
    %645 = vector.broadcast %634 : f32 to vector<16x1xf32>
    %646 = arith.mulf %645, %635 : vector<16x1xf32>
    %647 = arith.addf %630, %646 : vector<16x1xf32>
    %648 = vector.broadcast %634 : f32 to vector<1x16xf32>
    %649 = arith.mulf %648, %636 : vector<1x16xf32>
    %650 = arith.addf %633, %649 : vector<1x16xf32>
    %c3_154 = arith.constant 3 : index
    %c6_155 = arith.constant 6 : index
    %651 = memref.load %arg1[%c3_154, %c6_155] : memref<4x8xf32, #tpu.memory_space<smem>>
    %652 = vector.extract_strided_slice %12 {offsets = [0, 30], sizes = [16, 1], strides = [1, 1]} : vector<16x32xf32> to vector<16x1xf32>
    %653 = vector.extract_strided_slice %18 {offsets = [30, 0], sizes = [1, 16], strides = [1, 1]} : vector<32x16xf32> to vector<1x16xf32>
    %654 = vector.broadcast %652 : vector<16x1xf32> to vector<16x16xf32>
    %655 = vector.broadcast %653 : vector<1x16xf32> to vector<16x16xf32>
    %656 = arith.addf %654, %655 : vector<16x16xf32>
    %cst_156 = arith.constant 4.000000e-01 : f32
    %657 = arith.mulf %cst_156, %651 : f32
    %658 = math.absf %656 : vector<16x16xf32>
    %659 = vector.broadcast %657 : f32 to vector<16x16xf32>
    %660 = arith.mulf %659, %658 : vector<16x16xf32>
    %661 = arith.addf %644, %660 : vector<16x16xf32>
    %662 = vector.broadcast %651 : f32 to vector<16x1xf32>
    %663 = arith.mulf %662, %652 : vector<16x1xf32>
    %664 = arith.addf %647, %663 : vector<16x1xf32>
    %665 = vector.broadcast %651 : f32 to vector<1x16xf32>
    %666 = arith.mulf %665, %653 : vector<1x16xf32>
    %667 = arith.addf %650, %666 : vector<1x16xf32>
    %c3_157 = arith.constant 3 : index
    %c7_158 = arith.constant 7 : index
    %668 = memref.load %arg1[%c3_157, %c7_158] : memref<4x8xf32, #tpu.memory_space<smem>>
    %669 = vector.extract_strided_slice %12 {offsets = [0, 31], sizes = [16, 1], strides = [1, 1]} : vector<16x32xf32> to vector<16x1xf32>
    %670 = vector.extract_strided_slice %18 {offsets = [31, 0], sizes = [1, 16], strides = [1, 1]} : vector<32x16xf32> to vector<1x16xf32>
    %671 = vector.broadcast %669 : vector<16x1xf32> to vector<16x16xf32>
    %672 = vector.broadcast %670 : vector<1x16xf32> to vector<16x16xf32>
    %673 = arith.addf %671, %672 : vector<16x16xf32>
    %cst_159 = arith.constant 4.000000e-01 : f32
    %674 = arith.mulf %cst_159, %668 : f32
    %675 = math.absf %673 : vector<16x16xf32>
    %676 = vector.broadcast %674 : f32 to vector<16x16xf32>
    %677 = arith.mulf %676, %675 : vector<16x16xf32>
    %678 = arith.addf %661, %677 : vector<16x16xf32>
    %679 = vector.broadcast %668 : f32 to vector<16x1xf32>
    %680 = arith.mulf %679, %669 : vector<16x1xf32>
    %681 = arith.addf %664, %680 : vector<16x1xf32>
    %682 = vector.broadcast %668 : f32 to vector<1x16xf32>
    %683 = arith.mulf %682, %670 : vector<1x16xf32>
    %684 = arith.addf %667, %683 : vector<1x16xf32>
    %685 = vector.broadcast %681 : vector<16x1xf32> to vector<16x16xf32>
    %686 = vector.broadcast %684 : vector<1x16xf32> to vector<16x16xf32>
    %687 = arith.addf %685, %686 : vector<16x16xf32>
    %cst_160 = arith.constant 6.000000e-01 : f32
    %688 = vector.broadcast %cst_160 : f32 to vector<16x16xf32>
    %689 = arith.mulf %688, %687 : vector<16x16xf32>
    %690 = arith.addf %689, %678 : vector<16x16xf32>
    %691 = arith.addf %690, %23 : vector<16x16xf32>
    %cst_161 = arith.constant dense<0xFF800000> : vector<16xf32>
    %692 = vector.multi_reduction <maximumf>, %691, %cst_161 [1] : vector<16x16xf32> to vector<16xf32>
    %693 = vector.shape_cast %692 : vector<16xf32> to vector<16x1xf32>
    %694 = vector.broadcast %693 : vector<16x1xf32> to vector<16x16xf32>
    %695 = arith.subf %691, %694 : vector<16x16xf32>
    %696 = math.exp %695 : vector<16x16xf32>
    %cst_162 = arith.constant 0.000000e+00 : f32
    %697 = vector.broadcast %cst_162 : f32 to vector<16x16xf32>
    %698 = arith.select %20, %696, %697 : vector<16x16xi1>, vector<16x16xf32>
    %cst_163 = arith.constant dense<0.000000e+00> : vector<16xf32>
    %699 = vector.multi_reduction <add>, %698, %cst_163 [1] : vector<16x16xf32> to vector<16xf32>
    %700 = vector.shape_cast %699 : vector<16xf32> to vector<16x1xf32>
    %cst_164 = arith.constant 0.000000e+00 : f32
    %701 = vector.broadcast %cst_164 : f32 to vector<16x1xf32>
    %702 = arith.cmpf oeq, %700, %701 : vector<16x1xf32>
    %cst_165 = arith.constant 1.000000e+00 : f32
    %703 = vector.broadcast %cst_165 : f32 to vector<16x1xf32>
    %704 = arith.select %702, %703, %700 : vector<16x1xi1>, vector<16x1xf32>
    %705 = tpu.reciprocal %704 {approx = true} : vector<16x1xf32> -> vector<16x1xf32>
    %706 = arith.mulf %704, %705 : vector<16x1xf32>
    %cst_166 = arith.constant 2.000000e+00 : f32
    %707 = vector.broadcast %cst_166 : f32 to vector<16x1xf32>
    %708 = arith.subf %707, %706 : vector<16x1xf32>
    %709 = arith.mulf %705, %708 : vector<16x1xf32>
    %710 = vector.broadcast %709 : vector<16x1xf32> to vector<16x16xf32>
    %711 = arith.mulf %698, %710 : vector<16x16xf32>
    %712 = vector.extract_strided_slice %7 {offsets = [0, 24], sizes = [16, 8], strides = [1, 1]} : vector<16x32xf32> to vector<16x8xf32>
    %cst_167 = arith.constant dense<0.000000e+00> : vector<16x8xf32>
    %713 = tpu.matmul %711, %712, %cst_167 {dimension_numbers = #tpu.dot_dimension_numbers<[1], [0], [0], [1], [0, 0, 1, 1], [], []>} : vector<16x16xf32>, vector<16x8xf32>, vector<16x8xf32> -> vector<16x8xf32>
    %714 = vector.extract_strided_slice %17 {offsets = [0, 24], sizes = [16, 8], strides = [1, 1]} : vector<16x32xf32> to vector<16x8xf32>
    %715 = arith.addf %713, %714 : vector<16x8xf32>
    %c0_168 = arith.constant 0 : index
    %c24 = arith.constant 24 : index
    %716 = vector.load %arg11[%c0_168, %c24] : memref<16x32xf32, #tpu.memory_space<vmem>>, vector<16x8xf32>
    tpu.vector_store %arg11[%c0_168, %c24], %715 {strides = array<i32>} : memref<16x32xf32, #tpu.memory_space<vmem>>, vector<16x8xf32>,
    %c3_169 = arith.constant 3 : index
    %c0_170 = arith.constant 0 : index
    %c0_171 = arith.constant 0 : index
    %717 = vector.load %arg12[%c3_169, %c0_170, %c0_171] : memref<4x16x16xf32, #tpu.memory_space<vmem>>, vector<1x16x16xf32>
    %718 = vector.shape_cast %717 : vector<1x16x16xf32> to vector<16x16xf32>
    %719 = vector.shape_cast %711 : vector<16x16xf32> to vector<1x16x16xf32>
    tpu.vector_store %arg12[%c3_169, %c0_170, %c0_171], %719 {strides = array<i32>} : memref<4x16x16xf32, #tpu.memory_space<vmem>>, vector<1x16x16xf32>,
    return
  }
  func.func @transform_0(%arg0: i32) -> (i32, i32) {
    %c0_i32 = arith.constant 0 : i32
    %c0_i32_0 = arith.constant 0 : i32
    %c0_i32_1 = arith.constant 0 : i32
    return %c0_i32, %c0_i32_0 : i32, i32
  }
  func.func @transform_1(%arg0: i32) -> (i32, i32) {
    %c0_i32 = arith.constant 0 : i32
    %c0_i32_0 = arith.constant 0 : i32
    %c0_i32_1 = arith.constant 0 : i32
    return %c0_i32, %c0_i32_0 : i32, i32
  }
  func.func @transform_2(%arg0: i32) -> (i32, i32) {
    %c0_i32 = arith.constant 0 : i32
    %c0_i32_0 = arith.constant 0 : i32
    return %arg0, %c0_i32 : i32, i32
  }
  func.func @transform_3(%arg0: i32) -> (i32, i32) {
    %c0_i32 = arith.constant 0 : i32
    %c0_i32_0 = arith.constant 0 : i32
    return %arg0, %c0_i32 : i32, i32
  }
  func.func @transform_4(%arg0: i32) -> (i32, i32) {
    %c0_i32 = arith.constant 0 : i32
    %c0_i32_0 = arith.constant 0 : i32
    %c0_i32_1 = arith.constant 0 : i32
    return %c0_i32, %c0_i32_0 : i32, i32
  }
  func.func @transform_5(%arg0: i32) -> (i32, i32) {
    %c0_i32 = arith.constant 0 : i32
    %c0_i32_0 = arith.constant 0 : i32
    %c0_i32_1 = arith.constant 0 : i32
    return %c0_i32, %c0_i32_0 : i32, i32
  }
  func.func @transform_6(%arg0: i32) -> (i32, i32) {
    %c0_i32 = arith.constant 0 : i32
    %c0_i32_0 = arith.constant 0 : i32
    %c0_i32_1 = arith.constant 0 : i32
    return %c0_i32, %c0_i32_0 : i32, i32
  }
  func.func @transform_7(%arg0: i32) -> (i32, i32) {
    %c0_i32 = arith.constant 0 : i32
    %c0_i32_0 = arith.constant 0 : i32
    %c0_i32_1 = arith.constant 0 : i32
    return %c0_i32, %c0_i32_0 : i32, i32
  }
  func.func @transform_8(%arg0: i32) -> (i32, i32) {
    %c0_i32 = arith.constant 0 : i32
    %c0_i32_0 = arith.constant 0 : i32
    %c0_i32_1 = arith.constant 0 : i32
    return %c0_i32, %c0_i32_0 : i32, i32
  }
  func.func @transform_9(%arg0: i32) -> (i32, i32) {
    %c0_i32 = arith.constant 0 : i32
    %c0_i32_0 = arith.constant 0 : i32
    %c0_i32_1 = arith.constant 0 : i32
    return %c0_i32, %c0_i32_0 : i32, i32
  }
  func.func @transform_10(%arg0: i32) -> (i32, i32) {
    %c0_i32 = arith.constant 0 : i32
    %c0_i32_0 = arith.constant 0 : i32
    return %arg0, %c0_i32 : i32, i32
  }
  func.func @transform_11(%arg0: i32) -> (i32, i32, i32) {
    %c0_i32 = arith.constant 0 : i32
    %c0_i32_0 = arith.constant 0 : i32
    %c0_i32_1 = arith.constant 0 : i32
    return %c0_i32, %arg0, %c0_i32_0 : i32, i32, i32
  }
}

</mosaic_0001>

<llo_original>
// kernel: deep_graph_conv_layer.3
$region0: #{deep_graph_conv_layer.3}
  #allocation0 [shape = 'u32[]', space=smem, size = 0x4, offset = 0x4, fixed_abs, tag = 'smem constant byte address 0x4 - core index']
  #allocation1 [shape = 'u32[144,128]{1,0:T(1,128)}', space=vmem, size = 0x12000, scoped, tag = 'internal scratch']
  %s0 = inlined_call_operand.vmem [shape: f32[16,32], index: 0, kind: input, shape index: {}]
  %s1 = inlined_call_operand.vmem [shape: f32[1,32], index: 1, kind: input, shape index: {}]
  %s2 = inlined_call_operand.vmem [shape: f32[1,32], index: 2, kind: input, shape index: {}]
  %s3 = inlined_call_operand.hbm [shape: f32[16,32], index: 3, kind: output, shape index: {}]
  %s4 = sld [smem:[#allocation0]]
  $region22: #{deep_graph_conv_layer.3} parent=0
    _
  %s6 = ssub.s32 1, %s4
  %s7 = scalar_select 0, %s6, %s4
  $region1: #{deep_graph_conv_layer.3} parent=0
    #allocation2 [shape = 'u8[8192]{0}', space=vmem, size = 0x2000, scoped, tag = 'output window, operand 0, single buffered']
    #allocation3 [shape = 's32[1]{0}', space=sflag, size = 0x4, scoped, tag = 'scoped memory for deep_graph_conv_layer.3']
    %8 = vsyncpa [#allocation3], 0
    // Predicated region
    $region2: #{deep_graph_conv_layer.3} parent=1 // pred_check
      _
    $region3: #{deep_graph_conv_layer.3} parent=1 // pred_check_branch
      %10 = sbr.rel (0) target = $region5
    $region4: #{deep_graph_conv_layer.3} parent=1 // pred_region
      _
    $region5: #{deep_graph_conv_layer.3} parent=1 // pred_fallthru
      _
    // Predicated region
    $region6: #{deep_graph_conv_layer.3} parent=1 // pred_check
      _
    $region7: #{deep_graph_conv_layer.3} parent=1 // pred_check_branch
      %12 = sbr.rel (0) target = $region9
    $region8: #{deep_graph_conv_layer.3} parent=1 // pred_region
      _
    $region9: #{deep_graph_conv_layer.3} parent=1 // pred_fallthru
      _
    // Predicated region
    $region10: #{deep_graph_conv_layer.3} parent=1 // pred_check
      _
    $region11: #{deep_graph_conv_layer.3} parent=1 // pred_check_branch
      %14 = sbr.rel (0) target = $region13
    $region12: #{deep_graph_conv_layer.3} parent=1 // pred_region
      _
    $region13: #{deep_graph_conv_layer.3} parent=1 // pred_fallthru
      _
    %v15 = vld [vmem:[%s0] sm:$0xff]
    %v16 = vld [vmem:[%s0 + $0x8] sm:$0xff]
    %vm17 = vcmask 261120
    %v18 = vsel %vm17, %v15, 0.0
    %v19 = vsel %vm17, %v16, 0.0
    %v20 = vadd.f32 %v18, %v19
    %v21 = vrot.slane %v20, 4
    %v22 = vadd.f32 %v20, %v21
    %v23 = vrot.slane %v22, 2
    %v24 = vadd.f32 %v22, %v23
    %v25 = vrot.slane %v24, 1
    %v26 = vadd.f32 %v24, %v25
    %v27 = vrcp.pop 16.0
    %v28 = vmul.f32 %v26, %v27
    %v29 = vsub.f32 %v15, %v28
    %v30 = vsub.f32 %v16, %v28
    %v31 = vmul.f32 %v29, %v29
    %v32 = vmul.f32 %v30, %v30
    %v33 = vsel %vm17, %v31, 0.0
    %v34 = vsel %vm17, %v32, 0.0
    %v35 = vadd.f32 %v33, %v34
    %v36 = vrot.slane %v35, 4
    %v37 = vadd.f32 %v35, %v36
    %v38 = vrot.slane %v37, 2
    %v39 = vadd.f32 %v37, %v38
    %v40 = vrot.slane %v39, 1
    %v41 = vadd.f32 %v39, %v40
    %v42 = vmul.f32 %v41, %v27
    %v43 = vadd.f32 %v42, 1e-05
    %v44 = vrsqrt.pop %v43
    %v45 = vmul.f32 %v29, %v44
    %v46 = vmul.f32 %v30, %v44
    %v47 = vld [vmem:[%s1] sm:$0x1]
    %v49 = vlaneseq
    %v50 = vshrl.u32 %v49, 7
    %v51 = vsub.s32 0, %v50
    %v52 = vrot.slane %v47, %v51
    %v54 = vmul.f32 %v52, %v45
    %v55 = vmul.f32 %v52, %v46
    %v56 = vld [vmem:[%s2] sm:$0x1]
    %v58 = vlaneseq
    %v59 = vshrl.u32 %v58, 7
    %v60 = vsub.s32 0, %v59
    %v61 = vrot.slane %v56, %v60
    %v63 = vadd.f32 %v54, %v61
    %v64 = vadd.f32 %v55, %v61
    %v65 = vmax.f32 %v63, 0.0
    %v66 = vmax.f32 %v64, 0.0
    %67 = vst.msk [vmem:[#allocation2] sm:$0xff] %vm17, %v65
    %68 = vst.msk [vmem:[#allocation2 + $0x8] sm:$0xff] %vm17, %v66
    // Predicated region
    $region14: #{deep_graph_conv_layer.3} parent=1 // pred_check
      _
    $region15: #{deep_graph_conv_layer.3} parent=1 // pred_check_branch
      %70 = sbr.rel (0) target = $region17
    $region16: #{deep_graph_conv_layer.3} parent=1 // pred_region
      %s72 = ssub.s32 256, 256
      %73 = vsyncadd [#allocation3], %s72
      %s74 = sshll.u32 [#allocation2], 4
      %s75 = int_to_ptr.vmem [resolvable:$true] %s74
      %80 = dma.vmem_to_hbm [thread:$0]  %s75, 256, %s3, [#allocation3], 128, 128, 8
    $region17: #{deep_graph_conv_layer.3} parent=1 // pred_fallthru
      _
    // Predicated region
    $region18: #{deep_graph_conv_layer.3} parent=1 // pred_check
      _
    $region19: #{deep_graph_conv_layer.3} parent=1 // pred_check_branch
      %82 = sbr.rel (0) target = $region21
    $region20: #{deep_graph_conv_layer.3} parent=1 // pred_region
      %83 = dma.done [#allocation3], 256
    $region21: #{deep_graph_conv_layer.3} parent=1 // pred_fallthru
      _
    %84 = vsyncpa [#allocation3], 1

// kernel: deep_graph_conv_layer.2
$region0: #{deep_graph_conv_layer.2}
  #allocation0 [shape = 'u32[]', space=smem, size = 0x4, offset = 0x4, fixed_abs, tag = 'smem constant byte address 0x4 - core index']
  #allocation1 [shape = 'u32[144,128]{1,0:T(1,128)}', space=vmem, size = 0x12000, scoped, tag = 'internal scratch']
  %s0 = inlined_call_operand.hbm [shape: f32[4,8], index: 0, kind: input, shape index: {}]
  %s1 = inlined_call_operand.vmem [shape: f32[16,8], index: 1, kind: input, shape index: {}, may-alias: {1,2}]
  %s2 = inlined_call_operand.vmem [shape: f32[16,8], index: 2, kind: input, shape index: {}, may-alias: {1,2}]
  %s3 = inlined_call_operand.vmem [shape: f32[16,16], index: 3, kind: input, shape index: {}]
  %s4 = inlined_call_operand.vmem [shape: f32[8,32], index: 4, kind: input, shape index: {}]
  %s5 = inlined_call_operand.vmem [shape: f32[1,32], index: 5, kind: input, shape index: {}]
  %s6 = inlined_call_operand.vmem [shape: f32[8,32], index: 6, kind: input, shape index: {}]
  %s7 = inlined_call_operand.vmem [shape: f32[1,32], index: 7, kind: input, shape index: {}]
  %s8 = inlined_call_operand.vmem [shape: f32[8,32], index: 8, kind: input, shape index: {}]
  %s9 = inlined_call_operand.hbm [shape: f32[1,32], index: 9, kind: input, shape index: {}]
  %s10 = inlined_call_operand.vmem [shape: f32[16,32], index: 10, kind: output, shape index: {0}]
  %s11 = inlined_call_operand.hbm [shape: f32[4,16,16], index: 11, kind: output, shape index: {1}]
  %12 = xla_tuple %s10, %s11
  %s13 = sld [smem:[#allocation0]]
  $region66: #{deep_graph_conv_layer.2} parent=0
    _
  %s15 = ssub.s32 1, %s13
  %s16 = scalar_select 0, %s15, %s13
  $region1: #{deep_graph_conv_layer.2} parent=0
    #allocation2 [shape = 'u8[2048]{0}', space=smem, size = 0x800, scoped, tag = 'input window, operand 0, single buffered']
    #allocation3 [shape = 's32[1]{0}', space=sflag, size = 0x4, scoped, tag = 'scoped memory for deep_graph_conv_layer.2']
    #allocation4 [shape = 's32[1]{0}', space=sflag, size = 0x4, scoped, tag = 'scoped memory for deep_graph_conv_layer.2']
    #allocation5 [shape = 's32[1]{0}', space=sflag, size = 0x4, scoped, tag = 'scoped memory for deep_graph_conv_layer.2']
    #allocation6 [shape = 'u8[512]{0}', space=vmem, size = 0x400, scoped, tag = 'input window, operand 9, single buffered']
    #allocation7 [shape = 'u8[32768]{0}', space=vmem, size = 0x8000, scoped, tag = 'output window, operand 1, single buffered']
    %17 = vsyncpa [#allocation5], 0
    %18 = vsyncpa [#allocation3], 0
    %19 = vsyncpa [#allocation4], 0
    // Predicated region
    $region2: #{deep_graph_conv_layer.2} parent=1 // pred_check
      _
    $region3: #{deep_graph_conv_layer.2} parent=1 // pred_check_branch
      %21 = sbr.rel (0) target = $region5
    $region4: #{deep_graph_conv_layer.2} parent=1 // pred_region
      %s23 = ssub.s32 64, 64
      %24 = vsyncadd [#allocation5], %s23
      %27 = dma.hbm_to_smem %s0, 64, [#allocation2], [#allocation5]
    $region5: #{deep_graph_conv_layer.2} parent=1 // pred_fallthru
      _
    // Predicated region
    $region6: #{deep_graph_conv_layer.2} parent=1 // pred_check
      _
    $region7: #{deep_graph_conv_layer.2} parent=1 // pred_check_branch
      %29 = sbr.rel (0) target = $region9
    $region8: #{deep_graph_conv_layer.2} parent=1 // pred_region
      _
    $region9: #{deep_graph_conv_layer.2} parent=1 // pred_fallthru
      _
    // Predicated region
    $region10: #{deep_graph_conv_layer.2} parent=1 // pred_check
      _
    $region11: #{deep_graph_conv_layer.2} parent=1 // pred_check_branch
      %31 = sbr.rel (0) target = $region13
    $region12: #{deep_graph_conv_layer.2} parent=1 // pred_region
      _
    $region13: #{deep_graph_conv_layer.2} parent=1 // pred_fallthru
      _
    // Predicated region
    $region14: #{deep_graph_conv_layer.2} parent=1 // pred_check
      _
    $region15: #{deep_graph_conv_layer.2} parent=1 // pred_check_branch
      %33 = sbr.rel (0) target = $region17
    $region16: #{deep_graph_conv_layer.2} parent=1 // pred_region
      _
    $region17: #{deep_graph_conv_layer.2} parent=1 // pred_fallthru
      _
    // Predicated region
    $region18: #{deep_graph_conv_layer.2} parent=1 // pred_check
      _
    $region19: #{deep_graph_conv_layer.2} parent=1 // pred_check_branch
      %35 = sbr.rel (0) target = $region21
    $region20: #{deep_graph_conv_layer.2} parent=1 // pred_region
      _
    $region21: #{deep_graph_conv_layer.2} parent=1 // pred_fallthru
      _
    // Predicated region
    $region22: #{deep_graph_conv_layer.2} parent=1 // pred_check
      _
    $region23: #{deep_graph_conv_layer.2} parent=1 // pred_check_branch
      %37 = sbr.rel (0) target = $region25
    $region24: #{deep_graph_conv_layer.2} parent=1 // pred_region
      _
    $region25: #{deep_graph_conv_layer.2} parent=1 // pred_fallthru
      _
    // Predicated region
    $region26: #{deep_graph_conv_layer.2} parent=1 // pred_check
      _
    $region27: #{deep_graph_conv_layer.2} parent=1 // pred_check_branch
      %39 = sbr.rel (0) target = $region29
    $region28: #{deep_graph_conv_layer.2} parent=1 // pred_region
      _
    $region29: #{deep_graph_conv_layer.2} parent=1 // pred_fallthru
      _
    // Predicated region
    $region30: #{deep_graph_conv_layer.2} parent=1 // pred_check
      _
    $region31: #{deep_graph_conv_layer.2} parent=1 // pred_check_branch
      %41 = sbr.rel (0) target = $region33
    $region32: #{deep_graph_conv_layer.2} parent=1 // pred_region
      _
    $region33: #{deep_graph_conv_layer.2} parent=1 // pred_fallthru
      _
    // Predicated region
    $region34: #{deep_graph_conv_layer.2} parent=1 // pred_check
      _
    $region35: #{deep_graph_conv_layer.2} parent=1 // pred_check_branch
      %43 = sbr.rel (0) target = $region37
    $region36: #{deep_graph_conv_layer.2} parent=1 // pred_region
      _
    $region37: #{deep_graph_conv_layer.2} parent=1 // pred_fallthru
      _
    // Predicated region
    $region38: #{deep_graph_conv_layer.2} parent=1 // pred_check
      _
    $region39: #{deep_graph_conv_layer.2} parent=1 // pred_check_branch
      %45 = sbr.rel (0) target = $region41
    $region40: #{deep_graph_conv_layer.2} parent=1 // pred_region
      %s47 = ssub.s32 16, 16
      %48 = vsyncadd [#allocation3], %s47
      %s50 = sshll.u32 [#allocation6], 4
      %s51 = int_to_ptr.vmem [resolvable:$true] %s50
      %53 = dma.hbm_to_vmem [thread:$0]  %s9, 16, %s51, [#allocation3]
    $region41: #{deep_graph_conv_layer.2} parent=1 // pred_fallthru
      _
    // Predicated region
    $region42: #{deep_graph_conv_layer.2} parent=1 // pred_check
      _
    $region43: #{deep_graph_conv_layer.2} parent=1 // pred_check_branch
      %55 = sbr.rel (0) target = $region45
    $region44: #{deep_graph_conv_layer.2} parent=1 // pred_region
      %56 = dma.done [#allocation5], 64
    $region45: #{deep_graph_conv_layer.2} parent=1 // pred_fallthru
      _
    // Predicated region
    $region46: #{deep_graph_conv_layer.2} parent=1 // pred_check
      _
    $region47: #{deep_graph_conv_layer.2} parent=1 // pred_check_branch
      %58 = sbr.rel (0) target = $region49
    $region48: #{deep_graph_conv_layer.2} parent=1 // pred_region
      %59 = dma.done [#allocation3], 16
    $region49: #{deep_graph_conv_layer.2} parent=1 // pred_fallthru
      _
    %60 = sfence
    %v61 = vld [vmem:[%s1] sm:$0xff]
    %v62 = vld [vmem:[%s1 + $0x8] sm:$0xff]
    %v63 = vld [vmem:[%s2] sm:$0xff]
    %v64 = vld [vmem:[%s2 + $0x8] sm:$0xff]
    %v65 = vld [vmem:[%s3] sm:$0xff]
    %v66 = vld [vmem:[%s3 + $0x8] sm:$0xff]
    %v67 = vld [vmem:[%s4] sm:$0xff]
    %v68 = vld [vmem:[%s5] sm:$0x1]
    %v70 = vlaneseq
    %v71 = vshrl.u32 %v70, 7
    %v72 = vsub.s32 0, %v71
    %v73 = vrot.slane %v68, %v72
    %vm75 = vcmask 64512
    %v77 = vsel %vm75, %v61, 0
    %v80 = vsel %vm75, %v62, 0
    %82 = vmatprep.subr.mxu0 0.0
    %83 = vmatpush1.msra.mxu0 %v67
    %84 = vmatprep.subr.mxu0 0.0
    %85 = vmatpush1.msra.mxu0 0.0
    %86 = vmatprep.subr.mxu0 0.0
    %87 = vmatpush1.msra.mxu0 0.0
    %88 = vmatprep.subr.mxu0 0.0
    %89 = vmatpush1.msra.mxu0 0.0
    %90 = vmatprep.subr.mxu0 0.0
    %91 = vmatpush1.msra.mxu0 0.0
    %92 = vmatprep.subr.mxu0 0.0
    %93 = vmatpush1.msra.mxu0 0.0
    %94 = vmatprep.subr.mxu0 0.0
    %95 = vmatpush1.msra.mxu0 0.0
    %96 = vmatprep.subr.mxu0 0.0
    %97 = vmatpush1.msra.mxu0 0.0
    %98 = vmatprep.subr.mxu0 0.0
    %99 = vmatpush1.msra.mxu0 0.0
    %100 = vmatprep.subr.mxu0 0.0
    %101 = vmatpush1.msra.mxu0 0.0
    %102 = vmatprep.subr.mxu0 0.0
    %103 = vmatpush1.msra.mxu0 0.0
    %104 = vmatprep.subr.mxu0 0.0
    %105 = vmatpush1.msra.mxu0 0.0
    %106 = vmatprep.subr.mxu0 0.0
    %107 = vmatpush1.msra.mxu0 0.0
    %108 = vmatprep.subr.mxu0 0.0
    %109 = vmatpush1.msra.mxu0 0.0
    %110 = vmatprep.subr.mxu0 0.0
    %111 = vmatpush1.msra.mxu0 0.0
    %112 = vmatprep.subr.mxu0 0.0
    %113 = vmatpush1.msra.mxu0 0.0
    %114 = vmatprep.subr.mxu0 0.0
    %115 = vmatpush1.msra.mxu0 0.0
    %116 = vmatprep.subr.mxu0 0.0
    %117 = vmatpush1.msra.mxu0 0.0
    %118 = vmatprep.subr.mxu0 0.0
    %119 = vmatpush1.msra.mxu0 0.0
    %120 = vmatprep.subr.mxu0 0.0
    %121 = vmatpush1.msra.mxu0 0.0
    %122 = vmatprep.subr.mxu0 0.0
    %123 = vmatpush1.msra.mxu0 0.0
    %124 = vmatprep.subr.mxu0 0.0
    %125 = vmatpush1.msra.mxu0 0.0
    %126 = vmatprep.subr.mxu0 0.0
    %127 = vmatpush1.msra.mxu0 0.0
    %128 = vmatprep.subr.mxu0 0.0
    %129 = vmatpush1.msra.mxu0 0.0
    %130 = vmatprep.subr.mxu0 0.0
    %131 = vmatpush1.msra.mxu0 0.0
    %132 = vmatprep.subr.mxu0 0.0
    %133 = vmatpush1.msra.mxu0 0.0
    %134 = vmatprep.subr.mxu0 0.0
    %135 = vmatpush1.msra.mxu0 0.0
    %136 = vmatprep.subr.mxu0 0.0
    %137 = vmatpush1.msra.mxu0 0.0
    %138 = vmatprep.subr.mxu0 0.0
    %139 = vmatpush1.msra.mxu0 0.0
    %140 = vmatprep.subr.mxu0 0.0
    %141 = vmatpush1.msra.mxu0 0.0
    %142 = vmatprep.subr.mxu0 0.0
    %143 = vmatpush1.msra.mxu0 0.0
    %144 = vmatprep.subr.mxu0 0.0
    %145 = vmatpush1.msra.mxu0 0.0
    %146 = vmatprep.mubr.f32.mxu0 0.0
    %147 = vmatmul.mubr.f32.gmra.mrb[0].mxu0 %v77
    %v148 = vpop.f32.mrb[0].mxu0
    %v149 = vadd.f32 %v73, %v148
    %v150 = vpop.f32.mrb[0].mxu0
    %151 = vmatprep.mubr.f32.mxu0 0.0
    %152 = vmatmul.mubr.f32.gmra.mrb[0].mxu0 %v80
    %v153 = vpop.f32.mrb[0].mxu0
    %v154 = vadd.f32 %v73, %v153
    %v155 = vpop.f32.mrb[0].mxu0
    %156 = vdwg.mxu0
    %v157 = vld [vmem:[%s6] sm:$0xff]
    %v158 = vld [vmem:[%s7] sm:$0x1]
    %v160 = vlaneseq
    %v161 = vshrl.u32 %v160, 7
    %v162 = vsub.s32 0, %v161
    %v163 = vrot.slane %v158, %v162
    %v166 = vsel %vm75, %v63, 0
    %v169 = vsel %vm75, %v64, 0
    %171 = vmatprep.subr.mxu0 0.0
    %172 = vmatpush1.msra.mxu0 %v157
    %173 = vmatprep.subr.mxu0 0.0
    %174 = vmatpush1.msra.mxu0 0.0
    %175 = vmatprep.subr.mxu0 0.0
    %176 = vmatpush1.msra.mxu0 0.0
    %177 = vmatprep.subr.mxu0 0.0
    %178 = vmatpush1.msra.mxu0 0.0
    %179 = vmatprep.subr.mxu0 0.0
    %180 = vmatpush1.msra.mxu0 0.0
    %181 = vmatprep.subr.mxu0 0.0
    %182 = vmatpush1.msra.mxu0 0.0
    %183 = vmatprep.subr.mxu0 0.0
    %184 = vmatpush1.msra.mxu0 0.0
    %185 = vmatprep.subr.mxu0 0.0
    %186 = vmatpush1.msra.mxu0 0.0
    %187 = vmatprep.subr.mxu0 0.0
    %188 = vmatpush1.msra.mxu0 0.0
    %189 = vmatprep.subr.mxu0 0.0
    %190 = vmatpush1.msra.mxu0 0.0
    %191 = vmatprep.subr.mxu0 0.0
    %192 = vmatpush1.msra.mxu0 0.0
    %193 = vmatprep.subr.mxu0 0.0
    %194 = vmatpush1.msra.mxu0 0.0
    %195 = vmatprep.subr.mxu0 0.0
    %196 = vmatpush1.msra.mxu0 0.0
    %197 = vmatprep.subr.mxu0 0.0
    %198 = vmatpush1.msra.mxu0 0.0
    %199 = vmatprep.subr.mxu0 0.0
    %200 = vmatpush1.msra.mxu0 0.0
    %201 = vmatprep.subr.mxu0 0.0
    %202 = vmatpush1.msra.mxu0 0.0
    %203 = vmatprep.subr.mxu0 0.0
    %204 = vmatpush1.msra.mxu0 0.0
    %205 = vmatprep.subr.mxu0 0.0
    %206 = vmatpush1.msra.mxu0 0.0
    %207 = vmatprep.subr.mxu0 0.0
    %208 = vmatpush1.msra.mxu0 0.0
    %209 = vmatprep.subr.mxu0 0.0
    %210 = vmatpush1.msra.mxu0 0.0
    %211 = vmatprep.subr.mxu0 0.0
    %212 = vmatpush1.msra.mxu0 0.0
    %213 = vmatprep.subr.mxu0 0.0
    %214 = vmatpush1.msra.mxu0 0.0
    %215 = vmatprep.subr.mxu0 0.0
    %216 = vmatpush1.msra.mxu0 0.0
    %217 = vmatprep.subr.mxu0 0.0
    %218 = vmatpush1.msra.mxu0 0.0
    %219 = vmatprep.subr.mxu0 0.0
    %220 = vmatpush1.msra.mxu0 0.0
    %221 = vmatprep.subr.mxu0 0.0
    %222 = vmatpush1.msra.mxu0 0.0
    %223 = vmatprep.subr.mxu0 0.0
    %224 = vmatpush1.msra.mxu0 0.0
    %225 = vmatprep.subr.mxu0 0.0
    %226 = vmatpush1.msra.mxu0 0.0
    %227 = vmatprep.subr.mxu0 0.0
    %228 = vmatpush1.msra.mxu0 0.0
    %229 = vmatprep.subr.mxu0 0.0
    %230 = vmatpush1.msra.mxu0 0.0
    %231 = vmatprep.subr.mxu0 0.0
    %232 = vmatpush1.msra.mxu0 0.0
    %233 = vmatprep.subr.mxu0 0.0
    %234 = vmatpush1.msra.mxu0 0.0
    %235 = vmatprep.mubr.f32.mxu0 0.0
    %236 = vmatmul.mubr.f32.gmra.mrb[0].mxu0 %v166
    %v237 = vpop.f32.mrb[0].mxu0
    %v238 = vadd.f32 %v163, %v237
    %v239 = vpop.f32.mrb[0].mxu0
    %240 = vmatprep.mubr.f32.mxu0 0.0
    %241 = vmatmul.mubr.f32.gmra.mrb[0].mxu0 %v169
    %v242 = vpop.f32.mrb[0].mxu0
    %v243 = vadd.f32 %v163, %v242
    %v244 = vpop.f32.mrb[0].mxu0
    %245 = vdwg.mxu0
    %v246 = vld [vmem:[%s8] sm:$0xff]
    %v247 = vld [vmem:[#allocation6] sm:$0x1]
    %v249 = vlaneseq
    %v250 = vshrl.u32 %v249, 7
    %v251 = vsub.s32 0, %v250
    %v252 = vrot.slane %v247, %v251
    %254 = vmatprep.subr.mxu0 0.0
    %255 = vmatpush1.msra.mxu0 %v246
    %256 = vmatprep.subr.mxu0 0.0
    %257 = vmatpush1.msra.mxu0 0.0
    %258 = vmatprep.subr.mxu0 0.0
    %259 = vmatpush1.msra.mxu0 0.0
    %260 = vmatprep.subr.mxu0 0.0
    %261 = vmatpush1.msra.mxu0 0.0
    %262 = vmatprep.subr.mxu0 0.0
    %263 = vmatpush1.msra.mxu0 0.0
    %264 = vmatprep.subr.mxu0 0.0
    %265 = vmatpush1.msra.mxu0 0.0
    %266 = vmatprep.subr.mxu0 0.0
    %267 = vmatpush1.msra.mxu0 0.0
    %268 = vmatprep.subr.mxu0 0.0
    %269 = vmatpush1.msra.mxu0 0.0
    %270 = vmatprep.subr.mxu0 0.0
    %271 = vmatpush1.msra.mxu0 0.0
    %272 = vmatprep.subr.mxu0 0.0
    %273 = vmatpush1.msra.mxu0 0.0
    %274 = vmatprep.subr.mxu0 0.0
    %275 = vmatpush1.msra.mxu0 0.0
    %276 = vmatprep.subr.mxu0 0.0
    %277 = vmatpush1.msra.mxu0 0.0
    %278 = vmatprep.subr.mxu0 0.0
    %279 = vmatpush1.msra.mxu0 0.0
    %280 = vmatprep.subr.mxu0 0.0
    %281 = vmatpush1.msra.mxu0 0.0
    %282 = vmatprep.subr.mxu0 0.0
    %283 = vmatpush1.msra.mxu0 0.0
    %284 = vmatprep.subr.mxu0 0.0
    %285 = vmatpush1.msra.mxu0 0.0
    %286 = vmatprep.subr.mxu0 0.0
    %287 = vmatpush1.msra.mxu0 0.0
    %288 = vmatprep.subr.mxu0 0.0
    %289 = vmatpush1.msra.mxu0 0.0
    %290 = vmatprep.subr.mxu0 0.0
    %291 = vmatpush1.msra.mxu0 0.0
    %292 = vmatprep.subr.mxu0 0.0
    %293 = vmatpush1.msra.mxu0 0.0
    %294 = vmatprep.subr.mxu0 0.0
    %295 = vmatpush1.msra.mxu0 0.0
    %296 = vmatprep.subr.mxu0 0.0
    %297 = vmatpush1.msra.mxu0 0.0
    %298 = vmatprep.subr.mxu0 0.0
    %299 = vmatpush1.msra.mxu0 0.0
    %300 = vmatprep.subr.mxu0 0.0
    %301 = vmatpush1.msra.mxu0 0.0
    %302 = vmatprep.subr.mxu0 0.0
    %303 = vmatpush1.msra.mxu0 0.0
    %304 = vmatprep.subr.mxu0 0.0
    %305 = vmatpush1.msra.mxu0 0.0
    %306 = vmatprep.subr.mxu0 0.0
    %307 = vmatpush1.msra.mxu0 0.0
    %308 = vmatprep.subr.mxu0 0.0
    %309 = vmatpush1.msra.mxu0 0.0
    %310 = vmatprep.subr.mxu0 0.0
    %311 = vmatpush1.msra.mxu0 0.0
    %312 = vmatprep.subr.mxu0 0.0
    %313 = vmatpush1.msra.mxu0 0.0
    %314 = vmatprep.subr.mxu0 0.0
    %315 = vmatpush1.msra.mxu0 0.0
    %316 = vmatprep.subr.mxu0 0.0
    %317 = vmatpush1.msra.mxu0 0.0
    %318 = vmatprep.mubr.f32.mxu0 0.0
    %319 = vmatmul.mubr.f32.gmra.mrb[0].mxu0 %v166
    %v320 = vpop.f32.mrb[0].mxu0
    %v321 = vadd.f32 %v252, %v320
    %v322 = vpop.f32.mrb[0].mxu0
    %323 = vmatprep.mubr.f32.mxu0 0.0
    %324 = vmatmul.mubr.f32.gmra.mrb[0].mxu0 %v169
    %v325 = vpop.f32.mrb[0].mxu0
    %v326 = vadd.f32 %v252, %v325
    %v327 = vpop.f32.mrb[0].mxu0
    %328 = vdwg.mxu0
    %329 = vxpose.xlu0.b32.start [1/16] %v149, 128
    %330 = vxpose.xlu0.b32.cont [2/16] %v154, 128
    %331 = vxpose.xlu0.b32.cont [3/16] 0.0, 128
    %332 = vxpose.xlu0.b32.cont [4/16] 0.0, 128
    %333 = vxpose.xlu0.b32.cont [5/16] 0.0, 128
    %334 = vxpose.xlu0.b32.cont [6/16] 0.0, 128
    %335 = vxpose.xlu0.b32.cont [7/16] 0.0, 128
    %336 = vxpose.xlu0.b32.cont [8/16] 0.0, 128
    %337 = vxpose.xlu0.b32.cont [9/16] 0.0, 128
    %338 = vxpose.xlu0.b32.cont [10/16] 0.0, 128
    %339 = vxpose.xlu0.b32.cont [11/16] 0.0, 128
    %340 = vxpose.xlu0.b32.cont [12/16] 0.0, 128
    %341 = vxpose.xlu0.b32.cont [13/16] 0.0, 128
    %342 = vxpose.xlu0.b32.cont [14/16] 0.0, 128
    %343 = vxpose.xlu0.b32.cont [15/16] 0.0, 128
    %344 = vxpose.xlu0.b32.end [16/16] 0.0, 128
    %v345 = vpop.trf.xlu0
    %v346 = vpop.trf.xlu0
    %v347 = vpop.trf.xlu0
    %v348 = vpop.trf.xlu0
    %v349 = vpop.trf.xlu0
    %v350 = vpop.trf.xlu0
    %v351 = vpop.trf.xlu0
    %v352 = vpop.trf.xlu0
    %v353 = vpop.trf.xlu0
    %v354 = vpop.trf.xlu0
    %v355 = vpop.trf.xlu0
    %v356 = vpop.trf.xlu0
    %v357 = vpop.trf.xlu0
    %v358 = vpop.trf.xlu0
    %v359 = vpop.trf.xlu0
    %v360 = vpop.trf.xlu0
    %vm361 = vcmp.gt.f32.partialorder %v65, 0.0
    %vm362 = vcmp.gt.f32.partialorder %v66, 0.0
    %v363 = vsel %vm361, 0.0, -1e+30
    %v364 = vsel %vm362, 0.0, -1e+30
    %s365 = sld [smem:[#allocation2]]
    %367 = vset.pattern.permute.xlu0 0
    %368 = vperm.xlu0 %367, %v238
    %v369 = vpop.permute.xlu0 %368
    %372 = vset.pattern.permute.xlu0 0
    %373 = vperm.xlu0 %372, %v243
    %v374 = vpop.permute.xlu0 %373
    %v376 = vlaneseq
    %v377 = vshrl.u32 %v376, 7
    %v378 = vsub.s32 0, %v377
    %v379 = vrot.slane %v345, %v378
    %v380 = vadd.f32 %v369, %v379
    %v381 = vadd.f32 %v374, %v379
    %s382 = smul.f32 %s365, 0.4
    %v383 = vand.u32 2147483647, %v380
    %v384 = vand.u32 2147483647, %v381
    %v385 = vstv %s382
    %v386 = vmul.f32 %v385, %v383
    %v387 = vmul.f32 %v385, %v384
    %v388 = vadd.f32 %v386, 0.0
    %v389 = vadd.f32 %v387, 0.0
    %v390 = vstv %s365
    %v391 = vmul.f32 %v390, %v238
    %v392 = vmul.f32 %v390, %v243
    %v393 = vadd.f32 %v391, 0.0
    %v394 = vadd.f32 %v392, 0.0
    %v395 = vmul.f32 %v390, %v345
    %v396 = vadd.f32 %v395, 0.0
    %s397 = sld [smem:[#allocation2 + $0x1]]
    %398 = vset.pattern.permute.xlu0 1
    %399 = vperm.xlu0 %398, %v238
    %v400 = vpop.permute.xlu0 %399
    %402 = vset.pattern.permute.xlu0 1
    %403 = vperm.xlu0 %402, %v243
    %v404 = vpop.permute.xlu0 %403
    %v406 = vlaneseq
    %v407 = vshrl.u32 %v406, 7
    %v408 = vsub.s32 1, %v407
    %v409 = vrot.slane %v345, %v408
    %v410 = vadd.f32 %v400, %v409
    %v411 = vadd.f32 %v404, %v409
    %s412 = smul.f32 %s397, 0.4
    %v413 = vand.u32 2147483647, %v410
    %v414 = vand.u32 2147483647, %v411
    %v415 = vstv %s412
    %v416 = vmul.f32 %v415, %v413
    %v417 = vmul.f32 %v415, %v414
    %v418 = vadd.f32 %v388, %v416
    %v419 = vadd.f32 %v389, %v417
    %v420 = vstv %s397
    %v421 = vmul.f32 %v420, %v238
    %v422 = vmul.f32 %v420, %v243
    %425 = vrot.lane.b32.xlu0 %v421, 127
    %v426 = vpop.permute.xlu0 %425
    %427 = vrot.lane.b32.xlu0 %v422, 127
    %v428 = vpop.permute.xlu0 %427
    %v431 = vadd.f32 %v393, %v426
    %v432 = vadd.f32 %v394, %v428
    %v433 = vmul.f32 %v420, %v345
    %v435 = vrot.slane %v433, 1
    %v437 = vadd.f32 %v396, %v435
    %s438 = sld [smem:[#allocation2 + $0x2]]
    %439 = vset.pattern.permute.xlu0 2
    %440 = vperm.xlu0 %439, %v238
    %v441 = vpop.permute.xlu0 %440
    %443 = vset.pattern.permute.xlu0 2
    %444 = vperm.xlu0 %443, %v243
    %v445 = vpop.permute.xlu0 %444
    %v447 = vlaneseq
    %v448 = vshrl.u32 %v447, 7
    %v449 = vsub.s32 2, %v448
    %v450 = vrot.slane %v345, %v449
    %v451 = vadd.f32 %v441, %v450
    %v452 = vadd.f32 %v445, %v450
    %s453 = smul.f32 %s438, 0.4
    %v454 = vand.u32 2147483647, %v451
    %v455 = vand.u32 2147483647, %v452
    %v456 = vstv %s453
    %v457 = vmul.f32 %v456, %v454
    %v458 = vmul.f32 %v456, %v455
    %v459 = vadd.f32 %v418, %v457
    %v460 = vadd.f32 %v419, %v458
    %v461 = vstv %s438
    %v462 = vmul.f32 %v461, %v238
    %v463 = vmul.f32 %v461, %v243
    %466 = vrot.lane.b32.xlu0 %v462, 126
    %v467 = vpop.permute.xlu0 %466
    %468 = vrot.lane.b32.xlu0 %v463, 126
    %v469 = vpop.permute.xlu0 %468
    %v472 = vadd.f32 %v431, %v467
    %v473 = vadd.f32 %v432, %v469
    %v474 = vmul.f32 %v461, %v345
    %v476 = vrot.slane %v474, 2
    %v478 = vadd.f32 %v437, %v476
    %s479 = sld [smem:[#allocation2 + $0x3]]
    %480 = vset.pattern.permute.xlu0 3
    %481 = vperm.xlu0 %480, %v238
    %v482 = vpop.permute.xlu0 %481
    %484 = vset.pattern.permute.xlu0 3
    %485 = vperm.xlu0 %484, %v243
    %v486 = vpop.permute.xlu0 %485
    %v488 = vlaneseq
    %v489 = vshrl.u32 %v488, 7
    %v490 = vsub.s32 3, %v489
    %v491 = vrot.slane %v345, %v490
    %v492 = vadd.f32 %v482, %v491
    %v493 = vadd.f32 %v486, %v491
    %s494 = smul.f32 %s479, 0.4
    %v495 = vand.u32 2147483647, %v492
    %v496 = vand.u32 2147483647, %v493
    %v497 = vstv %s494
    %v498 = vmul.f32 %v497, %v495
    %v499 = vmul.f32 %v497, %v496
    %v500 = vadd.f32 %v459, %v498
    %v501 = vadd.f32 %v460, %v499
    %v502 = vstv %s479
    %v503 = vmul.f32 %v502, %v238
    %v504 = vmul.f32 %v502, %v243
    %507 = vrot.lane.b32.xlu0 %v503, 125
    %v508 = vpop.permute.xlu0 %507
    %509 = vrot.lane.b32.xlu0 %v504, 125
    %v510 = vpop.permute.xlu0 %509
    %v513 = vadd.f32 %v472, %v508
    %v514 = vadd.f32 %v473, %v510
    %v515 = vmul.f32 %v502, %v345
    %v517 = vrot.slane %v515, 3
    %v519 = vadd.f32 %v478, %v517
    %s520 = sld [smem:[#allocation2 + $0x4]]
    %521 = vset.pattern.permute.xlu0 4
    %522 = vperm.xlu0 %521, %v238
    %v523 = vpop.permute.xlu0 %522
    %525 = vset.pattern.permute.xlu0 4
    %526 = vperm.xlu0 %525, %v243
    %v527 = vpop.permute.xlu0 %526
    %v529 = vlaneseq
    %v530 = vshrl.u32 %v529, 7
    %v531 = vsub.s32 4, %v530
    %v532 = vrot.slane %v345, %v531
    %v533 = vadd.f32 %v523, %v532
    %v534 = vadd.f32 %v527, %v532
    %s535 = smul.f32 %s520, 0.4
    %v536 = vand.u32 2147483647, %v533
    %v537 = vand.u32 2147483647, %v534
    %v538 = vstv %s535
    %v539 = vmul.f32 %v538, %v536
    %v540 = vmul.f32 %v538, %v537
    %v541 = vadd.f32 %v500, %v539
    %v542 = vadd.f32 %v501, %v540
    %v543 = vstv %s520
    %v544 = vmul.f32 %v543, %v238
    %v545 = vmul.f32 %v543, %v243
    %548 = vrot.lane.b32.xlu0 %v544, 124
    %v549 = vpop.permute.xlu0 %548
    %550 = vrot.lane.b32.xlu0 %v545, 124
    %v551 = vpop.permute.xlu0 %550
    %v554 = vadd.f32 %v513, %v549
    %v555 = vadd.f32 %v514, %v551
    %v556 = vmul.f32 %v543, %v345
    %v558 = vrot.slane %v556, 4
    %v560 = vadd.f32 %v519, %v558
    %s561 = sld [smem:[#allocation2 + $0x5]]
    %562 = vset.pattern.permute.xlu0 5
    %563 = vperm.xlu0 %562, %v238
    %v564 = vpop.permute.xlu0 %563
    %566 = vset.pattern.permute.xlu0 5
    %567 = vperm.xlu0 %566, %v243
    %v568 = vpop.permute.xlu0 %567
    %v570 = vlaneseq
    %v571 = vshrl.u32 %v570, 7
    %v572 = vsub.s32 5, %v571
    %v573 = vrot.slane %v345, %v572
    %v574 = vadd.f32 %v564, %v573
    %v575 = vadd.f32 %v568, %v573
    %s576 = smul.f32 %s561, 0.4
    %v577 = vand.u32 2147483647, %v574
    %v578 = vand.u32 2147483647, %v575
    %v579 = vstv %s576
    %v580 = vmul.f32 %v579, %v577
    %v581 = vmul.f32 %v579, %v578
    %v582 = vadd.f32 %v541, %v580
    %v583 = vadd.f32 %v542, %v581
    %v584 = vstv %s561
    %v585 = vmul.f32 %v584, %v238
    %v586 = vmul.f32 %v584, %v243
    %589 = vrot.lane.b32.xlu0 %v585, 123
    %v590 = vpop.permute.xlu0 %589
    %591 = vrot.lane.b32.xlu0 %v586, 123
    %v592 = vpop.permute.xlu0 %591
    %v595 = vadd.f32 %v554, %v590
    %v596 = vadd.f32 %v555, %v592
    %v597 = vmul.f32 %v584, %v345
    %v599 = vrot.slane %v597, 5
    %v601 = vadd.f32 %v560, %v599
    %s602 = sld [smem:[#allocation2 + $0x6]]
    %603 = vset.pattern.permute.xlu0 6
    %604 = vperm.xlu0 %603, %v238
    %v605 = vpop.permute.xlu0 %604
    %607 = vset.pattern.permute.xlu0 6
    %608 = vperm.xlu0 %607, %v243
    %v609 = vpop.permute.xlu0 %608
    %v611 = vlaneseq
    %v612 = vshrl.u32 %v611, 7
    %v613 = vsub.s32 6, %v612
    %v614 = vrot.slane %v345, %v613
    %v615 = vadd.f32 %v605, %v614
    %v616 = vadd.f32 %v609, %v614
    %s617 = smul.f32 %s602, 0.4
    %v618 = vand.u32 2147483647, %v615
    %v619 = vand.u32 2147483647, %v616
    %v620 = vstv %s617
    %v621 = vmul.f32 %v620, %v618
    %v622 = vmul.f32 %v620, %v619
    %v623 = vadd.f32 %v582, %v621
    %v624 = vadd.f32 %v583, %v622
    %v625 = vstv %s602
    %v626 = vmul.f32 %v625, %v238
    %v627 = vmul.f32 %v625, %v243
    %630 = vrot.lane.b32.xlu0 %v626, 122
    %v631 = vpop.permute.xlu0 %630
    %632 = vrot.lane.b32.xlu0 %v627, 122
    %v633 = vpop.permute.xlu0 %632
    %v636 = vadd.f32 %v595, %v631
    %v637 = vadd.f32 %v596, %v633
    %v638 = vmul.f32 %v625, %v345
    %v640 = vrot.slane %v638, 6
    %v642 = vadd.f32 %v601, %v640
    %s643 = sld [smem:[#allocation2 + $0x7]]
    %644 = vset.pattern.permute.xlu0 7
    %645 = vperm.xlu0 %644, %v238
    %v646 = vpop.permute.xlu0 %645
    %648 = vset.pattern.permute.xlu0 7
    %649 = vperm.xlu0 %648, %v243
    %v650 = vpop.permute.xlu0 %649
    %v652 = vlaneseq
    %v653 = vshrl.u32 %v652, 7
    %v654 = vsub.s32 7, %v653
    %v655 = vrot.slane %v345, %v654
    %v656 = vadd.f32 %v646, %v655
    %v657 = vadd.f32 %v650, %v655
    %s658 = smul.f32 %s643, 0.4
    %v659 = vand.u32 2147483647, %v656
    %v660 = vand.u32 2147483647, %v657
    %v661 = vstv %s658
    %v662 = vmul.f32 %v661, %v659
    %v663 = vmul.f32 %v661, %v660
    %v664 = vadd.f32 %v623, %v662
    %v665 = vadd.f32 %v624, %v663
    %v666 = vstv %s643
    %v667 = vmul.f32 %v666, %v238
    %v668 = vmul.f32 %v666, %v243
    %671 = vrot.lane.b32.xlu0 %v667, 121
    %v672 = vpop.permute.xlu0 %671
    %673 = vrot.lane.b32.xlu0 %v668, 121
    %v674 = vpop.permute.xlu0 %673
    %v677 = vadd.f32 %v636, %v672
    %v678 = vadd.f32 %v637, %v674
    %v679 = vmul.f32 %v666, %v345
    %v681 = vrot.slane %v679, 7
    %v683 = vadd.f32 %v642, %v681
    %685 = vset.pattern.permute.xlu0 0
    %686 = vperm.xlu0 %685, %v677
    %v687 = vpop.permute.xlu0 %686
    %690 = vset.pattern.permute.xlu0 0
    %691 = vperm.xlu0 %690, %v678
    %v692 = vpop.permute.xlu0 %691
    %v694 = vlaneseq
    %v695 = vshrl.u32 %v694, 7
    %v696 = vsub.s32 0, %v695
    %v697 = vrot.slane %v683, %v696
    %v698 = vadd.f32 %v687, %v697
    %v699 = vadd.f32 %v692, %v697
    %v700 = vmul.f32 %v698, 0.6
    %v701 = vmul.f32 %v699, 0.6
    %v702 = vadd.f32 %v700, %v664
    %v703 = vadd.f32 %v701, %v665
    %v704 = vadd.f32 %v702, %v363
    %v705 = vadd.f32 %v703, %v364
    %vm706 = vcmask 130048
    %v707 = vsel %vm706, %v704, -inf
    %708 = vmax.xlane.f32.xlu0 %v707
    %v709 = vpop.xlane.xlu0 %708
    %v710 = vsel %vm706, %v705, -inf
    %711 = vmax.xlane.f32.xlu0 %v710
    %v712 = vpop.xlane.xlu0 %711
    %v713 = vsub.f32 %v704, %v709
    %v714 = vsub.f32 %v705, %v712
    %v715 = vmul.f32 %v713, 1.442695
    %v716 = vpow.pop %v715
    %v717 = vmul.f32 %v714, 1.442695
    %v718 = vpow.pop %v717
    %v719 = vsel %vm361, %v716, 0.0
    %v720 = vsel %vm362, %v718, 0.0
    %v721 = vsel %vm706, %v719, 0.0
    %722 = vadd.xlane.f32.xlu0 %v721
    %v723 = vpop.xlane.xlu0 %722
    %v724 = vsel %vm706, %v720, 0.0
    %725 = vadd.xlane.f32.xlu0 %v724
    %v726 = vpop.xlane.xlu0 %725
    %vm727 = vcmp.eq.f32.partialorder %v723, 0.0
    %vm728 = vcmp.eq.f32.partialorder %v726, 0.0
    %v729 = vsel %vm727, 1.0, %v723
    %v730 = vsel %vm728, 1.0, %v726
    %v731 = vrcp.pop %v729
    %v732 = vrcp.pop %v730
    %v733 = vmul.f32 %v729, %v731
    %v734 = vmul.f32 %v730, %v732
    %v735 = vsub.f32 2.0, %v733
    %v736 = vsub.f32 2.0, %v734
    %v737 = vmul.f32 %v731, %v735
    %v738 = vmul.f32 %v732, %v736
    %v739 = vmul.f32 %v719, %v737
    %v740 = vmul.f32 %v720, %v738
    %v742 = vsel %vm706, %v739, 0
    %v745 = vsel %vm706, %v740, 0
    %747 = vmatprep.subr.mxu0 0.0
    %748 = vmatpush1.msra.mxu0 %v149
    %749 = vmatprep.subr.mxu0 0.0
    %750 = vmatpush1.msra.mxu0 %v154
    %751 = vmatprep.subr.mxu0 0.0
    %752 = vmatpush1.msra.mxu0 0.0
    %753 = vmatprep.subr.mxu0 0.0
    %754 = vmatpush1.msra.mxu0 0.0
    %755 = vmatprep.subr.mxu0 0.0
    %756 = vmatpush1.msra.mxu0 0.0
    %757 = vmatprep.subr.mxu0 0.0
    %758 = vmatpush1.msra.mxu0 0.0
    %759 = vmatprep.subr.mxu0 0.0
    %760 = vmatpush1.msra.mxu0 0.0
    %761 = vmatprep.subr.mxu0 0.0
    %762 = vmatpush1.msra.mxu0 0.0
    %763 = vmatprep.subr.mxu0 0.0
    %764 = vmatpush1.msra.mxu0 0.0
    %765 = vmatprep.subr.mxu0 0.0
    %766 = vmatpush1.msra.mxu0 0.0
    %767 = vmatprep.subr.mxu0 0.0
    %768 = vmatpush1.msra.mxu0 0.0
    %769 = vmatprep.subr.mxu0 0.0
    %770 = vmatpush1.msra.mxu0 0.0
    %771 = vmatprep.subr.mxu0 0.0
    %772 = vmatpush1.msra.mxu0 0.0
    %773 = vmatprep.subr.mxu0 0.0
    %774 = vmatpush1.msra.mxu0 0.0
    %775 = vmatprep.subr.mxu0 0.0
    %776 = vmatpush1.msra.mxu0 0.0
    %777 = vmatprep.subr.mxu0 0.0
    %778 = vmatpush1.msra.mxu0 0.0
    %779 = vmatprep.subr.mxu0 0.0
    %780 = vmatpush1.msra.mxu0 0.0
    %781 = vmatprep.subr.mxu0 0.0
    %782 = vmatpush1.msra.mxu0 0.0
    %783 = vmatprep.subr.mxu0 0.0
    %784 = vmatpush1.msra.mxu0 0.0
    %785 = vmatprep.subr.mxu0 0.0
    %786 = vmatpush1.msra.mxu0 0.0
    %787 = vmatprep.subr.mxu0 0.0
    %788 = vmatpush1.msra.mxu0 0.0
    %789 = vmatprep.subr.mxu0 0.0
    %790 = vmatpush1.msra.mxu0 0.0
    %791 = vmatprep.subr.mxu0 0.0
    %792 = vmatpush1.msra.mxu0 0.0
    %793 = vmatprep.subr.mxu0 0.0
    %794 = vmatpush1.msra.mxu0 0.0
    %795 = vmatprep.subr.mxu0 0.0
    %796 = vmatpush1.msra.mxu0 0.0
    %797 = vmatprep.subr.mxu0 0.0
    %798 = vmatpush1.msra.mxu0 0.0
    %799 = vmatprep.subr.mxu0 0.0
    %800 = vmatpush1.msra.mxu0 0.0
    %801 = vmatprep.subr.mxu0 0.0
    %802 = vmatpush1.msra.mxu0 0.0
    %803 = vmatprep.subr.mxu0 0.0
    %804 = vmatpush1.msra.mxu0 0.0
    %805 = vmatprep.subr.mxu0 0.0
    %806 = vmatpush1.msra.mxu0 0.0
    %807 = vmatprep.subr.mxu0 0.0
    %808 = vmatpush1.msra.mxu0 0.0
    %809 = vmatprep.subr.mxu0 0.0
    %810 = vmatpush1.msra.mxu0 0.0
    %811 = vmatprep.mubr.f32.mxu0 0.0
    %812 = vmatmul.mubr.f32.gmra.mrb[0].mxu0 %v742
    %v813 = vpop.f32.mrb[0].mxu0
    %v814 = vadd.f32 %v321, %v813
    %v815 = vpop.f32.mrb[0].mxu0
    %816 = vmatprep.mubr.f32.mxu0 0.0
    %817 = vmatmul.mubr.f32.gmra.mrb[0].mxu0 %v745
    %v818 = vpop.f32.mrb[0].mxu0
    %v819 = vadd.f32 %v326, %v818
    %v820 = vpop.f32.mrb[0].mxu0
    %821 = vdwg.mxu0
    %822 = vst.msk [vmem:[%s10] sm:$0xff] %vm75, %v814
    %823 = vst.msk [vmem:[%s10 + $0x8] sm:$0xff] %vm75, %v819
    %824 = vst.msk [vmem:[#allocation7] sm:$0xff] %vm706, %v739
    %825 = vst.msk [vmem:[#allocation7 + $0x8] sm:$0xff] %vm706, %v740
    %s826 = sld [smem:[#allocation2 + $0x80]]
    %827 = vset.pattern.permute.xlu0 8
    %828 = vperm.xlu0 %827, %v238
    %v829 = vpop.permute.xlu0 %828
    %831 = vset.pattern.permute.xlu0 8
    %832 = vperm.xlu0 %831, %v243
    %v833 = vpop.permute.xlu0 %832
    %v835 = vlaneseq
    %v836 = vshrl.u32 %v835, 7
    %v837 = vsub.s32 0, %v836
    %v838 = vrot.slane %v346, %v837
    %v839 = vadd.f32 %v829, %v838
    %v840 = vadd.f32 %v833, %v838
    %s841 = smul.f32 %s826, 0.4
    %v842 = vand.u32 2147483647, %v839
    %v843 = vand.u32 2147483647, %v840
    %v844 = vstv %s841
    %v845 = vmul.f32 %v844, %v842
    %v846 = vmul.f32 %v844, %v843
    %v847 = vadd.f32 %v845, 0.0
    %v848 = vadd.f32 %v846, 0.0
    %v849 = vstv %s826
    %v850 = vmul.f32 %v849, %v238
    %v851 = vmul.f32 %v849, %v243
    %v852 = vadd.f32 %v850, 0.0
    %v853 = vadd.f32 %v851, 0.0
    %v854 = vmul.f32 %v849, %v346
    %v855 = vadd.f32 %v854, 0.0
    %s856 = sld [smem:[#allocation2 + $0x81]]
    %857 = vset.pattern.permute.xlu0 9
    %858 = vperm.xlu0 %857, %v238
    %v859 = vpop.permute.xlu0 %858
    %861 = vset.pattern.permute.xlu0 9
    %862 = vperm.xlu0 %861, %v243
    %v863 = vpop.permute.xlu0 %862
    %v865 = vlaneseq
    %v866 = vshrl.u32 %v865, 7
    %v867 = vsub.s32 1, %v866
    %v868 = vrot.slane %v346, %v867
    %v869 = vadd.f32 %v859, %v868
    %v870 = vadd.f32 %v863, %v868
    %s871 = smul.f32 %s856, 0.4
    %v872 = vand.u32 2147483647, %v869
    %v873 = vand.u32 2147483647, %v870
    %v874 = vstv %s871
    %v875 = vmul.f32 %v874, %v872
    %v876 = vmul.f32 %v874, %v873
    %v877 = vadd.f32 %v847, %v875
    %v878 = vadd.f32 %v848, %v876
    %v879 = vstv %s856
    %v880 = vmul.f32 %v879, %v238
    %v881 = vmul.f32 %v879, %v243
    %884 = vrot.lane.b32.xlu0 %v880, 127
    %v885 = vpop.permute.xlu0 %884
    %886 = vrot.lane.b32.xlu0 %v881, 127
    %v887 = vpop.permute.xlu0 %886
    %v890 = vadd.f32 %v852, %v885
    %v891 = vadd.f32 %v853, %v887
    %v892 = vmul.f32 %v879, %v346
    %v894 = vrot.slane %v892, 1
    %v896 = vadd.f32 %v855, %v894
    %s897 = sld [smem:[#allocation2 + $0x82]]
    %898 = vset.pattern.permute.xlu0 10
    %899 = vperm.xlu0 %898, %v238
    %v900 = vpop.permute.xlu0 %899
    %902 = vset.pattern.permute.xlu0 10
    %903 = vperm.xlu0 %902, %v243
    %v904 = vpop.permute.xlu0 %903
    %v906 = vlaneseq
    %v907 = vshrl.u32 %v906, 7
    %v908 = vsub.s32 2, %v907
    %v909 = vrot.slane %v346, %v908
    %v910 = vadd.f32 %v900, %v909
    %v911 = vadd.f32 %v904, %v909
    %s912 = smul.f32 %s897, 0.4
    %v913 = vand.u32 2147483647, %v910
    %v914 = vand.u32 2147483647, %v911
    %v915 = vstv %s912
    %v916 = vmul.f32 %v915, %v913
    %v917 = vmul.f32 %v915, %v914
    %v918 = vadd.f32 %v877, %v916
    %v919 = vadd.f32 %v878, %v917
    %v920 = vstv %s897
    %v921 = vmul.f32 %v920, %v238
    %v922 = vmul.f32 %v920, %v243
    %925 = vrot.lane.b32.xlu0 %v921, 126
    %v926 = vpop.permute.xlu0 %925
    %927 = vrot.lane.b32.xlu0 %v922, 126
    %v928 = vpop.permute.xlu0 %927
    %v931 = vadd.f32 %v890, %v926
    %v932 = vadd.f32 %v891, %v928
    %v933 = vmul.f32 %v920, %v346
    %v935 = vrot.slane %v933, 2
    %v937 = vadd.f32 %v896, %v935
    %s938 = sld [smem:[#allocation2 + $0x83]]
    %939 = vset.pattern.permute.xlu0 11
    %940 = vperm.xlu0 %939, %v238
    %v941 = vpop.permute.xlu0 %940
    %943 = vset.pattern.permute.xlu0 11
    %944 = vperm.xlu0 %943, %v243
    %v945 = vpop.permute.xlu0 %944
    %v947 = vlaneseq
    %v948 = vshrl.u32 %v947, 7
    %v949 = vsub.s32 3, %v948
    %v950 = vrot.slane %v346, %v949
    %v951 = vadd.f32 %v941, %v950
    %v952 = vadd.f32 %v945, %v950
    %s953 = smul.f32 %s938, 0.4
    %v954 = vand.u32 2147483647, %v951
    %v955 = vand.u32 2147483647, %v952
    %v956 = vstv %s953
    %v957 = vmul.f32 %v956, %v954
    %v958 = vmul.f32 %v956, %v955
    %v959 = vadd.f32 %v918, %v957
    %v960 = vadd.f32 %v919, %v958
    %v961 = vstv %s938
    %v962 = vmul.f32 %v961, %v238
    %v963 = vmul.f32 %v961, %v243
    %966 = vrot.lane.b32.xlu0 %v962, 125
    %v967 = vpop.permute.xlu0 %966
    %968 = vrot.lane.b32.xlu0 %v963, 125
    %v969 = vpop.permute.xlu0 %968
    %v972 = vadd.f32 %v931, %v967
    %v973 = vadd.f32 %v932, %v969
    %v974 = vmul.f32 %v961, %v346
    %v976 = vrot.slane %v974, 3
    %v978 = vadd.f32 %v937, %v976
    %s979 = sld [smem:[#allocation2 + $0x84]]
    %980 = vset.pattern.permute.xlu0 12
    %981 = vperm.xlu0 %980, %v238
    %v982 = vpop.permute.xlu0 %981
    %984 = vset.pattern.permute.xlu0 12
    %985 = vperm.xlu0 %984, %v243
    %v986 = vpop.permute.xlu0 %985
    %v988 = vlaneseq
    %v989 = vshrl.u32 %v988, 7
    %v990 = vsub.s32 4, %v989
    %v991 = vrot.slane %v346, %v990
    %v992 = vadd.f32 %v982, %v991
    %v993 = vadd.f32 %v986, %v991
    %s994 = smul.f32 %s979, 0.4
    %v995 = vand.u32 2147483647, %v992
    %v996 = vand.u32 2147483647, %v993
    %v997 = vstv %s994
    %v998 = vmul.f32 %v997, %v995
    %v999 = vmul.f32 %v997, %v996
    %v1000 = vadd.f32 %v959, %v998
    %v1001 = vadd.f32 %v960, %v999
    %v1002 = vstv %s979
    %v1003 = vmul.f32 %v1002, %v238
    %v1004 = vmul.f32 %v1002, %v243
    %1007 = vrot.lane.b32.xlu0 %v1003, 124
    %v1008 = vpop.permute.xlu0 %1007
    %1009 = vrot.lane.b32.xlu0 %v1004, 124
    %v1010 = vpop.permute.xlu0 %1009
    %v1013 = vadd.f32 %v972, %v1008
    %v1014 = vadd.f32 %v973, %v1010
    %v1015 = vmul.f32 %v1002, %v346
    %v1017 = vrot.slane %v1015, 4
    %v1019 = vadd.f32 %v978, %v1017
    %s1020 = sld [smem:[#allocation2 + $0x85]]
    %1021 = vset.pattern.permute.xlu0 13
    %1022 = vperm.xlu0 %1021, %v238
    %v1023 = vpop.permute.xlu0 %1022
    %1025 = vset.pattern.permute.xlu0 13
    %1026 = vperm.xlu0 %1025, %v243
    %v1027 = vpop.permute.xlu0 %1026
    %v1029 = vlaneseq
    %v1030 = vshrl.u32 %v1029, 7
    %v1031 = vsub.s32 5, %v1030
    %v1032 = vrot.slane %v346, %v1031
    %v1033 = vadd.f32 %v1023, %v1032
    %v1034 = vadd.f32 %v1027, %v1032
    %s1035 = smul.f32 %s1020, 0.4
    %v1036 = vand.u32 2147483647, %v1033
    %v1037 = vand.u32 2147483647, %v1034
    %v1038 = vstv %s1035
    %v1039 = vmul.f32 %v1038, %v1036
    %v1040 = vmul.f32 %v1038, %v1037
    %v1041 = vadd.f32 %v1000, %v1039
    %v1042 = vadd.f32 %v1001, %v1040
    %v1043 = vstv %s1020
    %v1044 = vmul.f32 %v1043, %v238
    %v1045 = vmul.f32 %v1043, %v243
    %1048 = vrot.lane.b32.xlu0 %v1044, 123
    %v1049 = vpop.permute.xlu0 %1048
    %1050 = vrot.lane.b32.xlu0 %v1045, 123
    %v1051 = vpop.permute.xlu0 %1050
    %v1054 = vadd.f32 %v1013, %v1049
    %v1055 = vadd.f32 %v1014, %v1051
    %v1056 = vmul.f32 %v1043, %v346
    %v1058 = vrot.slane %v1056, 5
    %v1060 = vadd.f32 %v1019, %v1058
    %s1061 = sld [smem:[#allocation2 + $0x86]]
    %1062 = vset.pattern.permute.xlu0 14
    %1063 = vperm.xlu0 %1062, %v238
    %v1064 = vpop.permute.xlu0 %1063
    %1066 = vset.pattern.permute.xlu0 14
    %1067 = vperm.xlu0 %1066, %v243
    %v1068 = vpop.permute.xlu0 %1067
    %v1070 = vlaneseq
    %v1071 = vshrl.u32 %v1070, 7
    %v1072 = vsub.s32 6, %v1071
    %v1073 = vrot.slane %v346, %v1072
    %v1074 = vadd.f32 %v1064, %v1073
    %v1075 = vadd.f32 %v1068, %v1073
    %s1076 = smul.f32 %s1061, 0.4
    %v1077 = vand.u32 2147483647, %v1074
    %v1078 = vand.u32 2147483647, %v1075
    %v1079 = vstv %s1076
    %v1080 = vmul.f32 %v1079, %v1077
    %v1081 = vmul.f32 %v1079, %v1078
    %v1082 = vadd.f32 %v1041, %v1080
    %v1083 = vadd.f32 %v1042, %v1081
    %v1084 = vstv %s1061
    %v1085 = vmul.f32 %v1084, %v238
    %v1086 = vmul.f32 %v1084, %v243
    %1089 = vrot.lane.b32.xlu0 %v1085, 122
    %v1090 = vpop.permute.xlu0 %1089
    %1091 = vrot.lane.b32.xlu0 %v1086, 122
    %v1092 = vpop.permute.xlu0 %1091
    %v1095 = vadd.f32 %v1054, %v1090
    %v1096 = vadd.f32 %v1055, %v1092
    %v1097 = vmul.f32 %v1084, %v346
    %v1099 = vrot.slane %v1097, 6
    %v1101 = vadd.f32 %v1060, %v1099
    %s1102 = sld [smem:[#allocation2 + $0x87]]
    %1103 = vset.pattern.permute.xlu0 15
    %1104 = vperm.xlu0 %1103, %v238
    %v1105 = vpop.permute.xlu0 %1104
    %1107 = vset.pattern.permute.xlu0 15
    %1108 = vperm.xlu0 %1107, %v243
    %v1109 = vpop.permute.xlu0 %1108
    %v1111 = vlaneseq
    %v1112 = vshrl.u32 %v1111, 7
    %v1113 = vsub.s32 7, %v1112
    %v1114 = vrot.slane %v346, %v1113
    %v1115 = vadd.f32 %v1105, %v1114
    %v1116 = vadd.f32 %v1109, %v1114
    %s1117 = smul.f32 %s1102, 0.4
    %v1118 = vand.u32 2147483647, %v1115
    %v1119 = vand.u32 2147483647, %v1116
    %v1120 = vstv %s1117
    %v1121 = vmul.f32 %v1120, %v1118
    %v1122 = vmul.f32 %v1120, %v1119
    %v1123 = vadd.f32 %v1082, %v1121
    %v1124 = vadd.f32 %v1083, %v1122
    %v1125 = vstv %s1102
    %v1126 = vmul.f32 %v1125, %v238
    %v1127 = vmul.f32 %v1125, %v243
    %1130 = vrot.lane.b32.xlu0 %v1126, 121
    %v1131 = vpop.permute.xlu0 %1130
    %1132 = vrot.lane.b32.xlu0 %v1127, 121
    %v1133 = vpop.permute.xlu0 %1132
    %v1136 = vadd.f32 %v1095, %v1131
    %v1137 = vadd.f32 %v1096, %v1133
    %v1138 = vmul.f32 %v1125, %v346
    %v1140 = vrot.slane %v1138, 7
    %v1142 = vadd.f32 %v1101, %v1140
    %1144 = vset.pattern.permute.xlu0 8
    %1145 = vperm.xlu0 %1144, %v1136
    %v1146 = vpop.permute.xlu0 %1145
    %1149 = vset.pattern.permute.xlu0 8
    %1150 = vperm.xlu0 %1149, %v1137
    %v1151 = vpop.permute.xlu0 %1150
    %v1153 = vlaneseq
    %v1154 = vshrl.u32 %v1153, 7
    %v1155 = vsub.s32 0, %v1154
    %v1156 = vrot.slane %v1142, %v1155
    %v1157 = vadd.f32 %v1146, %v1156
    %v1158 = vadd.f32 %v1151, %v1156
    %v1159 = vmul.f32 %v1157, 0.6
    %v1160 = vmul.f32 %v1158, 0.6
    %v1161 = vadd.f32 %v1159, %v1123
    %v1162 = vadd.f32 %v1160, %v1124
    %v1163 = vadd.f32 %v1161, %v363
    %v1164 = vadd.f32 %v1162, %v364
    %v1165 = vsel %vm706, %v1163, -inf
    %1166 = vmax.xlane.f32.xlu0 %v1165
    %v1167 = vpop.xlane.xlu0 %1166
    %v1168 = vsel %vm706, %v1164, -inf
    %1169 = vmax.xlane.f32.xlu0 %v1168
    %v1170 = vpop.xlane.xlu0 %1169
    %v1171 = vsub.f32 %v1163, %v1167
    %v1172 = vsub.f32 %v1164, %v1170
    %v1173 = vmul.f32 %v1171, 1.442695
    %v1174 = vpow.pop %v1173
    %v1175 = vmul.f32 %v1172, 1.442695
    %v1176 = vpow.pop %v1175
    %v1177 = vsel %vm361, %v1174, 0.0
    %v1178 = vsel %vm362, %v1176, 0.0
    %v1179 = vsel %vm706, %v1177, 0.0
    %1180 = vadd.xlane.f32.xlu0 %v1179
    %v1181 = vpop.xlane.xlu0 %1180
    %v1182 = vsel %vm706, %v1178, 0.0
    %1183 = vadd.xlane.f32.xlu0 %v1182
    %v1184 = vpop.xlane.xlu0 %1183
    %vm1185 = vcmp.eq.f32.partialorder %v1181, 0.0
    %vm1186 = vcmp.eq.f32.partialorder %v1184, 0.0
    %v1187 = vsel %vm1185, 1.0, %v1181
    %v1188 = vsel %vm1186, 1.0, %v1184
    %v1189 = vrcp.pop %v1187
    %v1190 = vrcp.pop %v1188
    %v1191 = vmul.f32 %v1187, %v1189
    %v1192 = vmul.f32 %v1188, %v1190
    %v1193 = vsub.f32 2.0, %v1191
    %v1194 = vsub.f32 2.0, %v1192
    %v1195 = vmul.f32 %v1189, %v1193
    %v1196 = vmul.f32 %v1190, %v1194
    %v1197 = vmul.f32 %v1177, %v1195
    %v1198 = vmul.f32 %v1178, %v1196
    %1201 = vrot.lane.b32.xlu0 %v149, 120
    %v1202 = vpop.permute.xlu0 %1201
    %1203 = vrot.lane.b32.xlu0 %v154, 120
    %v1204 = vpop.permute.xlu0 %1203
    %1209 = vrot.lane.b32.xlu0 %v321, 120
    %v1210 = vpop.permute.xlu0 %1209
    %1211 = vrot.lane.b32.xlu0 %v326, 120
    %v1212 = vpop.permute.xlu0 %1211
    %v1216 = vsel %vm706, %v1197, 0
    %v1219 = vsel %vm706, %v1198, 0
    %1221 = vmatprep.subr.mxu0 0.0
    %1222 = vmatpush1.msra.mxu0 %v1202
    %1223 = vmatprep.subr.mxu0 0.0
    %1224 = vmatpush1.msra.mxu0 %v1204
    %1225 = vmatprep.subr.mxu0 0.0
    %1226 = vmatpush1.msra.mxu0 0.0
    %1227 = vmatprep.subr.mxu0 0.0
    %1228 = vmatpush1.msra.mxu0 0.0
    %1229 = vmatprep.subr.mxu0 0.0
    %1230 = vmatpush1.msra.mxu0 0.0
    %1231 = vmatprep.subr.mxu0 0.0
    %1232 = vmatpush1.msra.mxu0 0.0
    %1233 = vmatprep.subr.mxu0 0.0
    %1234 = vmatpush1.msra.mxu0 0.0
    %1235 = vmatprep.subr.mxu0 0.0
    %1236 = vmatpush1.msra.mxu0 0.0
    %1237 = vmatprep.subr.mxu0 0.0
    %1238 = vmatpush1.msra.mxu0 0.0
    %1239 = vmatprep.subr.mxu0 0.0
    %1240 = vmatpush1.msra.mxu0 0.0
    %1241 = vmatprep.subr.mxu0 0.0
    %1242 = vmatpush1.msra.mxu0 0.0
    %1243 = vmatprep.subr.mxu0 0.0
    %1244 = vmatpush1.msra.mxu0 0.0
    %1245 = vmatprep.subr.mxu0 0.0
    %1246 = vmatpush1.msra.mxu0 0.0
    %1247 = vmatprep.subr.mxu0 0.0
    %1248 = vmatpush1.msra.mxu0 0.0
    %1249 = vmatprep.subr.mxu0 0.0
    %1250 = vmatpush1.msra.mxu0 0.0
    %1251 = vmatprep.subr.mxu0 0.0
    %1252 = vmatpush1.msra.mxu0 0.0
    %1253 = vmatprep.subr.mxu0 0.0
    %1254 = vmatpush1.msra.mxu0 0.0
    %1255 = vmatprep.subr.mxu0 0.0
    %1256 = vmatpush1.msra.mxu0 0.0
    %1257 = vmatprep.subr.mxu0 0.0
    %1258 = vmatpush1.msra.mxu0 0.0
    %1259 = vmatprep.subr.mxu0 0.0
    %1260 = vmatpush1.msra.mxu0 0.0
    %1261 = vmatprep.subr.mxu0 0.0
    %1262 = vmatpush1.msra.mxu0 0.0
    %1263 = vmatprep.subr.mxu0 0.0
    %1264 = vmatpush1.msra.mxu0 0.0
    %1265 = vmatprep.subr.mxu0 0.0
    %1266 = vmatpush1.msra.mxu0 0.0
    %1267 = vmatprep.subr.mxu0 0.0
    %1268 = vmatpush1.msra.mxu0 0.0
    %1269 = vmatprep.subr.mxu0 0.0
    %1270 = vmatpush1.msra.mxu0 0.0
    %1271 = vmatprep.subr.mxu0 0.0
    %1272 = vmatpush1.msra.mxu0 0.0
    %1273 = vmatprep.subr.mxu0 0.0
    %1274 = vmatpush1.msra.mxu0 0.0
    %1275 = vmatprep.subr.mxu0 0.0
    %1276 = vmatpush1.msra.mxu0 0.0
    %1277 = vmatprep.subr.mxu0 0.0
    %1278 = vmatpush1.msra.mxu0 0.0
    %1279 = vmatprep.subr.mxu0 0.0
    %1280 = vmatpush1.msra.mxu0 0.0
    %1281 = vmatprep.subr.mxu0 0.0
    %1282 = vmatpush1.msra.mxu0 0.0
    %1283 = vmatprep.subr.mxu0 0.0
    %1284 = vmatpush1.msra.mxu0 0.0
    %1285 = vmatprep.mubr.f32.mxu0 0.0
    %1286 = vmatmul.mubr.f32.gmra.mrb[0].mxu0 %v1216
    %v1287 = vpop.f32.mrb[0].mxu0
    %v1288 = vadd.f32 %v1210, %v1287
    %v1289 = vpop.f32.mrb[0].mxu0
    %1290 = vmatprep.mubr.f32.mxu0 0.0
    %1291 = vmatmul.mubr.f32.gmra.mrb[0].mxu0 %v1219
    %v1292 = vpop.f32.mrb[0].mxu0
    %v1293 = vadd.f32 %v1212, %v1292
    %v1294 = vpop.f32.mrb[0].mxu0
    %1295 = vdwg.mxu0
    %1298 = vrot.lane.b32.xlu0 %v1288, 8
    %v1299 = vpop.permute.xlu0 %1298
    %1300 = vrot.lane.b32.xlu0 %v1293, 8
    %v1301 = vpop.permute.xlu0 %1300
    %vm1304 = vcmask 130112
    %1305 = vst.msk [vmem:[%s10] sm:$0xff] %vm1304, %v1299
    %1306 = vst.msk [vmem:[%s10 + $0x8] sm:$0xff] %vm1304, %v1301
    %s1307 = scalar_lea.vmem [#allocation7], 16
    %1308 = vst.msk [vmem:[%s1307] sm:$0xff] %vm706, %v1197
    %1309 = vst.msk [vmem:[%s1307 + $0x8] sm:$0xff] %vm706, %v1198
    %s1310 = sld [smem:[#allocation2 + $0x100]]
    %1311 = vset.pattern.permute.xlu0 16
    %1312 = vperm.xlu0 %1311, %v238
    %v1313 = vpop.permute.xlu0 %1312
    %1315 = vset.pattern.permute.xlu0 16
    %1316 = vperm.xlu0 %1315, %v243
    %v1317 = vpop.permute.xlu0 %1316
    %v1319 = vlaneseq
    %v1320 = vshrl.u32 %v1319, 7
    %v1321 = vsub.s32 0, %v1320
    %v1322 = vrot.slane %v347, %v1321
    %v1323 = vadd.f32 %v1313, %v1322
    %v1324 = vadd.f32 %v1317, %v1322
    %s1325 = smul.f32 %s1310, 0.4
    %v1326 = vand.u32 2147483647, %v1323
    %v1327 = vand.u32 2147483647, %v1324
    %v1328 = vstv %s1325
    %v1329 = vmul.f32 %v1328, %v1326
    %v1330 = vmul.f32 %v1328, %v1327
    %v1331 = vadd.f32 %v1329, 0.0
    %v1332 = vadd.f32 %v1330, 0.0
    %v1333 = vstv %s1310
    %v1334 = vmul.f32 %v1333, %v238
    %v1335 = vmul.f32 %v1333, %v243
    %v1336 = vadd.f32 %v1334, 0.0
    %v1337 = vadd.f32 %v1335, 0.0
    %v1338 = vmul.f32 %v1333, %v347
    %v1339 = vadd.f32 %v1338, 0.0
    %s1340 = sld [smem:[#allocation2 + $0x101]]
    %1341 = vset.pattern.permute.xlu0 17
    %1342 = vperm.xlu0 %1341, %v238
    %v1343 = vpop.permute.xlu0 %1342
    %1345 = vset.pattern.permute.xlu0 17
    %1346 = vperm.xlu0 %1345, %v243
    %v1347 = vpop.permute.xlu0 %1346
    %v1349 = vlaneseq
    %v1350 = vshrl.u32 %v1349, 7
    %v1351 = vsub.s32 1, %v1350
    %v1352 = vrot.slane %v347, %v1351
    %v1353 = vadd.f32 %v1343, %v1352
    %v1354 = vadd.f32 %v1347, %v1352
    %s1355 = smul.f32 %s1340, 0.4
    %v1356 = vand.u32 2147483647, %v1353
    %v1357 = vand.u32 2147483647, %v1354
    %v1358 = vstv %s1355
    %v1359 = vmul.f32 %v1358, %v1356
    %v1360 = vmul.f32 %v1358, %v1357
    %v1361 = vadd.f32 %v1331, %v1359
    %v1362 = vadd.f32 %v1332, %v1360
    %v1363 = vstv %s1340
    %v1364 = vmul.f32 %v1363, %v238
    %v1365 = vmul.f32 %v1363, %v243
    %1368 = vrot.lane.b32.xlu0 %v1364, 127
    %v1369 = vpop.permute.xlu0 %1368
    %1370 = vrot.lane.b32.xlu0 %v1365, 127
    %v1371 = vpop.permute.xlu0 %1370
    %v1374 = vadd.f32 %v1336, %v1369
    %v1375 = vadd.f32 %v1337, %v1371
    %v1376 = vmul.f32 %v1363, %v347
    %v1378 = vrot.slane %v1376, 1
    %v1380 = vadd.f32 %v1339, %v1378
    %s1381 = sld [smem:[#allocation2 + $0x102]]
    %1382 = vset.pattern.permute.xlu0 18
    %1383 = vperm.xlu0 %1382, %v238
    %v1384 = vpop.permute.xlu0 %1383
    %1386 = vset.pattern.permute.xlu0 18
    %1387 = vperm.xlu0 %1386, %v243
    %v1388 = vpop.permute.xlu0 %1387
    %v1390 = vlaneseq
    %v1391 = vshrl.u32 %v1390, 7
    %v1392 = vsub.s32 2, %v1391
    %v1393 = vrot.slane %v347, %v1392
    %v1394 = vadd.f32 %v1384, %v1393
    %v1395 = vadd.f32 %v1388, %v1393
    %s1396 = smul.f32 %s1381, 0.4
    %v1397 = vand.u32 2147483647, %v1394
    %v1398 = vand.u32 2147483647, %v1395
    %v1399 = vstv %s1396
    %v1400 = vmul.f32 %v1399, %v1397
    %v1401 = vmul.f32 %v1399, %v1398
    %v1402 = vadd.f32 %v1361, %v1400
    %v1403 = vadd.f32 %v1362, %v1401
    %v1404 = vstv %s1381
    %v1405 = vmul.f32 %v1404, %v238
    %v1406 = vmul.f32 %v1404, %v243
    %1409 = vrot.lane.b32.xlu0 %v1405, 126
    %v1410 = vpop.permute.xlu0 %1409
    %1411 = vrot.lane.b32.xlu0 %v1406, 126
    %v1412 = vpop.permute.xlu0 %1411
    %v1415 = vadd.f32 %v1374, %v1410
    %v1416 = vadd.f32 %v1375, %v1412
    %v1417 = vmul.f32 %v1404, %v347
    %v1419 = vrot.slane %v1417, 2
    %v1421 = vadd.f32 %v1380, %v1419
    %s1422 = sld [smem:[#allocation2 + $0x103]]
    %1423 = vset.pattern.permute.xlu0 19
    %1424 = vperm.xlu0 %1423, %v238
    %v1425 = vpop.permute.xlu0 %1424
    %1427 = vset.pattern.permute.xlu0 19
    %1428 = vperm.xlu0 %1427, %v243
    %v1429 = vpop.permute.xlu0 %1428
    %v1431 = vlaneseq
    %v1432 = vshrl.u32 %v1431, 7
    %v1433 = vsub.s32 3, %v1432
    %v1434 = vrot.slane %v347, %v1433
    %v1435 = vadd.f32 %v1425, %v1434
    %v1436 = vadd.f32 %v1429, %v1434
    %s1437 = smul.f32 %s1422, 0.4
    %v1438 = vand.u32 2147483647, %v1435
    %v1439 = vand.u32 2147483647, %v1436
    %v1440 = vstv %s1437
    %v1441 = vmul.f32 %v1440, %v1438
    %v1442 = vmul.f32 %v1440, %v1439
    %v1443 = vadd.f32 %v1402, %v1441
    %v1444 = vadd.f32 %v1403, %v1442
    %v1445 = vstv %s1422
    %v1446 = vmul.f32 %v1445, %v238
    %v1447 = vmul.f32 %v1445, %v243
    %1450 = vrot.lane.b32.xlu0 %v1446, 125
    %v1451 = vpop.permute.xlu0 %1450
    %1452 = vrot.lane.b32.xlu0 %v1447, 125
    %v1453 = vpop.permute.xlu0 %1452
    %v1456 = vadd.f32 %v1415, %v1451
    %v1457 = vadd.f32 %v1416, %v1453
    %v1458 = vmul.f32 %v1445, %v347
    %v1460 = vrot.slane %v1458, 3
    %v1462 = vadd.f32 %v1421, %v1460
    %s1463 = sld [smem:[#allocation2 + $0x104]]
    %1464 = vset.pattern.permute.xlu0 20
    %1465 = vperm.xlu0 %1464, %v238
    %v1466 = vpop.permute.xlu0 %1465
    %1468 = vset.pattern.permute.xlu0 20
    %1469 = vperm.xlu0 %1468, %v243
    %v1470 = vpop.permute.xlu0 %1469
    %v1472 = vlaneseq
    %v1473 = vshrl.u32 %v1472, 7
    %v1474 = vsub.s32 4, %v1473
    %v1475 = vrot.slane %v347, %v1474
    %v1476 = vadd.f32 %v1466, %v1475
    %v1477 = vadd.f32 %v1470, %v1475
    %s1478 = smul.f32 %s1463, 0.4
    %v1479 = vand.u32 2147483647, %v1476
    %v1480 = vand.u32 2147483647, %v1477
    %v1481 = vstv %s1478
    %v1482 = vmul.f32 %v1481, %v1479
    %v1483 = vmul.f32 %v1481, %v1480
    %v1484 = vadd.f32 %v1443, %v1482
    %v1485 = vadd.f32 %v1444, %v1483
    %v1486 = vstv %s1463
    %v1487 = vmul.f32 %v1486, %v238
    %v1488 = vmul.f32 %v1486, %v243
    %1491 = vrot.lane.b32.xlu0 %v1487, 124
    %v1492 = vpop.permute.xlu0 %1491
    %1493 = vrot.lane.b32.xlu0 %v1488, 124
    %v1494 = vpop.permute.xlu0 %1493
    %v1497 = vadd.f32 %v1456, %v1492
    %v1498 = vadd.f32 %v1457, %v1494
    %v1499 = vmul.f32 %v1486, %v347
    %v1501 = vrot.slane %v1499, 4
    %v1503 = vadd.f32 %v1462, %v1501
    %s1504 = sld [smem:[#allocation2 + $0x105]]
    %1505 = vset.pattern.permute.xlu0 21
    %1506 = vperm.xlu0 %1505, %v238
    %v1507 = vpop.permute.xlu0 %1506
    %1509 = vset.pattern.permute.xlu0 21
    %1510 = vperm.xlu0 %1509, %v243
    %v1511 = vpop.permute.xlu0 %1510
    %v1513 = vlaneseq
    %v1514 = vshrl.u32 %v1513, 7
    %v1515 = vsub.s32 5, %v1514
    %v1516 = vrot.slane %v347, %v1515
    %v1517 = vadd.f32 %v1507, %v1516
    %v1518 = vadd.f32 %v1511, %v1516
    %s1519 = smul.f32 %s1504, 0.4
    %v1520 = vand.u32 2147483647, %v1517
    %v1521 = vand.u32 2147483647, %v1518
    %v1522 = vstv %s1519
    %v1523 = vmul.f32 %v1522, %v1520
    %v1524 = vmul.f32 %v1522, %v1521
    %v1525 = vadd.f32 %v1484, %v1523
    %v1526 = vadd.f32 %v1485, %v1524
    %v1527 = vstv %s1504
    %v1528 = vmul.f32 %v1527, %v238
    %v1529 = vmul.f32 %v1527, %v243
    %1532 = vrot.lane.b32.xlu0 %v1528, 123
    %v1533 = vpop.permute.xlu0 %1532
    %1534 = vrot.lane.b32.xlu0 %v1529, 123
    %v1535 = vpop.permute.xlu0 %1534
    %v1538 = vadd.f32 %v1497, %v1533
    %v1539 = vadd.f32 %v1498, %v1535
    %v1540 = vmul.f32 %v1527, %v347
    %v1542 = vrot.slane %v1540, 5
    %v1544 = vadd.f32 %v1503, %v1542
    %s1545 = sld [smem:[#allocation2 + $0x106]]
    %1546 = vset.pattern.permute.xlu0 22
    %1547 = vperm.xlu0 %1546, %v238
    %v1548 = vpop.permute.xlu0 %1547
    %1550 = vset.pattern.permute.xlu0 22
    %1551 = vperm.xlu0 %1550, %v243
    %v1552 = vpop.permute.xlu0 %1551
    %v1554 = vlaneseq
    %v1555 = vshrl.u32 %v1554, 7
    %v1556 = vsub.s32 6, %v1555
    %v1557 = vrot.slane %v347, %v1556
    %v1558 = vadd.f32 %v1548, %v1557
    %v1559 = vadd.f32 %v1552, %v1557
    %s1560 = smul.f32 %s1545, 0.4
    %v1561 = vand.u32 2147483647, %v1558
    %v1562 = vand.u32 2147483647, %v1559
    %v1563 = vstv %s1560
    %v1564 = vmul.f32 %v1563, %v1561
    %v1565 = vmul.f32 %v1563, %v1562
    %v1566 = vadd.f32 %v1525, %v1564
    %v1567 = vadd.f32 %v1526, %v1565
    %v1568 = vstv %s1545
    %v1569 = vmul.f32 %v1568, %v238
    %v1570 = vmul.f32 %v1568, %v243
    %1573 = vrot.lane.b32.xlu0 %v1569, 122
    %v1574 = vpop.permute.xlu0 %1573
    %1575 = vrot.lane.b32.xlu0 %v1570, 122
    %v1576 = vpop.permute.xlu0 %1575
    %v1579 = vadd.f32 %v1538, %v1574
    %v1580 = vadd.f32 %v1539, %v1576
    %v1581 = vmul.f32 %v1568, %v347
    %v1583 = vrot.slane %v1581, 6
    %v1585 = vadd.f32 %v1544, %v1583
    %s1586 = sld [smem:[#allocation2 + $0x107]]
    %1587 = vset.pattern.permute.xlu0 23
    %1588 = vperm.xlu0 %1587, %v238
    %v1589 = vpop.permute.xlu0 %1588
    %1591 = vset.pattern.permute.xlu0 23
    %1592 = vperm.xlu0 %1591, %v243
    %v1593 = vpop.permute.xlu0 %1592
    %v1595 = vlaneseq
    %v1596 = vshrl.u32 %v1595, 7
    %v1597 = vsub.s32 7, %v1596
    %v1598 = vrot.slane %v347, %v1597
    %v1599 = vadd.f32 %v1589, %v1598
    %v1600 = vadd.f32 %v1593, %v1598
    %s1601 = smul.f32 %s1586, 0.4
    %v1602 = vand.u32 2147483647, %v1599
    %v1603 = vand.u32 2147483647, %v1600
    %v1604 = vstv %s1601
    %v1605 = vmul.f32 %v1604, %v1602
    %v1606 = vmul.f32 %v1604, %v1603
    %v1607 = vadd.f32 %v1566, %v1605
    %v1608 = vadd.f32 %v1567, %v1606
    %v1609 = vstv %s1586
    %v1610 = vmul.f32 %v1609, %v238
    %v1611 = vmul.f32 %v1609, %v243
    %1614 = vrot.lane.b32.xlu0 %v1610, 121
    %v1615 = vpop.permute.xlu0 %1614
    %1616 = vrot.lane.b32.xlu0 %v1611, 121
    %v1617 = vpop.permute.xlu0 %1616
    %v1620 = vadd.f32 %v1579, %v1615
    %v1621 = vadd.f32 %v1580, %v1617
    %v1622 = vmul.f32 %v1609, %v347
    %v1624 = vrot.slane %v1622, 7
    %v1626 = vadd.f32 %v1585, %v1624
    %1628 = vset.pattern.permute.xlu0 16
    %1629 = vperm.xlu0 %1628, %v1620
    %v1630 = vpop.permute.xlu0 %1629
    %1633 = vset.pattern.permute.xlu0 16
    %1634 = vperm.xlu0 %1633, %v1621
    %v1635 = vpop.permute.xlu0 %1634
    %v1637 = vlaneseq
    %v1638 = vshrl.u32 %v1637, 7
    %v1639 = vsub.s32 0, %v1638
    %v1640 = vrot.slane %v1626, %v1639
    %v1641 = vadd.f32 %v1630, %v1640
    %v1642 = vadd.f32 %v1635, %v1640
    %v1643 = vmul.f32 %v1641, 0.6
    %v1644 = vmul.f32 %v1642, 0.6
    %v1645 = vadd.f32 %v1643, %v1607
    %v1646 = vadd.f32 %v1644, %v1608
    %v1647 = vadd.f32 %v1645, %v363
    %v1648 = vadd.f32 %v1646, %v364
    %v1649 = vsel %vm706, %v1647, -inf
    %1650 = vmax.xlane.f32.xlu0 %v1649
    %v1651 = vpop.xlane.xlu0 %1650
    %v1652 = vsel %vm706, %v1648, -inf
    %1653 = vmax.xlane.f32.xlu0 %v1652
    %v1654 = vpop.xlane.xlu0 %1653
    %v1655 = vsub.f32 %v1647, %v1651
    %v1656 = vsub.f32 %v1648, %v1654
    %v1657 = vmul.f32 %v1655, 1.442695
    %v1658 = vpow.pop %v1657
    %v1659 = vmul.f32 %v1656, 1.442695
    %v1660 = vpow.pop %v1659
    %v1661 = vsel %vm361, %v1658, 0.0
    %v1662 = vsel %vm362, %v1660, 0.0
    %v1663 = vsel %vm706, %v1661, 0.0
    %1664 = vadd.xlane.f32.xlu0 %v1663
    %v1665 = vpop.xlane.xlu0 %1664
    %v1666 = vsel %vm706, %v1662, 0.0
    %1667 = vadd.xlane.f32.xlu0 %v1666
    %v1668 = vpop.xlane.xlu0 %1667
    %vm1669 = vcmp.eq.f32.partialorder %v1665, 0.0
    %vm1670 = vcmp.eq.f32.partialorder %v1668, 0.0
    %v1671 = vsel %vm1669, 1.0, %v1665
    %v1672 = vsel %vm1670, 1.0, %v1668
    %v1673 = vrcp.pop %v1671
    %v1674 = vrcp.pop %v1672
    %v1675 = vmul.f32 %v1671, %v1673
    %v1676 = vmul.f32 %v1672, %v1674
    %v1677 = vsub.f32 2.0, %v1675
    %v1678 = vsub.f32 2.0, %v1676
    %v1679 = vmul.f32 %v1673, %v1677
    %v1680 = vmul.f32 %v1674, %v1678
    %v1681 = vmul.f32 %v1661, %v1679
    %v1682 = vmul.f32 %v1662, %v1680
    %1683 = vrot.lane.b32.xlu0 %v149, 112
    %v1684 = vpop.permute.xlu0 %1683
    %1685 = vrot.lane.b32.xlu0 %v154, 112
    %v1686 = vpop.permute.xlu0 %1685
    %1689 = vrot.lane.b32.xlu0 %v321, 112
    %v1690 = vpop.permute.xlu0 %1689
    %1691 = vrot.lane.b32.xlu0 %v326, 112
    %v1692 = vpop.permute.xlu0 %1691
    %v1696 = vsel %vm706, %v1681, 0
    %v1699 = vsel %vm706, %v1682, 0
    %1701 = vmatprep.subr.mxu0 0.0
    %1702 = vmatpush1.msra.mxu0 %v1684
    %1703 = vmatprep.subr.mxu0 0.0
    %1704 = vmatpush1.msra.mxu0 %v1686
    %1705 = vmatprep.subr.mxu0 0.0
    %1706 = vmatpush1.msra.mxu0 0.0
    %1707 = vmatprep.subr.mxu0 0.0
    %1708 = vmatpush1.msra.mxu0 0.0
    %1709 = vmatprep.subr.mxu0 0.0
    %1710 = vmatpush1.msra.mxu0 0.0
    %1711 = vmatprep.subr.mxu0 0.0
    %1712 = vmatpush1.msra.mxu0 0.0
    %1713 = vmatprep.subr.mxu0 0.0
    %1714 = vmatpush1.msra.mxu0 0.0
    %1715 = vmatprep.subr.mxu0 0.0
    %1716 = vmatpush1.msra.mxu0 0.0
    %1717 = vmatprep.subr.mxu0 0.0
    %1718 = vmatpush1.msra.mxu0 0.0
    %1719 = vmatprep.subr.mxu0 0.0
    %1720 = vmatpush1.msra.mxu0 0.0
    %1721 = vmatprep.subr.mxu0 0.0
    %1722 = vmatpush1.msra.mxu0 0.0
    %1723 = vmatprep.subr.mxu0 0.0
    %1724 = vmatpush1.msra.mxu0 0.0
    %1725 = vmatprep.subr.mxu0 0.0
    %1726 = vmatpush1.msra.mxu0 0.0
    %1727 = vmatprep.subr.mxu0 0.0
    %1728 = vmatpush1.msra.mxu0 0.0
    %1729 = vmatprep.subr.mxu0 0.0
    %1730 = vmatpush1.msra.mxu0 0.0
    %1731 = vmatprep.subr.mxu0 0.0
    %1732 = vmatpush1.msra.mxu0 0.0
    %1733 = vmatprep.subr.mxu0 0.0
    %1734 = vmatpush1.msra.mxu0 0.0
    %1735 = vmatprep.subr.mxu0 0.0
    %1736 = vmatpush1.msra.mxu0 0.0
    %1737 = vmatprep.subr.mxu0 0.0
    %1738 = vmatpush1.msra.mxu0 0.0
    %1739 = vmatprep.subr.mxu0 0.0
    %1740 = vmatpush1.msra.mxu0 0.0
    %1741 = vmatprep.subr.mxu0 0.0
    %1742 = vmatpush1.msra.mxu0 0.0
    %1743 = vmatprep.subr.mxu0 0.0
    %1744 = vmatpush1.msra.mxu0 0.0
    %1745 = vmatprep.subr.mxu0 0.0
    %1746 = vmatpush1.msra.mxu0 0.0
    %1747 = vmatprep.subr.mxu0 0.0
    %1748 = vmatpush1.msra.mxu0 0.0
    %1749 = vmatprep.subr.mxu0 0.0
    %1750 = vmatpush1.msra.mxu0 0.0
    %1751 = vmatprep.subr.mxu0 0.0
    %1752 = vmatpush1.msra.mxu0 0.0
    %1753 = vmatprep.subr.mxu0 0.0
    %1754 = vmatpush1.msra.mxu0 0.0
    %1755 = vmatprep.subr.mxu0 0.0
    %1756 = vmatpush1.msra.mxu0 0.0
    %1757 = vmatprep.subr.mxu0 0.0
    %1758 = vmatpush1.msra.mxu0 0.0
    %1759 = vmatprep.subr.mxu0 0.0
    %1760 = vmatpush1.msra.mxu0 0.0
    %1761 = vmatprep.subr.mxu0 0.0
    %1762 = vmatpush1.msra.mxu0 0.0
    %1763 = vmatprep.subr.mxu0 0.0
    %1764 = vmatpush1.msra.mxu0 0.0
    %1765 = vmatprep.mubr.f32.mxu0 0.0
    %1766 = vmatmul.mubr.f32.gmra.mrb[0].mxu0 %v1696
    %v1767 = vpop.f32.mrb[0].mxu0
    %v1768 = vadd.f32 %v1690, %v1767
    %v1769 = vpop.f32.mrb[0].mxu0
    %1770 = vmatprep.mubr.f32.mxu0 0.0
    %1771 = vmatmul.mubr.f32.gmra.mrb[0].mxu0 %v1699
    %v1772 = vpop.f32.mrb[0].mxu0
    %v1773 = vadd.f32 %v1692, %v1772
    %v1774 = vpop.f32.mrb[0].mxu0
    %1775 = vdwg.mxu0
    %1778 = vrot.lane.b32.xlu0 %v1768, 16
    %v1779 = vpop.permute.xlu0 %1778
    %1780 = vrot.lane.b32.xlu0 %v1773, 16
    %v1781 = vpop.permute.xlu0 %1780
    %vm1784 = vcmask 195712
    %1785 = vst.msk [vmem:[%s10] sm:$0xff] %vm1784, %v1779
    %1786 = vst.msk [vmem:[%s10 + $0x8] sm:$0xff] %vm1784, %v1781
    %s1787 = scalar_lea.vmem [#allocation7], 32
    %1788 = vst.msk [vmem:[%s1787] sm:$0xff] %vm706, %v1681
    %1789 = vst.msk [vmem:[%s1787 + $0x8] sm:$0xff] %vm706, %v1682
    %s1790 = sld [smem:[#allocation2 + $0x180]]
    %1791 = vset.pattern.permute.xlu0 24
    %1792 = vperm.xlu0 %1791, %v238
    %v1793 = vpop.permute.xlu0 %1792
    %1795 = vset.pattern.permute.xlu0 24
    %1796 = vperm.xlu0 %1795, %v243
    %v1797 = vpop.permute.xlu0 %1796
    %v1799 = vlaneseq
    %v1800 = vshrl.u32 %v1799, 7
    %v1801 = vsub.s32 0, %v1800
    %v1802 = vrot.slane %v348, %v1801
    %v1803 = vadd.f32 %v1793, %v1802
    %v1804 = vadd.f32 %v1797, %v1802
    %s1805 = smul.f32 %s1790, 0.4
    %v1806 = vand.u32 2147483647, %v1803
    %v1807 = vand.u32 2147483647, %v1804
    %v1808 = vstv %s1805
    %v1809 = vmul.f32 %v1808, %v1806
    %v1810 = vmul.f32 %v1808, %v1807
    %v1811 = vadd.f32 %v1809, 0.0
    %v1812 = vadd.f32 %v1810, 0.0
    %v1813 = vstv %s1790
    %v1814 = vmul.f32 %v1813, %v238
    %v1815 = vmul.f32 %v1813, %v243
    %v1816 = vadd.f32 %v1814, 0.0
    %v1817 = vadd.f32 %v1815, 0.0
    %v1818 = vmul.f32 %v1813, %v348
    %v1819 = vadd.f32 %v1818, 0.0
    %s1820 = sld [smem:[#allocation2 + $0x181]]
    %1821 = vset.pattern.permute.xlu0 25
    %1822 = vperm.xlu0 %1821, %v238
    %v1823 = vpop.permute.xlu0 %1822
    %1825 = vset.pattern.permute.xlu0 25
    %1826 = vperm.xlu0 %1825, %v243
    %v1827 = vpop.permute.xlu0 %1826
    %v1829 = vlaneseq
    %v1830 = vshrl.u32 %v1829, 7
    %v1831 = vsub.s32 1, %v1830
    %v1832 = vrot.slane %v348, %v1831
    %v1833 = vadd.f32 %v1823, %v1832
    %v1834 = vadd.f32 %v1827, %v1832
    %s1835 = smul.f32 %s1820, 0.4
    %v1836 = vand.u32 2147483647, %v1833
    %v1837 = vand.u32 2147483647, %v1834
    %v1838 = vstv %s1835
    %v1839 = vmul.f32 %v1838, %v1836
    %v1840 = vmul.f32 %v1838, %v1837
    %v1841 = vadd.f32 %v1811, %v1839
    %v1842 = vadd.f32 %v1812, %v1840
    %v1843 = vstv %s1820
    %v1844 = vmul.f32 %v1843, %v238
    %v1845 = vmul.f32 %v1843, %v243
    %1848 = vrot.lane.b32.xlu0 %v1844, 127
    %v1849 = vpop.permute.xlu0 %1848
    %1850 = vrot.lane.b32.xlu0 %v1845, 127
    %v1851 = vpop.permute.xlu0 %1850
    %v1854 = vadd.f32 %v1816, %v1849
    %v1855 = vadd.f32 %v1817, %v1851
    %v1856 = vmul.f32 %v1843, %v348
    %v1858 = vrot.slane %v1856, 1
    %v1860 = vadd.f32 %v1819, %v1858
    %s1861 = sld [smem:[#allocation2 + $0x182]]
    %1862 = vset.pattern.permute.xlu0 26
    %1863 = vperm.xlu0 %1862, %v238
    %v1864 = vpop.permute.xlu0 %1863
    %1866 = vset.pattern.permute.xlu0 26
    %1867 = vperm.xlu0 %1866, %v243
    %v1868 = vpop.permute.xlu0 %1867
    %v1870 = vlaneseq
    %v1871 = vshrl.u32 %v1870, 7
    %v1872 = vsub.s32 2, %v1871
    %v1873 = vrot.slane %v348, %v1872
    %v1874 = vadd.f32 %v1864, %v1873
    %v1875 = vadd.f32 %v1868, %v1873
    %s1876 = smul.f32 %s1861, 0.4
    %v1877 = vand.u32 2147483647, %v1874
    %v1878 = vand.u32 2147483647, %v1875
    %v1879 = vstv %s1876
    %v1880 = vmul.f32 %v1879, %v1877
    %v1881 = vmul.f32 %v1879, %v1878
    %v1882 = vadd.f32 %v1841, %v1880
    %v1883 = vadd.f32 %v1842, %v1881
    %v1884 = vstv %s1861
    %v1885 = vmul.f32 %v1884, %v238
    %v1886 = vmul.f32 %v1884, %v243
    %1889 = vrot.lane.b32.xlu0 %v1885, 126
    %v1890 = vpop.permute.xlu0 %1889
    %1891 = vrot.lane.b32.xlu0 %v1886, 126
    %v1892 = vpop.permute.xlu0 %1891
    %v1895 = vadd.f32 %v1854, %v1890
    %v1896 = vadd.f32 %v1855, %v1892
    %v1897 = vmul.f32 %v1884, %v348
    %v1899 = vrot.slane %v1897, 2
    %v1901 = vadd.f32 %v1860, %v1899
    %s1902 = sld [smem:[#allocation2 + $0x183]]
    %1903 = vset.pattern.permute.xlu0 27
    %1904 = vperm.xlu0 %1903, %v238
    %v1905 = vpop.permute.xlu0 %1904
    %1907 = vset.pattern.permute.xlu0 27
    %1908 = vperm.xlu0 %1907, %v243
    %v1909 = vpop.permute.xlu0 %1908
    %v1911 = vlaneseq
    %v1912 = vshrl.u32 %v1911, 7
    %v1913 = vsub.s32 3, %v1912
    %v1914 = vrot.slane %v348, %v1913
    %v1915 = vadd.f32 %v1905, %v1914
    %v1916 = vadd.f32 %v1909, %v1914
    %s1917 = smul.f32 %s1902, 0.4
    %v1918 = vand.u32 2147483647, %v1915
    %v1919 = vand.u32 2147483647, %v1916
    %v1920 = vstv %s1917
    %v1921 = vmul.f32 %v1920, %v1918
    %v1922 = vmul.f32 %v1920, %v1919
    %v1923 = vadd.f32 %v1882, %v1921
    %v1924 = vadd.f32 %v1883, %v1922
    %v1925 = vstv %s1902
    %v1926 = vmul.f32 %v1925, %v238
    %v1927 = vmul.f32 %v1925, %v243
    %1930 = vrot.lane.b32.xlu0 %v1926, 125
    %v1931 = vpop.permute.xlu0 %1930
    %1932 = vrot.lane.b32.xlu0 %v1927, 125
    %v1933 = vpop.permute.xlu0 %1932
    %v1936 = vadd.f32 %v1895, %v1931
    %v1937 = vadd.f32 %v1896, %v1933
    %v1938 = vmul.f32 %v1925, %v348
    %v1940 = vrot.slane %v1938, 3
    %v1942 = vadd.f32 %v1901, %v1940
    %s1943 = sld [smem:[#allocation2 + $0x184]]
    %1944 = vset.pattern.permute.xlu0 28
    %1945 = vperm.xlu0 %1944, %v238
    %v1946 = vpop.permute.xlu0 %1945
    %1948 = vset.pattern.permute.xlu0 28
    %1949 = vperm.xlu0 %1948, %v243
    %v1950 = vpop.permute.xlu0 %1949
    %v1952 = vlaneseq
    %v1953 = vshrl.u32 %v1952, 7
    %v1954 = vsub.s32 4, %v1953
    %v1955 = vrot.slane %v348, %v1954
    %v1956 = vadd.f32 %v1946, %v1955
    %v1957 = vadd.f32 %v1950, %v1955
    %s1958 = smul.f32 %s1943, 0.4
    %v1959 = vand.u32 2147483647, %v1956
    %v1960 = vand.u32 2147483647, %v1957
    %v1961 = vstv %s1958
    %v1962 = vmul.f32 %v1961, %v1959
    %v1963 = vmul.f32 %v1961, %v1960
    %v1964 = vadd.f32 %v1923, %v1962
    %v1965 = vadd.f32 %v1924, %v1963
    %v1966 = vstv %s1943
    %v1967 = vmul.f32 %v1966, %v238
    %v1968 = vmul.f32 %v1966, %v243
    %1971 = vrot.lane.b32.xlu0 %v1967, 124
    %v1972 = vpop.permute.xlu0 %1971
    %1973 = vrot.lane.b32.xlu0 %v1968, 124
    %v1974 = vpop.permute.xlu0 %1973
    %v1977 = vadd.f32 %v1936, %v1972
    %v1978 = vadd.f32 %v1937, %v1974
    %v1979 = vmul.f32 %v1966, %v348
    %v1981 = vrot.slane %v1979, 4
    %v1983 = vadd.f32 %v1942, %v1981
    %s1984 = sld [smem:[#allocation2 + $0x185]]
    %1985 = vset.pattern.permute.xlu0 29
    %1986 = vperm.xlu0 %1985, %v238
    %v1987 = vpop.permute.xlu0 %1986
    %1989 = vset.pattern.permute.xlu0 29
    %1990 = vperm.xlu0 %1989, %v243
    %v1991 = vpop.permute.xlu0 %1990
    %v1993 = vlaneseq
    %v1994 = vshrl.u32 %v1993, 7
    %v1995 = vsub.s32 5, %v1994
    %v1996 = vrot.slane %v348, %v1995
    %v1997 = vadd.f32 %v1987, %v1996
    %v1998 = vadd.f32 %v1991, %v1996
    %s1999 = smul.f32 %s1984, 0.4
    %v2000 = vand.u32 2147483647, %v1997
    %v2001 = vand.u32 2147483647, %v1998
    %v2002 = vstv %s1999
    %v2003 = vmul.f32 %v2002, %v2000
    %v2004 = vmul.f32 %v2002, %v2001
    %v2005 = vadd.f32 %v1964, %v2003
    %v2006 = vadd.f32 %v1965, %v2004
    %v2007 = vstv %s1984
    %v2008 = vmul.f32 %v2007, %v238
    %v2009 = vmul.f32 %v2007, %v243
    %2012 = vrot.lane.b32.xlu0 %v2008, 123
    %v2013 = vpop.permute.xlu0 %2012
    %2014 = vrot.lane.b32.xlu0 %v2009, 123
    %v2015 = vpop.permute.xlu0 %2014
    %v2018 = vadd.f32 %v1977, %v2013
    %v2019 = vadd.f32 %v1978, %v2015
    %v2020 = vmul.f32 %v2007, %v348
    %v2022 = vrot.slane %v2020, 5
    %v2024 = vadd.f32 %v1983, %v2022
    %s2025 = sld [smem:[#allocation2 + $0x186]]
    %2026 = vset.pattern.permute.xlu0 30
    %2027 = vperm.xlu0 %2026, %v238
    %v2028 = vpop.permute.xlu0 %2027
    %2030 = vset.pattern.permute.xlu0 30
    %2031 = vperm.xlu0 %2030, %v243
    %v2032 = vpop.permute.xlu0 %2031
    %v2034 = vlaneseq
    %v2035 = vshrl.u32 %v2034, 7
    %v2036 = vsub.s32 6, %v2035
    %v2037 = vrot.slane %v348, %v2036
    %v2038 = vadd.f32 %v2028, %v2037
    %v2039 = vadd.f32 %v2032, %v2037
    %s2040 = smul.f32 %s2025, 0.4
    %v2041 = vand.u32 2147483647, %v2038
    %v2042 = vand.u32 2147483647, %v2039
    %v2043 = vstv %s2040
    %v2044 = vmul.f32 %v2043, %v2041
    %v2045 = vmul.f32 %v2043, %v2042
    %v2046 = vadd.f32 %v2005, %v2044
    %v2047 = vadd.f32 %v2006, %v2045
    %v2048 = vstv %s2025
    %v2049 = vmul.f32 %v2048, %v238
    %v2050 = vmul.f32 %v2048, %v243
    %2053 = vrot.lane.b32.xlu0 %v2049, 122
    %v2054 = vpop.permute.xlu0 %2053
    %2055 = vrot.lane.b32.xlu0 %v2050, 122
    %v2056 = vpop.permute.xlu0 %2055
    %v2059 = vadd.f32 %v2018, %v2054
    %v2060 = vadd.f32 %v2019, %v2056
    %v2061 = vmul.f32 %v2048, %v348
    %v2063 = vrot.slane %v2061, 6
    %v2065 = vadd.f32 %v2024, %v2063
    %s2066 = sld [smem:[#allocation2 + $0x187]]
    %2067 = vset.pattern.permute.xlu0 31
    %2068 = vperm.xlu0 %2067, %v238
    %v2069 = vpop.permute.xlu0 %2068
    %2071 = vset.pattern.permute.xlu0 31
    %2072 = vperm.xlu0 %2071, %v243
    %v2073 = vpop.permute.xlu0 %2072
    %v2075 = vlaneseq
    %v2076 = vshrl.u32 %v2075, 7
    %v2077 = vsub.s32 7, %v2076
    %v2078 = vrot.slane %v348, %v2077
    %v2079 = vadd.f32 %v2069, %v2078
    %v2080 = vadd.f32 %v2073, %v2078
    %s2081 = smul.f32 %s2066, 0.4
    %v2082 = vand.u32 2147483647, %v2079
    %v2083 = vand.u32 2147483647, %v2080
    %v2084 = vstv %s2081
    %v2085 = vmul.f32 %v2084, %v2082
    %v2086 = vmul.f32 %v2084, %v2083
    %v2087 = vadd.f32 %v2046, %v2085
    %v2088 = vadd.f32 %v2047, %v2086
    %v2089 = vstv %s2066
    %v2090 = vmul.f32 %v2089, %v238
    %v2091 = vmul.f32 %v2089, %v243
    %2094 = vrot.lane.b32.xlu0 %v2090, 121
    %v2095 = vpop.permute.xlu0 %2094
    %2096 = vrot.lane.b32.xlu0 %v2091, 121
    %v2097 = vpop.permute.xlu0 %2096
    %v2100 = vadd.f32 %v2059, %v2095
    %v2101 = vadd.f32 %v2060, %v2097
    %v2102 = vmul.f32 %v2089, %v348
    %v2104 = vrot.slane %v2102, 7
    %v2106 = vadd.f32 %v2065, %v2104
    %2108 = vset.pattern.permute.xlu0 24
    %2109 = vperm.xlu0 %2108, %v2100
    %v2110 = vpop.permute.xlu0 %2109
    %2113 = vset.pattern.permute.xlu0 24
    %2114 = vperm.xlu0 %2113, %v2101
    %v2115 = vpop.permute.xlu0 %2114
    %v2117 = vlaneseq
    %v2118 = vshrl.u32 %v2117, 7
    %v2119 = vsub.s32 0, %v2118
    %v2120 = vrot.slane %v2106, %v2119
    %v2121 = vadd.f32 %v2110, %v2120
    %v2122 = vadd.f32 %v2115, %v2120
    %v2123 = vmul.f32 %v2121, 0.6
    %v2124 = vmul.f32 %v2122, 0.6
    %v2125 = vadd.f32 %v2123, %v2087
    %v2126 = vadd.f32 %v2124, %v2088
    %v2127 = vadd.f32 %v2125, %v363
    %v2128 = vadd.f32 %v2126, %v364
    %v2129 = vsel %vm706, %v2127, -inf
    %2130 = vmax.xlane.f32.xlu0 %v2129
    %v2131 = vpop.xlane.xlu0 %2130
    %v2132 = vsel %vm706, %v2128, -inf
    %2133 = vmax.xlane.f32.xlu0 %v2132
    %v2134 = vpop.xlane.xlu0 %2133
    %v2135 = vsub.f32 %v2127, %v2131
    %v2136 = vsub.f32 %v2128, %v2134
    %v2137 = vmul.f32 %v2135, 1.442695
    %v2138 = vpow.pop %v2137
    %v2139 = vmul.f32 %v2136, 1.442695
    %v2140 = vpow.pop %v2139
    %v2141 = vsel %vm361, %v2138, 0.0
    %v2142 = vsel %vm362, %v2140, 0.0
    %v2143 = vsel %vm706, %v2141, 0.0
    %2144 = vadd.xlane.f32.xlu0 %v2143
    %v2145 = vpop.xlane.xlu0 %2144
    %v2146 = vsel %vm706, %v2142, 0.0
    %2147 = vadd.xlane.f32.xlu0 %v2146
    %v2148 = vpop.xlane.xlu0 %2147
    %vm2149 = vcmp.eq.f32.partialorder %v2145, 0.0
    %vm2150 = vcmp.eq.f32.partialorder %v2148, 0.0
    %v2151 = vsel %vm2149, 1.0, %v2145
    %v2152 = vsel %vm2150, 1.0, %v2148
    %v2153 = vrcp.pop %v2151
    %v2154 = vrcp.pop %v2152
    %v2155 = vmul.f32 %v2151, %v2153
    %v2156 = vmul.f32 %v2152, %v2154
    %v2157 = vsub.f32 2.0, %v2155
    %v2158 = vsub.f32 2.0, %v2156
    %v2159 = vmul.f32 %v2153, %v2157
    %v2160 = vmul.f32 %v2154, %v2158
    %v2161 = vmul.f32 %v2141, %v2159
    %v2162 = vmul.f32 %v2142, %v2160
    %2163 = vrot.lane.b32.xlu0 %v149, 104
    %v2164 = vpop.permute.xlu0 %2163
    %2165 = vrot.lane.b32.xlu0 %v154, 104
    %v2166 = vpop.permute.xlu0 %2165
    %2169 = vrot.lane.b32.xlu0 %v321, 104
    %v2170 = vpop.permute.xlu0 %2169
    %2171 = vrot.lane.b32.xlu0 %v326, 104
    %v2172 = vpop.permute.xlu0 %2171
    %v2176 = vsel %vm706, %v2161, 0
    %v2179 = vsel %vm706, %v2162, 0
    %2181 = vmatprep.subr.mxu0 0.0
    %2182 = vmatpush1.msra.mxu0 %v2164
    %2183 = vmatprep.subr.mxu0 0.0
    %2184 = vmatpush1.msra.mxu0 %v2166
    %2185 = vmatprep.subr.mxu0 0.0
    %2186 = vmatpush1.msra.mxu0 0.0
    %2187 = vmatprep.subr.mxu0 0.0
    %2188 = vmatpush1.msra.mxu0 0.0
    %2189 = vmatprep.subr.mxu0 0.0
    %2190 = vmatpush1.msra.mxu0 0.0
    %2191 = vmatprep.subr.mxu0 0.0
    %2192 = vmatpush1.msra.mxu0 0.0
    %2193 = vmatprep.subr.mxu0 0.0
    %2194 = vmatpush1.msra.mxu0 0.0
    %2195 = vmatprep.subr.mxu0 0.0
    %2196 = vmatpush1.msra.mxu0 0.0
    %2197 = vmatprep.subr.mxu0 0.0
    %2198 = vmatpush1.msra.mxu0 0.0
    %2199 = vmatprep.subr.mxu0 0.0
    %2200 = vmatpush1.msra.mxu0 0.0
    %2201 = vmatprep.subr.mxu0 0.0
    %2202 = vmatpush1.msra.mxu0 0.0
    %2203 = vmatprep.subr.mxu0 0.0
    %2204 = vmatpush1.msra.mxu0 0.0
    %2205 = vmatprep.subr.mxu0 0.0
    %2206 = vmatpush1.msra.mxu0 0.0
    %2207 = vmatprep.subr.mxu0 0.0
    %2208 = vmatpush1.msra.mxu0 0.0
    %2209 = vmatprep.subr.mxu0 0.0
    %2210 = vmatpush1.msra.mxu0 0.0
    %2211 = vmatprep.subr.mxu0 0.0
    %2212 = vmatpush1.msra.mxu0 0.0
    %2213 = vmatprep.subr.mxu0 0.0
    %2214 = vmatpush1.msra.mxu0 0.0
    %2215 = vmatprep.subr.mxu0 0.0
    %2216 = vmatpush1.msra.mxu0 0.0
    %2217 = vmatprep.subr.mxu0 0.0
    %2218 = vmatpush1.msra.mxu0 0.0
    %2219 = vmatprep.subr.mxu0 0.0
    %2220 = vmatpush1.msra.mxu0 0.0
    %2221 = vmatprep.subr.mxu0 0.0
    %2222 = vmatpush1.msra.mxu0 0.0
    %2223 = vmatprep.subr.mxu0 0.0
    %2224 = vmatpush1.msra.mxu0 0.0
    %2225 = vmatprep.subr.mxu0 0.0
    %2226 = vmatpush1.msra.mxu0 0.0
    %2227 = vmatprep.subr.mxu0 0.0
    %2228 = vmatpush1.msra.mxu0 0.0
    %2229 = vmatprep.subr.mxu0 0.0
    %2230 = vmatpush1.msra.mxu0 0.0
    %2231 = vmatprep.subr.mxu0 0.0
    %2232 = vmatpush1.msra.mxu0 0.0
    %2233 = vmatprep.subr.mxu0 0.0
    %2234 = vmatpush1.msra.mxu0 0.0
    %2235 = vmatprep.subr.mxu0 0.0
    %2236 = vmatpush1.msra.mxu0 0.0
    %2237 = vmatprep.subr.mxu0 0.0
    %2238 = vmatpush1.msra.mxu0 0.0
    %2239 = vmatprep.subr.mxu0 0.0
    %2240 = vmatpush1.msra.mxu0 0.0
    %2241 = vmatprep.subr.mxu0 0.0
    %2242 = vmatpush1.msra.mxu0 0.0
    %2243 = vmatprep.subr.mxu0 0.0
    %2244 = vmatpush1.msra.mxu0 0.0
    %2245 = vmatprep.mubr.f32.mxu0 0.0
    %2246 = vmatmul.mubr.f32.gmra.mrb[0].mxu0 %v2176
    %v2247 = vpop.f32.mrb[0].mxu0
    %v2248 = vadd.f32 %v2170, %v2247
    %v2249 = vpop.f32.mrb[0].mxu0
    %2250 = vmatprep.mubr.f32.mxu0 0.0
    %2251 = vmatmul.mubr.f32.gmra.mrb[0].mxu0 %v2179
    %v2252 = vpop.f32.mrb[0].mxu0
    %v2253 = vadd.f32 %v2172, %v2252
    %v2254 = vpop.f32.mrb[0].mxu0
    %2255 = vdwg.mxu0
    %2258 = vrot.lane.b32.xlu0 %v2248, 24
    %v2259 = vpop.permute.xlu0 %2258
    %2260 = vrot.lane.b32.xlu0 %v2253, 24
    %v2261 = vpop.permute.xlu0 %2260
    %vm2264 = vcmask 261312
    %2265 = vst.msk [vmem:[%s10] sm:$0xff] %vm2264, %v2259
    %2266 = vst.msk [vmem:[%s10 + $0x8] sm:$0xff] %vm2264, %v2261
    %s2267 = scalar_lea.vmem [#allocation7], 48
    %2268 = vst.msk [vmem:[%s2267] sm:$0xff] %vm706, %v2161
    %2269 = vst.msk [vmem:[%s2267 + $0x8] sm:$0xff] %vm706, %v2162
    // Predicated region
    $region50: #{deep_graph_conv_layer.2} parent=1 // pred_check
      _
    $region51: #{deep_graph_conv_layer.2} parent=1 // pred_check_branch
      %2271 = sbr.rel (0) target = $region53
    $region52: #{deep_graph_conv_layer.2} parent=1 // pred_region
      _
    $region53: #{deep_graph_conv_layer.2} parent=1 // pred_fallthru
      _
    // Predicated region
    $region54: #{deep_graph_conv_layer.2} parent=1 // pred_check
      _
    $region55: #{deep_graph_conv_layer.2} parent=1 // pred_check_branch
      %2273 = sbr.rel (0) target = $region57
    $region56: #{deep_graph_conv_layer.2} parent=1 // pred_region
      %s2275 = ssub.s32 1024, 1024
      %2276 = vsyncadd [#allocation4], %s2275
      %s2277 = sshll.u32 [#allocation7], 4
      %s2278 = int_to_ptr.vmem [resolvable:$true] %s2277
      %2283 = dma.vmem_to_hbm [thread:$0]  %s2278, 1024, %s11, [#allocation4], 128, 128, 8
    $region57: #{deep_graph_conv_layer.2} parent=1 // pred_fallthru
      _
    // Predicated region
    $region58: #{deep_graph_conv_layer.2} parent=1 // pred_check
      _
    $region59: #{deep_graph_conv_layer.2} parent=1 // pred_check_branch
      %2285 = sbr.rel (0) target = $region61
    $region60: #{deep_graph_conv_layer.2} parent=1 // pred_region
      _
    $region61: #{deep_graph_conv_layer.2} parent=1 // pred_fallthru
      _
    // Predicated region
    $region62: #{deep_graph_conv_layer.2} parent=1 // pred_check
      _
    $region63: #{deep_graph_conv_layer.2} parent=1 // pred_check_branch
      %2287 = sbr.rel (0) target = $region65
    $region64: #{deep_graph_conv_layer.2} parent=1 // pred_region
      %2288 = dma.done [#allocation4], 1024
    $region65: #{deep_graph_conv_layer.2} parent=1 // pred_fallthru
      _
    %2289 = vsyncpa [#allocation3], 1
    %2290 = vsyncpa [#allocation4], 1
    %2291 = vsyncpa [#allocation5], 1

</llo_original>
